<compile_context>
chip_gen: v5e
topology: v5e:2x2
jax: 0.10.0
libtpu: 0.0.40
codegen_flags: <defaults>
</compile_context>

<pallas_src>
import functools

import jax
import jax.numpy as jnp
from jax.experimental import pallas as pl
from jax.experimental.pallas import tpu as pltpu

_SQRT2_INV = 0.7071067811865476
_BN_EPS = 1e-5


def _round_up(x, m):
    return ((x + m - 1) // m) * m


# ----------------------------------------------------------------------------
# Pallas kernels: out = act((A @ B) [* scale] + shift), single K pass per tile
# ----------------------------------------------------------------------------
def _apply_act(y, act):
    if act == "gelu":  # exact (erf) GELU == nn.GELU() default
        return 0.5 * y * (1.0 + jax.lax.erf(y * _SQRT2_INV))
    if act == "sigmoid":
        return jax.nn.sigmoid(y)
    return y


def _mm_bias_kernel(a_ref, b_ref, shift_ref, o_ref, *, act):
    y = jnp.dot(a_ref[...], b_ref[...], preferred_element_type=jnp.float32)
    y = y + shift_ref[...]
    o_ref[...] = _apply_act(y, act).astype(o_ref.dtype)


def _mm_scale_kernel(a_ref, b_ref, scale_ref, shift_ref, o_ref, *, act):
    y = jnp.dot(a_ref[...], b_ref[...], preferred_element_type=jnp.float32)
    y = y * scale_ref[...] + shift_ref[...]
    o_ref[...] = _apply_act(y, act).astype(o_ref.dtype)


def fused_matmul(a, b, shift, scale=None, act="none", out_dtype=jnp.bfloat16):
    """act((a @ b) [* scale] + shift); a:(M,K) b:(K,N) scale/shift:(N,)."""
    M, K = a.shape
    K2, N = b.shape
    assert K == K2

    Kp = _round_up(K, 128)
    Np = _round_up(N, 128)
    tn = 256 if Np % 256 == 0 else 128

    Mp8 = _round_up(M, 8)
    if Mp8 <= 128:
        tm, Mp = Mp8, Mp8
    else:
        tm = 128
        Mp = _round_up(M, tm)

    a_p = jnp.pad(a.astype(jnp.bfloat16), ((0, Mp - M), (0, Kp - K)))
    b_p = jnp.pad(b.astype(jnp.bfloat16), ((0, Kp - K), (0, Np - N)))
    shift_p = jnp.pad(shift.astype(jnp.float32).reshape(1, N), ((0, 0), (0, Np - N)))

    in_specs = [
        pl.BlockSpec((tm, Kp), lambda i, j: (i, 0)),
        pl.BlockSpec((Kp, tn), lambda i, j: (0, j)),
    ]
    operands = [a_p, b_p]
    if scale is not None:
        scale_p = jnp.pad(scale.astype(jnp.float32).reshape(1, N),
                          ((0, 0), (0, Np - N)))
        in_specs.append(pl.BlockSpec((1, tn), lambda i, j: (0, j)))
        operands.append(scale_p)
        kernel = functools.partial(_mm_scale_kernel, act=act)
    else:
        kernel = functools.partial(_mm_bias_kernel, act=act)
    in_specs.append(pl.BlockSpec((1, tn), lambda i, j: (0, j)))
    operands.append(shift_p)

    out = pl.pallas_call(
        kernel,
        out_shape=jax.ShapeDtypeStruct((Mp, Np), out_dtype),
        grid_spec=pltpu.PrefetchScalarGridSpec(
            num_scalar_prefetch=0,
            grid=(Mp // tm, Np // tn),
            in_specs=in_specs,
            out_specs=pl.BlockSpec((tm, tn), lambda i, j: (i, j)),
        ),
        compiler_params=pltpu.CompilerParams(
            dimension_semantics=("parallel", "parallel")
        ),
    )(*operands)
    return out[:M, :N]


# ----------------------------------------------------------------------------
# Conv layers expressed as im2col + fused Pallas matmul (glue is jitted XLA)
# ----------------------------------------------------------------------------
def conv2d(x_nhwc, w_oihw, scale, shift, pad, act, out_dtype=jnp.bfloat16):
    """x:(N,H,W,Cin), w:(Cout,Cin,kH,kW) -> (N,Ho,Wo,Cout)."""
    N, H, W, Cin = x_nhwc.shape
    Cout, Cin2, kH, kW = w_oihw.shape
    assert Cin == Cin2
    Ho = H + 2 * pad - kH + 1
    Wo = W + 2 * pad - kW + 1
    xp = jnp.pad(x_nhwc, ((0, 0), (pad, pad), (pad, pad), (0, 0)))
    cols = [xp[:, dy:dy + Ho, dx:dx + Wo, :]
            for dy in range(kH) for dx in range(kW)]
    patches = jnp.concatenate(cols, axis=-1).reshape(N * Ho * Wo, kH * kW * Cin)
    wm = jnp.transpose(w_oihw, (2, 3, 1, 0)).reshape(kH * kW * Cin, Cout)
    y = fused_matmul(patches, wm, shift, scale=scale, act=act, out_dtype=out_dtype)
    return y.reshape(N, Ho, Wo, Cout)


def conv_transpose2d_4x4_s2_p1(x_nhwc, w_iohw, shift, scale=None, act="none",
                               out_dtype=jnp.bfloat16):
    """PyTorch ConvTranspose2d(k=4, s=2, p=1) via 4-phase decomposition.

    out[n, 2m+py, 2l+px, co] = sum_{ci,a,b} xpad[n, m+OFF[py][a], l+OFF[px][b], ci]
                                            * w[ci, co, TAP[py][a], TAP[px][b]]
    (no zero-dilated input, no wasted MACs on structural zeros).
    """
    N, H, W, Cin = x_nhwc.shape
    Cin2, Cout, kH, kW = w_iohw.shape
    assert Cin == Cin2 and kH == 4 and kW == 4
    xp = jnp.pad(x_nhwc, ((0, 0), (1, 1), (1, 1), (0, 0)))
    TAP = ((3, 1), (2, 0))   # kernel taps used by output phase 0 / 1
    OFF = ((0, 1), (1, 2))   # corresponding offsets into the padded input

    phase_rows = []
    for py in (0, 1):
        row = []
        for px in (0, 1):
            cols, wrows = [], []
            for a in (0, 1):
                for b in (0, 1):
                    oy, ox = OFF[py][a], OFF[px][b]
                    cols.append(xp[:, oy:oy + H, ox:ox + W, :])
                    wrows.append(w_iohw[:, :, TAP[py][a], TAP[px][b]])  # (Cin,Cout)
            patches = jnp.concatenate(cols, axis=-1).reshape(N * H * W, 4 * Cin)
            wm = jnp.concatenate(wrows, axis=0)                          # (4Cin,Cout)
            y = fused_matmul(patches, wm, shift, scale=scale, act=act,
                             out_dtype=out_dtype)
            row.append(y.reshape(N, H, W, Cout))
        phase_rows.append(jnp.stack(row, axis=3))        # (N,H,W,2,Cout)  px
    t = jnp.stack(phase_rows, axis=2)                    # (N,H,2,W,2,Cout) py
    return t.reshape(N, 2 * H, 2 * W, Cout)


def _bn_fold(conv_bias, gamma, beta, mean, var, eps=_BN_EPS):
    s = gamma / jnp.sqrt(var + eps)
    return s, (conv_bias - mean) * s + beta


def residual_block(x, p):
    # skip is Identity (in_channels == out_channels for both blocks in Decoder)
    s1, sh1 = _bn_fold(p["b1"], p["g1"], p["be1"], p["m1"], p["v1"])
    h = conv2d(x, p["w1"], s1, sh1, pad=2, act="gelu")
    s2, sh2 = _bn_fold(p["b2"], p["g2"], p["be2"], p["m2"], p["v2"])
    h = conv2d(h, p["w2"], s2, sh2, pad=2, act="gelu")
    return x + h


# ----------------------------------------------------------------------------
# Parameter init (deterministic, shapes from the PyTorch __init__)
# ----------------------------------------------------------------------------
def _rnd(key, shape, scale=0.05):
    return scale * jax.random.normal(key, shape, jnp.float32)


def _init_res_block(key, cin, cout):
    ks = jax.random.split(key, 4)
    return dict(
        w1=_rnd(ks[0], (cout, cin, 5, 5)), b1=_rnd(ks[1], (cout,)),
        g1=jnp.ones((cout,)), be1=jnp.zeros((cout,)),
        m1=jnp.zeros((cout,)), v1=jnp.ones((cout,)),
        w2=_rnd(ks[2], (cout, cout, 5, 5)), b2=_rnd(ks[3], (cout,)),
        g2=jnp.ones((cout,)), be2=jnp.zeros((cout,)),
        m2=jnp.zeros((cout,)), v2=jnp.ones((cout,)),
    )


def init_decoder_params(key, latent_size, class_vector_size, img_shape):
    c_img, H, W = img_shape
    assert H % 4 == 0 and W % 4 == 0
    init_c, hs, ws = 64, H // 4, W // 4
    ks = jax.random.split(key, 8)
    return dict(
        fc_w=_rnd(ks[0], (init_c * hs * ws, latent_size + class_vector_size)),
        fc_b=_rnd(ks[1], (init_c * hs * ws,)),
        res1=_init_res_block(ks[2], init_c, 64),
        ct1_w=_rnd(ks[3], (64, 32, 4, 4)), ct1_b=_rnd(ks[4], (32,)),
        ct1_g=jnp.ones((32,)), ct1_be=jnp.zeros((32,)),
        ct1_m=jnp.zeros((32,)), ct1_v=jnp.ones((32,)),
        res2=_init_res_block(ks[5], 32, 32),
        ct2_w=_rnd(ks[6], (32, c_img, 4, 4)), ct2_b=_rnd(ks[7], (c_img,)),
    )


@functools.partial(jax.jit, static_argnames=("img_shape",))
def decoder_forward(params, z, cls, img_shape):
    c_img, H, W = img_shape
    init_c, hs, ws = 64, H // 4, W // 4
    n = z.shape[0]

    x = jnp.concatenate([z, cls], axis=1)                                  # (N, L+C)
    x = fused_matmul(x, params["fc_w"].T, params["fc_b"],
                     scale=None, act="gelu")                               # (N, 64*hs*ws)
    x = x.reshape(n, init_c, hs, ws).transpose(0, 2, 3, 1)                 # Unflatten -> NHWC

    x = residual_block(x, params["res1"])                                  # (N, hs, ws, 64)

    s, sh = _bn_fold(params["ct1_b"], params["ct1_g"], params["ct1_be"],
                     params["ct1_m"], params["ct1_v"])
    x = conv_transpose2d_4x4_s2_p1(x, params["ct1_w"], sh, scale=s,
                                   act="gelu")                             # (N, 2hs, 2ws, 32)

    x = residual_block(x, params["res2"])                                  # (N, 2hs, 2ws, 32)

    x = conv_transpose2d_4x4_s2_p1(x, params["ct2_w"], params["ct2_b"],
                                   scale=None, act="sigmoid",
                                   out_dtype=jnp.float32)                  # (N, H, W, c_img)

    return x.transpose(0, 3, 1, 2)                                         # NCHW like PyTorch


if __name__ == "__main__":
    latent_size, class_vector_size = 8, 4
    img_shape = (1, 16, 16)
    batch = 2

    key = jax.random.PRNGKey(0)
    k_params, k_z, k_cls = jax.random.split(key, 3)
    params = init_decoder_params(k_params, latent_size, class_vector_size, img_shape)
    z = jax.random.normal(k_z, (batch, latent_size), jnp.float32)
    cls = jax.random.normal(k_cls, (batch, class_vector_size), jnp.float32)

    out = decoder_forward(params, z, cls, img_shape)
    out = jax.block_until_ready(out)

    assert out.shape == (batch, img_shape[0], img_shape[1], img_shape[2]), out.shape
    assert bool(jnp.all((out >= 0.0) & (out <= 1.0)))  # sigmoid range
    print("KERNEL_OK")
</pallas_src>

<mosaic_0001>
module attributes {stable_mosaic.version = 11 : i64} {
  func.func @_mm_bias_kernel(%arg0: i32, %arg1: i32, %arg2: memref<8x128xbf16, #tpu.memory_space<vmem>>, %arg3: memref<128x256xbf16, #tpu.memory_space<vmem>>, %arg4: memref<1x256xf32, #tpu.memory_space<vmem>>, %arg5: memref<8x256xbf16, #tpu.memory_space<vmem>>) attributes {dimension_semantics = [#tpu.dimension_semantics<parallel>, #tpu.dimension_semantics<parallel>], iteration_bounds = array<i64: 1, 4>, scalar_prefetch = 0 : i64, scratch_operands = 0 : i64, tpu.core_type = #tpu.core_type<tc>, window_params = [{transform_indices = @transform_0, window_bounds = array<i64: 8, 128>}, {transform_indices = @transform_1, window_bounds = array<i64: 128, 256>}, {transform_indices = @transform_2, window_bounds = array<i64: 1, 256>}, {transform_indices = @transform_3, window_bounds = array<i64: 8, 256>}]} {
    %c0 = arith.constant 0 : index
    %c0_0 = arith.constant 0 : index
    %0 = vector.load %arg2[%c0, %c0_0] : memref<8x128xbf16, #tpu.memory_space<vmem>>, vector<8x128xbf16>
    %c0_1 = arith.constant 0 : index
    %c0_2 = arith.constant 0 : index
    %1 = vector.load %arg3[%c0_1, %c0_2] : memref<128x256xbf16, #tpu.memory_space<vmem>>, vector<128x256xbf16>
    %cst = arith.constant dense<0.000000e+00> : vector<8x256xf32>
    %2 = tpu.matmul %0, %1, %cst {dimension_numbers = #tpu.dot_dimension_numbers<[1], [0], [0], [1], [0, 0, 1, 1], [], []>} : vector<8x128xbf16>, vector<128x256xbf16>, vector<8x256xf32> -> vector<8x256xf32>
    %c0_3 = arith.constant 0 : index
    %c0_4 = arith.constant 0 : index
    %3 = vector.load %arg4[%c0_3, %c0_4] : memref<1x256xf32, #tpu.memory_space<vmem>>, vector<1x256xf32>
    %4 = vector.broadcast %3 : vector<1x256xf32> to vector<8x256xf32>
    %5 = arith.addf %2, %4 : vector<8x256xf32>
    %cst_5 = arith.constant 5.000000e-01 : f32
    %6 = vector.broadcast %cst_5 : f32 to vector<8x256xf32>
    %7 = arith.mulf %6, %5 : vector<8x256xf32>
    %cst_6 = arith.constant 0.707106769 : f32
    %8 = vector.broadcast %cst_6 : f32 to vector<8x256xf32>
    %9 = arith.mulf %5, %8 : vector<8x256xf32>
    %10 = math.erf %9 : vector<8x256xf32>
    %cst_7 = arith.constant 1.000000e+00 : f32
    %11 = vector.broadcast %cst_7 : f32 to vector<8x256xf32>
    %12 = arith.addf %11, %10 : vector<8x256xf32>
    %13 = arith.mulf %7, %12 : vector<8x256xf32>
    %14 = arith.truncf %13 : vector<8x256xf32> to vector<8x256xbf16>
    %c0_8 = arith.constant 0 : index
    %c0_9 = arith.constant 0 : index
    %15 = vector.load %arg5[%c0_8, %c0_9] : memref<8x256xbf16, #tpu.memory_space<vmem>>, vector<8x256xbf16>
    tpu.vector_store %arg5[%c0_8, %c0_9], %14 {strides = array<i32>} : memref<8x256xbf16, #tpu.memory_space<vmem>>, vector<8x256xbf16>,
    return
  }
  func.func @transform_0(%arg0: i32, %arg1: i32) -> (i32, i32) {
    %c0_i32 = arith.constant 0 : i32
    %c0_i32_0 = arith.constant 0 : i32
    return %arg0, %c0_i32 : i32, i32
  }
  func.func @transform_1(%arg0: i32, %arg1: i32) -> (i32, i32) {
    %c0_i32 = arith.constant 0 : i32
    %c0_i32_0 = arith.constant 0 : i32
    return %c0_i32, %arg1 : i32, i32
  }
  func.func @transform_2(%arg0: i32, %arg1: i32) -> (i32, i32) {
    %c0_i32 = arith.constant 0 : i32
    %c0_i32_0 = arith.constant 0 : i32
    return %c0_i32, %arg1 : i32, i32
  }
  func.func @transform_3(%arg0: i32, %arg1: i32) -> (i32, i32) {
    %c0_i32 = arith.constant 0 : i32
    return %arg0, %arg1 : i32, i32
  }
}

module attributes {stable_mosaic.version = 11 : i64} {
  func.func @_mm_scale_kernel(%arg0: i32, %arg1: i32, %arg2: memref<32x1664xbf16, #tpu.memory_space<vmem>>, %arg3: memref<1664x128xbf16, #tpu.memory_space<vmem>>, %arg4: memref<1x128xf32, #tpu.memory_space<vmem>>, %arg5: memref<1x128xf32, #tpu.memory_space<vmem>>, %arg6: memref<32x128xbf16, #tpu.memory_space<vmem>>) attributes {dimension_semantics = [#tpu.dimension_semantics<parallel>, #tpu.dimension_semantics<parallel>], iteration_bounds = array<i64: 1, 1>, scalar_prefetch = 0 : i64, scratch_operands = 0 : i64, tpu.core_type = #tpu.core_type<tc>, window_params = [{transform_indices = @transform_0, window_bounds = array<i64: 32, 1664>}, {transform_indices = @transform_1, window_bounds = array<i64: 1664, 128>}, {transform_indices = @transform_2, window_bounds = array<i64: 1, 128>}, {transform_indices = @transform_3, window_bounds = array<i64: 1, 128>}, {transform_indices = @transform_4, window_bounds = array<i64: 32, 128>}]} {
    %c0 = arith.constant 0 : index
    %c0_0 = arith.constant 0 : index
    %0 = vector.load %arg2[%c0, %c0_0] : memref<32x1664xbf16, #tpu.memory_space<vmem>>, vector<32x1664xbf16>
    %c0_1 = arith.constant 0 : index
    %c0_2 = arith.constant 0 : index
    %1 = vector.load %arg3[%c0_1, %c0_2] : memref<1664x128xbf16, #tpu.memory_space<vmem>>, vector<1664x128xbf16>
    %cst = arith.constant dense<0.000000e+00> : vector<32x128xf32>
    %2 = tpu.matmul %0, %1, %cst {dimension_numbers = #tpu.dot_dimension_numbers<[1], [0], [0], [1], [0, 0, 1, 1], [], []>} : vector<32x1664xbf16>, vector<1664x128xbf16>, vector<32x128xf32> -> vector<32x128xf32>
    %c0_3 = arith.constant 0 : index
    %c0_4 = arith.constant 0 : index
    %3 = vector.load %arg4[%c0_3, %c0_4] : memref<1x128xf32, #tpu.memory_space<vmem>>, vector<1x128xf32>
    %4 = vector.broadcast %3 : vector<1x128xf32> to vector<32x128xf32>
    %5 = arith.mulf %2, %4 : vector<32x128xf32>
    %c0_5 = arith.constant 0 : index
    %c0_6 = arith.constant 0 : index
    %6 = vector.load %arg5[%c0_5, %c0_6] : memref<1x128xf32, #tpu.memory_space<vmem>>, vector<1x128xf32>
    %7 = vector.broadcast %6 : vector<1x128xf32> to vector<32x128xf32>
    %8 = arith.addf %5, %7 : vector<32x128xf32>
    %cst_7 = arith.constant 5.000000e-01 : f32
    %9 = vector.broadcast %cst_7 : f32 to vector<32x128xf32>
    %10 = arith.mulf %9, %8 : vector<32x128xf32>
    %cst_8 = arith.constant 0.707106769 : f32
    %11 = vector.broadcast %cst_8 : f32 to vector<32x128xf32>
    %12 = arith.mulf %8, %11 : vector<32x128xf32>
    %13 = math.erf %12 : vector<32x128xf32>
    %cst_9 = arith.constant 1.000000e+00 : f32
    %14 = vector.broadcast %cst_9 : f32 to vector<32x128xf32>
    %15 = arith.addf %14, %13 : vector<32x128xf32>
    %16 = arith.mulf %10, %15 : vector<32x128xf32>
    %17 = arith.truncf %16 : vector<32x128xf32> to vector<32x128xbf16>
    %c0_10 = arith.constant 0 : index
    %c0_11 = arith.constant 0 : index
    %18 = vector.load %arg6[%c0_10, %c0_11] : memref<32x128xbf16, #tpu.memory_space<vmem>>, vector<32x128xbf16>
    tpu.vector_store %arg6[%c0_10, %c0_11], %17 {strides = array<i32>} : memref<32x128xbf16, #tpu.memory_space<vmem>>, vector<32x128xbf16>,
    return
  }
  func.func @transform_0(%arg0: i32, %arg1: i32) -> (i32, i32) {
    %c0_i32 = arith.constant 0 : i32
    %c0_i32_0 = arith.constant 0 : i32
    return %arg0, %c0_i32 : i32, i32
  }
  func.func @transform_1(%arg0: i32, %arg1: i32) -> (i32, i32) {
    %c0_i32 = arith.constant 0 : i32
    %c0_i32_0 = arith.constant 0 : i32
    return %c0_i32, %arg1 : i32, i32
  }
  func.func @transform_2(%arg0: i32, %arg1: i32) -> (i32, i32) {
    %c0_i32 = arith.constant 0 : i32
    %c0_i32_0 = arith.constant 0 : i32
    return %c0_i32, %arg1 : i32, i32
  }
  func.func @transform_3(%arg0: i32, %arg1: i32) -> (i32, i32) {
    %c0_i32 = arith.constant 0 : i32
    %c0_i32_0 = arith.constant 0 : i32
    return %c0_i32, %arg1 : i32, i32
  }
  func.func @transform_4(%arg0: i32, %arg1: i32) -> (i32, i32) {
    %c0_i32 = arith.constant 0 : i32
    return %arg0, %arg1 : i32, i32
  }
}

module attributes {stable_mosaic.version = 11 : i64} {
  func.func @_mm_scale_kernel(%arg0: i32, %arg1: i32, %arg2: memref<32x256xbf16, #tpu.memory_space<vmem>>, %arg3: memref<256x128xbf16, #tpu.memory_space<vmem>>, %arg4: memref<1x128xf32, #tpu.memory_space<vmem>>, %arg5: memref<1x128xf32, #tpu.memory_space<vmem>>, %arg6: memref<32x128xbf16, #tpu.memory_space<vmem>>) attributes {dimension_semantics = [#tpu.dimension_semantics<parallel>, #tpu.dimension_semantics<parallel>], iteration_bounds = array<i64: 1, 1>, scalar_prefetch = 0 : i64, scratch_operands = 0 : i64, tpu.core_type = #tpu.core_type<tc>, window_params = [{transform_indices = @transform_0, window_bounds = array<i64: 32, 256>}, {transform_indices = @transform_1, window_bounds = array<i64: 256, 128>}, {transform_indices = @transform_2, window_bounds = array<i64: 1, 128>}, {transform_indices = @transform_3, window_bounds = array<i64: 1, 128>}, {transform_indices = @transform_4, window_bounds = array<i64: 32, 128>}]} {
    %c0 = arith.constant 0 : index
    %c0_0 = arith.constant 0 : index
    %0 = vector.load %arg2[%c0, %c0_0] : memref<32x256xbf16, #tpu.memory_space<vmem>>, vector<32x256xbf16>
    %c0_1 = arith.constant 0 : index
    %c0_2 = arith.constant 0 : index
    %1 = vector.load %arg3[%c0_1, %c0_2] : memref<256x128xbf16, #tpu.memory_space<vmem>>, vector<256x128xbf16>
    %cst = arith.constant dense<0.000000e+00> : vector<32x128xf32>
    %2 = tpu.matmul %0, %1, %cst {dimension_numbers = #tpu.dot_dimension_numbers<[1], [0], [0], [1], [0, 0, 1, 1], [], []>} : vector<32x256xbf16>, vector<256x128xbf16>, vector<32x128xf32> -> vector<32x128xf32>
    %c0_3 = arith.constant 0 : index
    %c0_4 = arith.constant 0 : index
    %3 = vector.load %arg4[%c0_3, %c0_4] : memref<1x128xf32, #tpu.memory_space<vmem>>, vector<1x128xf32>
    %4 = vector.broadcast %3 : vector<1x128xf32> to vector<32x128xf32>
    %5 = arith.mulf %2, %4 : vector<32x128xf32>
    %c0_5 = arith.constant 0 : index
    %c0_6 = arith.constant 0 : index
    %6 = vector.load %arg5[%c0_5, %c0_6] : memref<1x128xf32, #tpu.memory_space<vmem>>, vector<1x128xf32>
    %7 = vector.broadcast %6 : vector<1x128xf32> to vector<32x128xf32>
    %8 = arith.addf %5, %7 : vector<32x128xf32>
    %cst_7 = arith.constant 5.000000e-01 : f32
    %9 = vector.broadcast %cst_7 : f32 to vector<32x128xf32>
    %10 = arith.mulf %9, %8 : vector<32x128xf32>
    %cst_8 = arith.constant 0.707106769 : f32
    %11 = vector.broadcast %cst_8 : f32 to vector<32x128xf32>
    %12 = arith.mulf %8, %11 : vector<32x128xf32>
    %13 = math.erf %12 : vector<32x128xf32>
    %cst_9 = arith.constant 1.000000e+00 : f32
    %14 = vector.broadcast %cst_9 : f32 to vector<32x128xf32>
    %15 = arith.addf %14, %13 : vector<32x128xf32>
    %16 = arith.mulf %10, %15 : vector<32x128xf32>
    %17 = arith.truncf %16 : vector<32x128xf32> to vector<32x128xbf16>
    %c0_10 = arith.constant 0 : index
    %c0_11 = arith.constant 0 : index
    %18 = vector.load %arg6[%c0_10, %c0_11] : memref<32x128xbf16, #tpu.memory_space<vmem>>, vector<32x128xbf16>
    tpu.vector_store %arg6[%c0_10, %c0_11], %17 {strides = array<i32>} : memref<32x128xbf16, #tpu.memory_space<vmem>>, vector<32x128xbf16>,
    return
  }
  func.func @transform_0(%arg0: i32, %arg1: i32) -> (i32, i32) {
    %c0_i32 = arith.constant 0 : i32
    %c0_i32_0 = arith.constant 0 : i32
    return %arg0, %c0_i32 : i32, i32
  }
  func.func @transform_1(%arg0: i32, %arg1: i32) -> (i32, i32) {
    %c0_i32 = arith.constant 0 : i32
    %c0_i32_0 = arith.constant 0 : i32
    return %c0_i32, %arg1 : i32, i32
  }
  func.func @transform_2(%arg0: i32, %arg1: i32) -> (i32, i32) {
    %c0_i32 = arith.constant 0 : i32
    %c0_i32_0 = arith.constant 0 : i32
    return %c0_i32, %arg1 : i32, i32
  }
  func.func @transform_3(%arg0: i32, %arg1: i32) -> (i32, i32) {
    %c0_i32 = arith.constant 0 : i32
    %c0_i32_0 = arith.constant 0 : i32
    return %c0_i32, %arg1 : i32, i32
  }
  func.func @transform_4(%arg0: i32, %arg1: i32) -> (i32, i32) {
    %c0_i32 = arith.constant 0 : i32
    return %arg0, %arg1 : i32, i32
  }
}

module attributes {stable_mosaic.version = 11 : i64} {
  func.func @_mm_scale_kernel(%arg0: i32, %arg1: i32, %arg2: memref<128x896xbf16, #tpu.memory_space<vmem>>, %arg3: memref<896x128xbf16, #tpu.memory_space<vmem>>, %arg4: memref<1x128xf32, #tpu.memory_space<vmem>>, %arg5: memref<1x128xf32, #tpu.memory_space<vmem>>, %arg6: memref<128x128xbf16, #tpu.memory_space<vmem>>) attributes {dimension_semantics = [#tpu.dimension_semantics<parallel>, #tpu.dimension_semantics<parallel>], iteration_bounds = array<i64: 1, 1>, scalar_prefetch = 0 : i64, scratch_operands = 0 : i64, tpu.core_type = #tpu.core_type<tc>, window_params = [{transform_indices = @transform_0, window_bounds = array<i64: 128, 896>}, {transform_indices = @transform_1, window_bounds = array<i64: 896, 128>}, {transform_indices = @transform_2, window_bounds = array<i64: 1, 128>}, {transform_indices = @transform_3, window_bounds = array<i64: 1, 128>}, {transform_indices = @transform_4, window_bounds = array<i64: 128, 128>}]} {
    %c0 = arith.constant 0 : index
    %c0_0 = arith.constant 0 : index
    %0 = vector.load %arg2[%c0, %c0_0] : memref<128x896xbf16, #tpu.memory_space<vmem>>, vector<128x896xbf16>
    %c0_1 = arith.constant 0 : index
    %c0_2 = arith.constant 0 : index
    %1 = vector.load %arg3[%c0_1, %c0_2] : memref<896x128xbf16, #tpu.memory_space<vmem>>, vector<896x128xbf16>
    %cst = arith.constant dense<0.000000e+00> : vector<128x128xf32>
    %2 = tpu.matmul %0, %1, %cst {dimension_numbers = #tpu.dot_dimension_numbers<[1], [0], [0], [1], [0, 0, 1, 1], [], []>} : vector<128x896xbf16>, vector<896x128xbf16>, vector<128x128xf32> -> vector<128x128xf32>
    %c0_3 = arith.constant 0 : index
    %c0_4 = arith.constant 0 : index
    %3 = vector.load %arg4[%c0_3, %c0_4] : memref<1x128xf32, #tpu.memory_space<vmem>>, vector<1x128xf32>
    %4 = vector.broadcast %3 : vector<1x128xf32> to vector<128x128xf32>
    %5 = arith.mulf %2, %4 : vector<128x128xf32>
    %c0_5 = arith.constant 0 : index
    %c0_6 = arith.constant 0 : index
    %6 = vector.load %arg5[%c0_5, %c0_6] : memref<1x128xf32, #tpu.memory_space<vmem>>, vector<1x128xf32>
    %7 = vector.broadcast %6 : vector<1x128xf32> to vector<128x128xf32>
    %8 = arith.addf %5, %7 : vector<128x128xf32>
    %cst_7 = arith.constant 5.000000e-01 : f32
    %9 = vector.broadcast %cst_7 : f32 to vector<128x128xf32>
    %10 = arith.mulf %9, %8 : vector<128x128xf32>
    %cst_8 = arith.constant 0.707106769 : f32
    %11 = vector.broadcast %cst_8 : f32 to vector<128x128xf32>
    %12 = arith.mulf %8, %11 : vector<128x128xf32>
    %13 = math.erf %12 : vector<128x128xf32>
    %cst_9 = arith.constant 1.000000e+00 : f32
    %14 = vector.broadcast %cst_9 : f32 to vector<128x128xf32>
    %15 = arith.addf %14, %13 : vector<128x128xf32>
    %16 = arith.mulf %10, %15 : vector<128x128xf32>
    %17 = arith.truncf %16 : vector<128x128xf32> to vector<128x128xbf16>
    %c0_10 = arith.constant 0 : index
    %c0_11 = arith.constant 0 : index
    %18 = vector.load %arg6[%c0_10, %c0_11] : memref<128x128xbf16, #tpu.memory_space<vmem>>, vector<128x128xbf16>
    tpu.vector_store %arg6[%c0_10, %c0_11], %17 {strides = array<i32>} : memref<128x128xbf16, #tpu.memory_space<vmem>>, vector<128x128xbf16>,
    return
  }
  func.func @transform_0(%arg0: i32, %arg1: i32) -> (i32, i32) {
    %c0_i32 = arith.constant 0 : i32
    %c0_i32_0 = arith.constant 0 : i32
    return %arg0, %c0_i32 : i32, i32
  }
  func.func @transform_1(%arg0: i32, %arg1: i32) -> (i32, i32) {
    %c0_i32 = arith.constant 0 : i32
    %c0_i32_0 = arith.constant 0 : i32
    return %c0_i32, %arg1 : i32, i32
  }
  func.func @transform_2(%arg0: i32, %arg1: i32) -> (i32, i32) {
    %c0_i32 = arith.constant 0 : i32
    %c0_i32_0 = arith.constant 0 : i32
    return %c0_i32, %arg1 : i32, i32
  }
  func.func @transform_3(%arg0: i32, %arg1: i32) -> (i32, i32) {
    %c0_i32 = arith.constant 0 : i32
    %c0_i32_0 = arith.constant 0 : i32
    return %c0_i32, %arg1 : i32, i32
  }
  func.func @transform_4(%arg0: i32, %arg1: i32) -> (i32, i32) {
    %c0_i32 = arith.constant 0 : i32
    return %arg0, %arg1 : i32, i32
  }
}

module attributes {stable_mosaic.version = 11 : i64} {
  func.func @_mm_bias_kernel(%arg0: i32, %arg1: i32, %arg2: memref<128x128xbf16, #tpu.memory_space<vmem>>, %arg3: memref<128x128xbf16, #tpu.memory_space<vmem>>, %arg4: memref<1x128xf32, #tpu.memory_space<vmem>>, %arg5: memref<128x128xf32, #tpu.memory_space<vmem>>) attributes {dimension_semantics = [#tpu.dimension_semantics<parallel>, #tpu.dimension_semantics<parallel>], iteration_bounds = array<i64: 1, 1>, scalar_prefetch = 0 : i64, scratch_operands = 0 : i64, tpu.core_type = #tpu.core_type<tc>, window_params = [{transform_indices = @transform_0, window_bounds = array<i64: 128, 128>}, {transform_indices = @transform_1, window_bounds = array<i64: 128, 128>}, {transform_indices = @transform_2, window_bounds = array<i64: 1, 128>}, {transform_indices = @transform_3, window_bounds = array<i64: 128, 128>}]} {
    %c0 = arith.constant 0 : index
    %c0_0 = arith.constant 0 : index
    %0 = vector.load %arg2[%c0, %c0_0] : memref<128x128xbf16, #tpu.memory_space<vmem>>, vector<128x128xbf16>
    %c0_1 = arith.constant 0 : index
    %c0_2 = arith.constant 0 : index
    %1 = vector.load %arg3[%c0_1, %c0_2] : memref<128x128xbf16, #tpu.memory_space<vmem>>, vector<128x128xbf16>
    %cst = arith.constant dense<0.000000e+00> : vector<128x128xf32>
    %2 = tpu.matmul %0, %1, %cst {dimension_numbers = #tpu.dot_dimension_numbers<[1], [0], [0], [1], [0, 0, 1, 1], [], []>} : vector<128x128xbf16>, vector<128x128xbf16>, vector<128x128xf32> -> vector<128x128xf32>
    %c0_3 = arith.constant 0 : index
    %c0_4 = arith.constant 0 : index
    %3 = vector.load %arg4[%c0_3, %c0_4] : memref<1x128xf32, #tpu.memory_space<vmem>>, vector<1x128xf32>
    %4 = vector.broadcast %3 : vector<1x128xf32> to vector<128x128xf32>
    %5 = arith.addf %2, %4 : vector<128x128xf32>
    %6 = arith.negf %5 : vector<128x128xf32>
    %7 = math.exp %6 : vector<128x128xf32>
    %cst_5 = arith.constant 1.000000e+00 : f32
    %8 = vector.broadcast %cst_5 : f32 to vector<128x128xf32>
    %9 = arith.addf %8, %7 : vector<128x128xf32>
    %10 = arith.divf %8, %9 : vector<128x128xf32>
    %c0_6 = arith.constant 0 : index
    %c0_7 = arith.constant 0 : index
    %11 = vector.load %arg5[%c0_6, %c0_7] : memref<128x128xf32, #tpu.memory_space<vmem>>, vector<128x128xf32>
    tpu.vector_store %arg5[%c0_6, %c0_7], %10 {strides = array<i32>} : memref<128x128xf32, #tpu.memory_space<vmem>>, vector<128x128xf32>,
    return
  }
  func.func @transform_0(%arg0: i32, %arg1: i32) -> (i32, i32) {
    %c0_i32 = arith.constant 0 : i32
    %c0_i32_0 = arith.constant 0 : i32
    return %arg0, %c0_i32 : i32, i32
  }
  func.func @transform_1(%arg0: i32, %arg1: i32) -> (i32, i32) {
    %c0_i32 = arith.constant 0 : i32
    %c0_i32_0 = arith.constant 0 : i32
    return %c0_i32, %arg1 : i32, i32
  }
  func.func @transform_2(%arg0: i32, %arg1: i32) -> (i32, i32) {
    %c0_i32 = arith.constant 0 : i32
    %c0_i32_0 = arith.constant 0 : i32
    return %c0_i32, %arg1 : i32, i32
  }
  func.func @transform_3(%arg0: i32, %arg1: i32) -> (i32, i32) {
    %c0_i32 = arith.constant 0 : i32
    return %arg0, %arg1 : i32, i32
  }
}

</mosaic_0001>

<llo_original>
// kernel: decoder_forward.13
$region0: #{decoder_forward.13}
  #allocation0 [shape = 'u32[]', space=smem, size = 0x4, offset = 0x4, fixed_abs, tag = 'smem constant byte address 0x4 - core index']
  #allocation1 [shape = 'u32[72,128]{1,0:T(1,128)}', space=vmem, size = 0x9000, scoped, tag = 'internal scratch']
  %s0 = inlined_call_operand.vmem [shape: bf16[8,128], index: 0, kind: input, shape index: {}]
  %s1 = inlined_call_operand.vmem [shape: bf16[128,1024], index: 1, kind: input, shape index: {}]
  %s2 = inlined_call_operand.vmem [shape: f32[1,1024], index: 2, kind: input, shape index: {}]
  %s3 = inlined_call_operand.vmem [shape: bf16[8,1024], index: 3, kind: output, shape index: {}]
  %s4 = sld [smem:[#allocation0]]
  $region83: #{decoder_forward.13} parent=0
    _
  %s6 = ssub.s32 1, %s4
  %s7 = scalar_select 0, %s6, %s4
  $region1: #{decoder_forward.13} parent=0
    #allocation2 [shape = 'u8[131072]{0}', space=vmem, size = 0x20000, scoped, tag = 'input window, operand 1']
    loop: start=0, step=1, limit=6
    $region2: #{decoder_forward.13} parent=1 // loop_pre_header
      _
    $region3: #{decoder_forward.13} parent=1 // loop_header
      %s9 = sphi 0, %s13
      %p10 = scmp.ge.s32.totalorder %s9, 6
      %s16 = sphi 0, %s28
      %s17 = sphi 0, %s24
      %s18 = sphi 0, %s16
      %s19 = sphi 0, %s17
      %s20 = sphi 0, %s18
      %s21 = sphi 0, %s19
      %s31 = sphi 0, %s33
      %s34 = sphi 0, %s31
      %s35 = sphi 0, %s34
      %s51 = sphi 0, %s35
      %s57 = sphi 0, %s59
      %s60 = sphi 0, %s57
      %s61 = sphi 0, %s60
      %s77 = sphi 0, %s61
      %s83 = sphi 0, %s85
      %s86 = sphi 0, %s83
      %s87 = sphi 0, %s86
      %s103 = sphi 0, %s87
      %s111 = sphi 0, %s113
      %s114 = sphi 0, %s111
      %s115 = sphi 0, %s114
      %s131 = sphi 0, %s115
    $region4: #{decoder_forward.13} parent=1 // loop_header_branch
      %12 = sbr.rel (%p10) target = $region8
    $region5: #{decoder_forward.13} parent=1 // loop_body
      %s14 = ssub.s32 %s9, 1
      %s15 = ssub.s32 %s9, 2
      %s22 = sadd.s32 1, %s17
      %p23 = scmp.ge.s32.totalorder %s22, 4
      %s24 = scalar_select %p23, 0, %s22
      %s25 = sadd.s32 1, %s16
      %s26 = scalar_select %p23, %s25, %s16
      %p27 = scmp.ge.s32.totalorder %s26, 1
      %s28 = scalar_select %p27, 0, %s26
      %s29 = ssub.s32 %s16, %s28
      %p30 = scmp.eq.s32.totalorder %s29, 0
      %s32 = sadd.s32 %s31, 1
      %s33 = scalar_select %p30, %s31, %s32
      %p36 = pneg %p30
      %p37 = scmp.eq.s32.totalorder %s9, 3
      %p38 = por %p36, %p37
      %p39 = scmp.ne.s32.totalorder %s31, %s34
      %p40 = scmp.eq.s32.totalorder %s9, 0
      %p41 = por %p39, %p40
      %p42 = scmp.ne.s32.totalorder %s31, %s34
      %p43 = scmp.eq.s32.totalorder %s14, 3
      %p44 = por %p42, %p43
      %p45 = scmp.ne.s32.totalorder %s34, %s35
      %p46 = scmp.eq.s32.totalorder %s14, 0
      %p47 = por %p45, %p46
      %p48 = scmp.ne.s32.totalorder %s34, %s35
      %p49 = scmp.eq.s32.totalorder %s15, 3
      %p50 = por %p48, %p49
      %p52 = scmp.ne.s32.totalorder %s35, %s51
      %p53 = scmp.eq.s32.totalorder %s15, 0
      %p54 = por %p52, %p53
      %s55 = ssub.s32 %s17, %s24
      %p56 = scmp.eq.s32.totalorder %s55, 0
      %s58 = sadd.s32 %s57, 1
      %s59 = scalar_select %p56, %s57, %s58
      %p62 = pneg %p56
      %p63 = scmp.eq.s32.totalorder %s9, 3
      %p64 = por %p62, %p63
      %p65 = scmp.ne.s32.totalorder %s57, %s60
      %p66 = scmp.eq.s32.totalorder %s9, 0
      %p67 = por %p65, %p66
      %p68 = scmp.ne.s32.totalorder %s57, %s60
      %p69 = scmp.eq.s32.totalorder %s14, 3
      %p70 = por %p68, %p69
      %p71 = scmp.ne.s32.totalorder %s60, %s61
      %p72 = scmp.eq.s32.totalorder %s14, 0
      %p73 = por %p71, %p72
      %p74 = scmp.ne.s32.totalorder %s60, %s61
      %p75 = scmp.eq.s32.totalorder %s15, 3
      %p76 = por %p74, %p75
      %p78 = scmp.ne.s32.totalorder %s61, %s77
      %p79 = scmp.eq.s32.totalorder %s15, 0
      %p80 = por %p78, %p79
      %s81 = ssub.s32 %s17, %s24
      %p82 = scmp.eq.s32.totalorder %s81, 0
      %s84 = sadd.s32 %s83, 1
      %s85 = scalar_select %p82, %s83, %s84
      %p88 = pneg %p82
      %p89 = scmp.eq.s32.totalorder %s9, 3
      %p90 = por %p88, %p89
      %p91 = scmp.ne.s32.totalorder %s83, %s86
      %p92 = scmp.eq.s32.totalorder %s9, 0
      %p93 = por %p91, %p92
      %p94 = scmp.ne.s32.totalorder %s83, %s86
      %p95 = scmp.eq.s32.totalorder %s14, 3
      %p96 = por %p94, %p95
      %p97 = scmp.ne.s32.totalorder %s86, %s87
      %p98 = scmp.eq.s32.totalorder %s14, 0
      %p99 = por %p97, %p98
      %p100 = scmp.ne.s32.totalorder %s86, %s87
      %p101 = scmp.eq.s32.totalorder %s15, 3
      %p102 = por %p100, %p101
      %p104 = scmp.ne.s32.totalorder %s87, %s103
      %p105 = scmp.eq.s32.totalorder %s15, 0
      %p106 = por %p104, %p105
      %s107 = ssub.s32 %s16, %s28
      %s108 = ssub.s32 %s17, %s24
      %s109 = sor.u32 %s107, %s108
      %p110 = scmp.eq.s32.totalorder %s109, 0
      %s112 = sadd.s32 %s111, 1
      %s113 = scalar_select %p110, %s111, %s112
      %p116 = pneg %p110
      %p117 = scmp.eq.s32.totalorder %s9, 3
      %p118 = por %p116, %p117
      %p119 = scmp.ne.s32.totalorder %s111, %s114
      %p120 = scmp.eq.s32.totalorder %s9, 0
      %p121 = por %p119, %p120
      %p122 = scmp.ne.s32.totalorder %s111, %s114
      %p123 = scmp.eq.s32.totalorder %s14, 3
      %p124 = por %p122, %p123
      %p125 = scmp.ne.s32.totalorder %s114, %s115
      %p126 = scmp.eq.s32.totalorder %s14, 0
      %p127 = por %p125, %p126
      %p128 = scmp.ne.s32.totalorder %s114, %s115
      %p129 = scmp.eq.s32.totalorder %s15, 3
      %p130 = por %p128, %p129
      %p132 = scmp.ne.s32.totalorder %s115, %s131
      %p133 = scmp.eq.s32.totalorder %s15, 0
      %p134 = por %p132, %p133
      %p135 = scmp.le.s32.totalorder 1, %s9
      %p136 = scmp.lt.s32.totalorder %s9, 5
      %p137 = pnand %p135, %p136
      %p138 = pneg %p137
      // Predicated region
      $region9: #{decoder_forward.13} parent=5 // pred_check
        _
      $region10: #{decoder_forward.13} parent=5 // pred_check_branch
        %140 = sbr.rel (%p137) target = $region12
      $region11: #{decoder_forward.13} parent=5 // pred_region
        %s141 = ssub.s32 %s9, 1
        // Predicated region
        $region13: #{decoder_forward.13} parent=11 // pred_check
          %p142 = pneg %p47
        $region14: #{decoder_forward.13} parent=11 // pred_check_branch
          %144 = sbr.rel (%p142) target = $region16
        $region15: #{decoder_forward.13} parent=11 // pred_region
          %p145 = scmp.lt.s32.totalorder %s18, 0
          %s146 = scalar_select %p145, %s18, 0
          %s147 = smul.addr %s146, 4
          %s148 = scalar_lea.vmem %s0, %s147
        $region16: #{decoder_forward.13} parent=11 // pred_fallthru
          _
      $region12: #{decoder_forward.13} parent=5 // pred_fallthru
        _
      %p149 = scmp.lt.s32.totalorder %s9, 4
      // Predicated region
      $region17: #{decoder_forward.13} parent=5 // pred_check
        %p150 = pneg %p149
      $region18: #{decoder_forward.13} parent=5 // pred_check_branch
        %152 = sbr.rel (%p150) target = $region20
      $region19: #{decoder_forward.13} parent=5 // pred_region
        // Predicated region
        $region21: #{decoder_forward.13} parent=19 // pred_check
          %p153 = pneg %p67
        $region22: #{decoder_forward.13} parent=19 // pred_check_branch
          %155 = sbr.rel (%p153) target = $region24
        $region23: #{decoder_forward.13} parent=19 // pred_region
          %s156 = sand.u32 %s57, 1
          %s157 = sand.u32 %s57, 1
          %s158 = smul.addr %s157, 128
          %s159 = scalar_lea.vmem [#allocation2], %s158
          %s160 = smul.u32 2, %s17
          %s161 = smul.addr %s160, 4
          %s162 = scalar_lea.vmem %s1, %s161
          // Predicated region
          $region25: #{decoder_forward.13} parent=23 // pred_check
            _
          $region26: #{decoder_forward.13} parent=23 // pred_check_branch
            %164 = sbr.rel (0) target = $region28
          $region27: #{decoder_forward.13} parent=23 // pred_region
            // Predicated region
            $region29: #{decoder_forward.13} parent=27 // pred_check
              _
            $region30: #{decoder_forward.13} parent=27 // pred_check_branch
              %166 = sbr.rel (0) target = $region32
            $region31: #{decoder_forward.13} parent=27 // pred_region
              // Predicated region
              $region44: #{decoder_forward.13} parent=31 // pred_check
                _
              $region45: #{decoder_forward.13} parent=31 // pred_check_branch
                %212 = sbr.rel (0) target = $region47
              $region46: #{decoder_forward.13} parent=31 // pred_region
                loop: start=0, step=1, limit=1
                $region48: #{decoder_forward.13} parent=46 // loop_pre_header
                  _
                $region49: #{decoder_forward.13} parent=46 // loop_header
                  %s214 = sphi 0, %s218
                  %p215 = scmp.ge.s32.totalorder %s214, 1
                  %s219 = sphi %s162, %s162
                  %s220 = sphi %s159, %s159
                $region50: #{decoder_forward.13} parent=46 // loop_header_branch
                  %217 = sbr.rel (%p215) target = $region54
                $region51: #{decoder_forward.13} parent=46 // loop_body
                  %v221 = vld [vmem:[%s219] sm:$0xff]
                  %222 = vst [vmem:[%s220] sm:$0xff] %v221
                  %v223 = vld [vmem:[%s219 + $0x20] sm:$0xff]
                  %224 = vst [vmem:[%s220 + $0x8] sm:$0xff] %v223
                  %v225 = vld [vmem:[%s219 + $0x40] sm:$0xff]
                  %226 = vst [vmem:[%s220 + $0x10] sm:$0xff] %v225
                  %v227 = vld [vmem:[%s219 + $0x60] sm:$0xff]
                  %228 = vst [vmem:[%s220 + $0x18] sm:$0xff] %v227
                  %v229 = vld [vmem:[%s219 + $0x80] sm:$0xff]
                  %230 = vst [vmem:[%s220 + $0x20] sm:$0xff] %v229
                  %v231 = vld [vmem:[%s219 + $0xa0] sm:$0xff]
                  %232 = vst [vmem:[%s220 + $0x28] sm:$0xff] %v231
                  %v233 = vld [vmem:[%s219 + $0xc0] sm:$0xff]
                  %234 = vst [vmem:[%s220 + $0x30] sm:$0xff] %v233
                  %v235 = vld [vmem:[%s219 + $0xe0] sm:$0xff]
                  %236 = vst [vmem:[%s220 + $0x38] sm:$0xff] %v235
                  %v237 = vld [vmem:[%s219 + $0x100] sm:$0xff]
                  %238 = vst [vmem:[%s220 + $0x40] sm:$0xff] %v237
                  %v239 = vld [vmem:[%s219 + $0x120] sm:$0xff]
                  %240 = vst [vmem:[%s220 + $0x48] sm:$0xff] %v239
                  %v241 = vld [vmem:[%s219 + $0x140] sm:$0xff]
                  %242 = vst [vmem:[%s220 + $0x50] sm:$0xff] %v241
                  %v243 = vld [vmem:[%s219 + $0x160] sm:$0xff]
                  %244 = vst [vmem:[%s220 + $0x58] sm:$0xff] %v243
                  %v245 = vld [vmem:[%s219 + $0x180] sm:$0xff]
                  %246 = vst [vmem:[%s220 + $0x60] sm:$0xff] %v245
                  %v247 = vld [vmem:[%s219 + $0x1a0] sm:$0xff]
                  %248 = vst [vmem:[%s220 + $0x68] sm:$0xff] %v247
                  %v249 = vld [vmem:[%s219 + $0x1c0] sm:$0xff]
                  %250 = vst [vmem:[%s220 + $0x70] sm:$0xff] %v249
                  %v251 = vld [vmem:[%s219 + $0x1e0] sm:$0xff]
                  %252 = vst [vmem:[%s220 + $0x78] sm:$0xff] %v251
                $region52: #{decoder_forward.13} parent=46 // loop_footer
                  %s218 = sadd.s32 1, %s214
                $region53: #{decoder_forward.13} parent=46 // loop_footer_branch
                  %213 = sbr.rel target = $region49
                $region54: #{decoder_forward.13} parent=46 // loop_exit
                  _
              $region47: #{decoder_forward.13} parent=31 // pred_fallthru
                _
              // Predicated region
              $region55: #{decoder_forward.13} parent=31 // pred_check
                _
              $region56: #{decoder_forward.13} parent=31 // pred_check_branch
                %254 = sbr.rel target = $region58
              $region57: #{decoder_forward.13} parent=31 // pred_region
                _
              $region58: #{decoder_forward.13} parent=31 // pred_fallthru
                _
            $region32: #{decoder_forward.13} parent=27 // pred_fallthru
              _
            // Predicated region
            $region33: #{decoder_forward.13} parent=27 // pred_check
              _
            $region34: #{decoder_forward.13} parent=27 // pred_check_branch
              %168 = sbr.rel target = $region36
            $region35: #{decoder_forward.13} parent=27 // pred_region
              %s170 = ssub.s32 256, 1
              loop: start=0, step=1, limit=1
              $region37: #{decoder_forward.13} parent=35 // loop_pre_header
                _
              $region38: #{decoder_forward.13} parent=35 // loop_header
                %s172 = sphi 0, %s176
                %p173 = scmp.ge.s32.totalorder %s172, 1
                %s177 = sphi %s162, %s162
                %s178 = sphi %s159, %s159
              $region39: #{decoder_forward.13} parent=35 // loop_header_branch
                %175 = sbr.rel (%p173) target = $region43
              $region40: #{decoder_forward.13} parent=35 // loop_body
                %v179 = vld [vmem:[%s177] sm:%s170]
                %180 = vst [vmem:[%s178] sm:%s170] %v179
                %v181 = vld [vmem:[%s177 + $0x20] sm:%s170]
                %182 = vst [vmem:[%s178 + $0x8] sm:%s170] %v181
                %v183 = vld [vmem:[%s177 + $0x40] sm:%s170]
                %184 = vst [vmem:[%s178 + $0x10] sm:%s170] %v183
                %v185 = vld [vmem:[%s177 + $0x60] sm:%s170]
                %186 = vst [vmem:[%s178 + $0x18] sm:%s170] %v185
                %v187 = vld [vmem:[%s177 + $0x80] sm:%s170]
                %188 = vst [vmem:[%s178 + $0x20] sm:%s170] %v187
                %v189 = vld [vmem:[%s177 + $0xa0] sm:%s170]
                %190 = vst [vmem:[%s178 + $0x28] sm:%s170] %v189
                %v191 = vld [vmem:[%s177 + $0xc0] sm:%s170]
                %192 = vst [vmem:[%s178 + $0x30] sm:%s170] %v191
                %v193 = vld [vmem:[%s177 + $0xe0] sm:%s170]
                %194 = vst [vmem:[%s178 + $0x38] sm:%s170] %v193
                %v195 = vld [vmem:[%s177 + $0x100] sm:%s170]
                %196 = vst [vmem:[%s178 + $0x40] sm:%s170] %v195
                %v197 = vld [vmem:[%s177 + $0x120] sm:%s170]
                %198 = vst [vmem:[%s178 + $0x48] sm:%s170] %v197
                %v199 = vld [vmem:[%s177 + $0x140] sm:%s170]
                %200 = vst [vmem:[%s178 + $0x50] sm:%s170] %v199
                %v201 = vld [vmem:[%s177 + $0x160] sm:%s170]
                %202 = vst [vmem:[%s178 + $0x58] sm:%s170] %v201
                %v203 = vld [vmem:[%s177 + $0x180] sm:%s170]
                %204 = vst [vmem:[%s178 + $0x60] sm:%s170] %v203
                %v205 = vld [vmem:[%s177 + $0x1a0] sm:%s170]
                %206 = vst [vmem:[%s178 + $0x68] sm:%s170] %v205
                %v207 = vld [vmem:[%s177 + $0x1c0] sm:%s170]
                %208 = vst [vmem:[%s178 + $0x70] sm:%s170] %v207
                %v209 = vld [vmem:[%s177 + $0x1e0] sm:%s170]
                %210 = vst [vmem:[%s178 + $0x78] sm:%s170] %v209
              $region41: #{decoder_forward.13} parent=35 // loop_footer
                %s176 = sadd.s32 1, %s172
              $region42: #{decoder_forward.13} parent=35 // loop_footer_branch
                %171 = sbr.rel target = $region38
              $region43: #{decoder_forward.13} parent=35 // loop_exit
                _
            $region36: #{decoder_forward.13} parent=27 // pred_fallthru
              _
          $region28: #{decoder_forward.13} parent=23 // pred_fallthru
            _
          %255 = vnop
        $region24: #{decoder_forward.13} parent=19 // pred_fallthru
          _
        // Predicated region
        $region59: #{decoder_forward.13} parent=19 // pred_check
          %p256 = pneg %p93
        $region60: #{decoder_forward.13} parent=19 // pred_check_branch
          %258 = sbr.rel (%p256) target = $region62
        $region61: #{decoder_forward.13} parent=19 // pred_region
          %s259 = smul.u32 2, %s17
          %p260 = scmp.lt.s32.totalorder %s259, 7
          %s261 = scalar_select %p260, %s259, 7
          %s262 = scalar_lea.vmem %s2, %s261
          %s263 = smul.u32 2, %s17
        $region62: #{decoder_forward.13} parent=19 // pred_fallthru
          _
      $region20: #{decoder_forward.13} parent=5 // pred_fallthru
        _
      %p264 = scmp.le.s32.totalorder 1, %s9
      %p265 = scmp.lt.s32.totalorder %s9, 5
      %p266 = pnand %p264, %p265
      %p267 = pneg %p266
      // Predicated region
      $region63: #{decoder_forward.13} parent=5 // pred_check
        _
      $region64: #{decoder_forward.13} parent=5 // pred_check_branch
        %269 = sbr.rel (%p266) target = $region66
      $region65: #{decoder_forward.13} parent=5 // pred_region
        %s270 = ssub.s32 %s9, 1
        %s271 = sand.u32 %s60, 1
        %s272 = sand.u32 %s60, 1
        %s273 = smul.addr %s272, 128
        %s274 = scalar_lea.vmem [#allocation2], %s273
        // Predicated region
        $region67: #{decoder_forward.13} parent=65 // pred_check
          %p275 = pneg %p73
        $region68: #{decoder_forward.13} parent=65 // pred_check_branch
          %277 = sbr.rel (%p275) target = $region70
        $region69: #{decoder_forward.13} parent=65 // pred_region
          _
        $region70: #{decoder_forward.13} parent=65 // pred_fallthru
          _
        %p278 = scmp.lt.s32.totalorder %s18, 0
        %s279 = scalar_select %p278, %s18, 0
        %s280 = smul.addr %s279, 4
        %s281 = scalar_lea.vmem %s0, %s280
        %p282 = pneg %p47
        %p283 = pneg %p44
        %s284 = sand.u32 %s60, 1
        %s285 = sand.u32 %s60, 1
        %s286 = smul.addr %s285, 128
        %s287 = scalar_lea.vmem [#allocation2], %s286
        %p288 = pneg %p73
        %p289 = pneg %p70
        %s290 = smul.u32 2, %s19
        %p291 = scmp.lt.s32.totalorder %s290, 7
        %s292 = scalar_select %p291, %s290, 7
        %s293 = scalar_lea.vmem %s2, %s292
        %p294 = pneg %p99
        %p295 = pneg %p96
        %p296 = pneg %p127
        %p297 = pneg %p124
        %s298 = smul.u32 2, %s19
        %p299 = scmp.lt.s32.totalorder %s18, 0
        %s300 = scalar_select %p299, %s18, 0
        %p301 = scmp.lt.s32.totalorder %s298, 7
        %s302 = scalar_select %p301, %s298, 7
        %s303 = smul.addr %s300, 8
        %s304 = sadd.s32 %s302, %s303
        %s305 = smul.addr %s304, 4
        %s306 = scalar_lea.vmem %s3, %s305
        %p307 = scmp.lt.s32.totalorder %s18, 0
        %s308 = scalar_select %p307, %s18, 0
        %s309 = smul.addr %s308, 4
        %s310 = scalar_lea.vmem %s0, %s309
        %s311 = smul.u32 2, %s19
        %s312 = smul.u32 2, %s19
        %p313 = scmp.lt.s32.totalorder %s312, 7
        %s314 = scalar_select %p313, %s312, 7
        %s315 = scalar_lea.vmem %s2, %s314
        %s316 = smul.u32 2, %s19
        %s317 = smul.u32 2, %s19
        %p318 = scmp.lt.s32.totalorder %s18, 0
        %s319 = scalar_select %p318, %s18, 0
        %p320 = scmp.lt.s32.totalorder %s317, 7
        %s321 = scalar_select %p320, %s317, 7
        %s322 = smul.addr %s319, 8
        %s323 = sadd.s32 %s321, %s322
        %s324 = smul.addr %s323, 4
        %s325 = scalar_lea.vmem %s3, %s324
        %s326 = smul.u32 2, %s19
        %v327 = vld [vmem:[%s310] sm:$0xf]
        %v328 = vld [vmem:[%s274] sm:$0xff]
        %v329 = vld [vmem:[%s274 + $0x8] sm:$0xff]
        %v330 = vld [vmem:[%s274 + $0x10] sm:$0xff]
        %v331 = vld [vmem:[%s274 + $0x18] sm:$0xff]
        %v332 = vld [vmem:[%s274 + $0x20] sm:$0xff]
        %v333 = vld [vmem:[%s274 + $0x28] sm:$0xff]
        %v334 = vld [vmem:[%s274 + $0x30] sm:$0xff]
        %v335 = vld [vmem:[%s274 + $0x38] sm:$0xff]
        %v336 = vld [vmem:[%s274 + $0x40] sm:$0xff]
        %v337 = vld [vmem:[%s274 + $0x48] sm:$0xff]
        %v338 = vld [vmem:[%s274 + $0x50] sm:$0xff]
        %v339 = vld [vmem:[%s274 + $0x58] sm:$0xff]
        %v340 = vld [vmem:[%s274 + $0x60] sm:$0xff]
        %v341 = vld [vmem:[%s274 + $0x68] sm:$0xff]
        %v342 = vld [vmem:[%s274 + $0x70] sm:$0xff]
        %v343 = vld [vmem:[%s274 + $0x78] sm:$0xff]
        %v344 = vld [vmem:[%s315] sm:$0x3]
        %v346 = vperm.slane %v344, 0
        %v347 = vperm.slane %v344, 1
        %v366 = vunpack.c.l.b16 %v328
        %v367 = vunpack.c.h.b16 %v328
        %v368 = vunpack.c.l.b16 %v329
        %v369 = vunpack.c.h.b16 %v329
        %v370 = vunpack.c.l.b16 %v330
        %v371 = vunpack.c.h.b16 %v330
        %v372 = vunpack.c.l.b16 %v331
        %v373 = vunpack.c.h.b16 %v331
        %v374 = vunpack.c.l.b16 %v332
        %v375 = vunpack.c.h.b16 %v332
        %v376 = vunpack.c.l.b16 %v333
        %v377 = vunpack.c.h.b16 %v333
        %v378 = vunpack.c.l.b16 %v334
        %v379 = vunpack.c.h.b16 %v334
        %v380 = vunpack.c.l.b16 %v335
        %v381 = vunpack.c.h.b16 %v335
        %v382 = vunpack.c.l.b16 %v336
        %v383 = vunpack.c.h.b16 %v336
        %v384 = vunpack.c.l.b16 %v337
        %v385 = vunpack.c.h.b16 %v337
        %v386 = vunpack.c.l.b16 %v338
        %v387 = vunpack.c.h.b16 %v338
        %v388 = vunpack.c.l.b16 %v339
        %v389 = vunpack.c.h.b16 %v339
        %v390 = vunpack.c.l.b16 %v340
        %v391 = vunpack.c.h.b16 %v340
        %v392 = vunpack.c.l.b16 %v341
        %v393 = vunpack.c.h.b16 %v341
        %v394 = vunpack.c.l.b16 %v342
        %v395 = vunpack.c.h.b16 %v342
        %v396 = vunpack.c.l.b16 %v343
        %v397 = vunpack.c.h.b16 %v343
        %v398 = vpack.c.b16 %v368, %v366
        %v399 = vpack.c.b16 %v369, %v367
        %v400 = vpack.c.b16 %v372, %v370
        %v401 = vpack.c.b16 %v373, %v371
        %v402 = vpack.c.b16 %v376, %v374
        %v403 = vpack.c.b16 %v377, %v375
        %v404 = vpack.c.b16 %v380, %v378
        %v405 = vpack.c.b16 %v381, %v379
        %v406 = vpack.c.b16 %v384, %v382
        %v407 = vpack.c.b16 %v385, %v383
        %v408 = vpack.c.b16 %v388, %v386
        %v409 = vpack.c.b16 %v389, %v387
        %v410 = vpack.c.b16 %v392, %v390
        %v411 = vpack.c.b16 %v393, %v391
        %v412 = vpack.c.b16 %v396, %v394
        %v413 = vpack.c.b16 %v397, %v395
        %430 = vmatpush.bf16.msra.mxu0 %v412
        %431 = vmatpush.bf16.msra.mxu0 %v410
        %432 = vmatpush.bf16.msra.mxu0 %v408
        %433 = vmatpush.bf16.msra.mxu0 %v406
        %434 = vmatpush.bf16.msra.mxu0 %v404
        %435 = vmatpush.bf16.msra.mxu0 %v402
        %436 = vmatpush.bf16.msra.mxu0 %v400
        %437 = vmatpush.bf16.msra.mxu0 %v398
        %438 = vmatmul.bf16.gmra.mxu0 %v327
        %v439 = vpop.f32.mrf.mxu0
        %v440 = vadd.f32 %v346, %v439
        %v441 = vpop.f32.mrf.mxu0
        %442 = vdwg.mxu0
        %443 = vmatpush.bf16.msra.mxu0 %v413
        %444 = vmatpush.bf16.msra.mxu0 %v411
        %445 = vmatpush.bf16.msra.mxu0 %v409
        %446 = vmatpush.bf16.msra.mxu0 %v407
        %447 = vmatpush.bf16.msra.mxu0 %v405
        %448 = vmatpush.bf16.msra.mxu0 %v403
        %449 = vmatpush.bf16.msra.mxu0 %v401
        %450 = vmatpush.bf16.msra.mxu0 %v399
        %451 = vmatmul.bf16.gmra.mxu0 %v327
        %v452 = vpop.f32.mrf.mxu0
        %v453 = vadd.f32 %v347, %v452
        %v454 = vpop.f32.mrf.mxu0
        %455 = vdwg.mxu0
        %v456 = vmul.f32 %v440, 0.5
        %v457 = vmul.f32 %v453, 0.5
        %v458 = vmul.f32 %v440, 0.70710677
        %v459 = vmul.f32 %v453, 0.70710677
        %v460 = vmul.f32 %v458, %v458
        %v461 = vmin.f32 16.0, %v460
        %v462 = vmul.f32 %v461, 2.1237322e-06
        %v463 = vadd.f32 %v462, 0.00028619796
        %v464 = vmul.f32 %v461, %v463
        %v465 = vadd.f32 %v464, 0.0036580483
        %v466 = vmul.f32 %v461, %v465
        %v467 = vadd.f32 %v466, 0.05243302
        %v468 = vmul.f32 %v461, %v467
        %v469 = vadd.f32 %v468, 0.18741608
        %v470 = vmul.f32 %v461, %v469
        %v471 = vadd.f32 %v470, 1.1283791
        %v472 = vmul.f32 %v458, %v471
        %v473 = vmul.f32 %v461, 3.8918573e-05
        %v474 = vadd.f32 %v473, 0.001143296
        %v475 = vmul.f32 %v461, %v474
        %v476 = vadd.f32 %v475, 0.014752088
        %v477 = vmul.f32 %v461, %v476
        %v478 = vadd.f32 %v477, 0.112945676
        %v479 = vmul.f32 %v461, %v478
        %v480 = vadd.f32 %v479, 0.4994258
        %v481 = vmul.f32 %v461, %v480
        %v482 = vadd.f32 %v481, 1.0
        %v483 = vrcp.pop %v482
        %v484 = vmul.f32 %v482, %v483
        %v485 = vsub.f32 1.0, %v484
        %v486 = vmul.f32 %v483, %v485
        %v487 = vadd.f32 %v483, %v486
        %vm488 = vweird.f32 %v482
        %vm489 = vweird.f32 %v483
        %vm490 = vmor %vm488, %vm489
        %v491 = vsel %vm490, %v483, %v487
        %v492 = vand.u32 2147483647, %v482
        %vm493 = vcmp.eq.f32.partialorder %v492, 8.507059e+37
        %v494 = vand.u32 %v482, 2147483648
        %v495 = vor.u32 1.1754944e-38, %v494
        %v496 = vsel %vm493, %v495, %v491
        %v497 = vmul.f32 %v472, %v496
        %v498 = vmin.f32 %v497, 1.0
        %v499 = vmax.f32 %v498, -1.0
        %v500 = vmul.f32 %v459, %v459
        %v501 = vmin.f32 16.0, %v500
        %v502 = vmul.f32 %v501, 2.1237322e-06
        %v503 = vadd.f32 %v502, 0.00028619796
        %v504 = vmul.f32 %v501, %v503
        %v505 = vadd.f32 %v504, 0.0036580483
        %v506 = vmul.f32 %v501, %v505
        %v507 = vadd.f32 %v506, 0.05243302
        %v508 = vmul.f32 %v501, %v507
        %v509 = vadd.f32 %v508, 0.18741608
        %v510 = vmul.f32 %v501, %v509
        %v511 = vadd.f32 %v510, 1.1283791
        %v512 = vmul.f32 %v459, %v511
        %v513 = vmul.f32 %v501, 3.8918573e-05
        %v514 = vadd.f32 %v513, 0.001143296
        %v515 = vmul.f32 %v501, %v514
        %v516 = vadd.f32 %v515, 0.014752088
        %v517 = vmul.f32 %v501, %v516
        %v518 = vadd.f32 %v517, 0.112945676
        %v519 = vmul.f32 %v501, %v518
        %v520 = vadd.f32 %v519, 0.4994258
        %v521 = vmul.f32 %v501, %v520
        %v522 = vadd.f32 %v521, 1.0
        %v523 = vrcp.pop %v522
        %v524 = vmul.f32 %v522, %v523
        %v525 = vsub.f32 1.0, %v524
        %v526 = vmul.f32 %v523, %v525
        %v527 = vadd.f32 %v523, %v526
        %vm528 = vweird.f32 %v522
        %vm529 = vweird.f32 %v523
        %vm530 = vmor %vm528, %vm529
        %v531 = vsel %vm530, %v523, %v527
        %v532 = vand.u32 2147483647, %v522
        %vm533 = vcmp.eq.f32.partialorder %v532, 8.507059e+37
        %v534 = vand.u32 %v522, 2147483648
        %v535 = vor.u32 1.1754944e-38, %v534
        %v536 = vsel %vm533, %v535, %v531
        %v537 = vmul.f32 %v512, %v536
        %v538 = vmin.f32 %v537, 1.0
        %v539 = vmax.f32 %v538, -1.0
        %v540 = vadd.f32 %v499, 1.0
        %v541 = vadd.f32 %v539, 1.0
        %v542 = vmul.f32 %v456, %v540
        %v543 = vmul.f32 %v457, %v541
        %v544 = vpack.c.bf16 %v543, %v542
        %545 = vst [vmem:[%s325] sm:$0xff] %v544
        %s546 = smul.u32 2, %s19
        %p547 = scmp.lt.s32.totalorder %s18, 0
        %s548 = scalar_select %p547, %s18, 0
        %p549 = scmp.lt.s32.totalorder %s546, 7
        %s550 = scalar_select %p549, %s546, 7
        %s551 = smul.addr %s548, 8
        %s552 = sadd.s32 %s550, %s551
        %s553 = smul.addr %s552, 4
        %s554 = scalar_lea.vmem %s3, %s553
        // Predicated region
        $region71: #{decoder_forward.13} parent=65 // pred_check
          %p555 = pneg %p124
        $region72: #{decoder_forward.13} parent=65 // pred_check_branch
          %557 = sbr.rel (%p555) target = $region74
        $region73: #{decoder_forward.13} parent=65 // pred_region
          %s558 = smul.u32 2, %s19
        $region74: #{decoder_forward.13} parent=65 // pred_fallthru
          _
      $region66: #{decoder_forward.13} parent=5 // pred_fallthru
        _
      %p559 = scmp.le.s32.totalorder 2, %s9
      // Predicated region
      $region75: #{decoder_forward.13} parent=5 // pred_check
        %p560 = pneg %p559
      $region76: #{decoder_forward.13} parent=5 // pred_check_branch
        %562 = sbr.rel (%p560) target = $region78
      $region77: #{decoder_forward.13} parent=5 // pred_region
        %s563 = ssub.s32 %s9, 2
        // Predicated region
        $region79: #{decoder_forward.13} parent=77 // pred_check
          %p564 = pneg %p130
        $region80: #{decoder_forward.13} parent=77 // pred_check_branch
          %566 = sbr.rel (%p564) target = $region82
        $region81: #{decoder_forward.13} parent=77 // pred_region
          %s567 = smul.u32 2, %s21
          %p568 = scmp.lt.s32.totalorder %s20, 0
          %s569 = scalar_select %p568, %s20, 0
          %p570 = scmp.lt.s32.totalorder %s567, 7
          %s571 = scalar_select %p570, %s567, 7
          %s572 = smul.addr %s569, 8
          %s573 = sadd.s32 %s571, %s572
          %s574 = smul.addr %s573, 4
          %s575 = scalar_lea.vmem %s3, %s574
        $region82: #{decoder_forward.13} parent=77 // pred_fallthru
          _
      $region78: #{decoder_forward.13} parent=5 // pred_fallthru
        _
    $region6: #{decoder_forward.13} parent=1 // loop_footer
      %s13 = sadd.s32 1, %s9
    $region7: #{decoder_forward.13} parent=1 // loop_footer_branch
      %8 = sbr.rel target = $region3
    $region8: #{decoder_forward.13} parent=1 // loop_exit
      _

// kernel: decoder_forward.14
$region0: #{decoder_forward.14}
  #allocation0 [shape = 'u32[]', space=smem, size = 0x4, offset = 0x4, fixed_abs, tag = 'smem constant byte address 0x4 - core index']
  #allocation1 [shape = 'u32[72,128]{1,0:T(1,128)}', space=vmem, size = 0x9000, scoped, tag = 'internal scratch']
  %s0 = inlined_call_operand.vmem [shape: bf16[32,1664], index: 0, kind: input, shape index: {}]
  %s1 = inlined_call_operand.vmem [shape: bf16[1664,128], index: 1, kind: input, shape index: {}]
  %s2 = inlined_call_operand.vmem [shape: f32[1,128], index: 2, kind: input, shape index: {}]
  %s3 = inlined_call_operand.vmem [shape: f32[1,128], index: 3, kind: input, shape index: {}]
  %s4 = inlined_call_operand.vmem [shape: bf16[32,128], index: 4, kind: output, shape index: {}]
  %s5 = sld [smem:[#allocation0]]
  $region26: #{decoder_forward.14} parent=0
    _
  %s7 = ssub.s32 1, %s5
  %s8 = scalar_select 0, %s7, %s5
  // Predicated region
  $region2: #{decoder_forward.14} parent=0 // pred_check
    _
  $region3: #{decoder_forward.14} parent=0 // pred_check_branch
    %10 = sbr.rel (0) target = $region5
  $region4: #{decoder_forward.14} parent=0 // pred_region
    _
  $region5: #{decoder_forward.14} parent=0 // pred_fallthru
    _
  // Predicated region
  $region6: #{decoder_forward.14} parent=0 // pred_check
    _
  $region7: #{decoder_forward.14} parent=0 // pred_check_branch
    %12 = sbr.rel (0) target = $region9
  $region8: #{decoder_forward.14} parent=0 // pred_region
    _
  $region9: #{decoder_forward.14} parent=0 // pred_fallthru
    _
  // Predicated region
  $region10: #{decoder_forward.14} parent=0 // pred_check
    _
  $region11: #{decoder_forward.14} parent=0 // pred_check_branch
    %14 = sbr.rel (0) target = $region13
  $region12: #{decoder_forward.14} parent=0 // pred_region
    _
  $region13: #{decoder_forward.14} parent=0 // pred_fallthru
    _
  // Predicated region
  $region14: #{decoder_forward.14} parent=0 // pred_check
    _
  $region15: #{decoder_forward.14} parent=0 // pred_check_branch
    %16 = sbr.rel (0) target = $region17
  $region16: #{decoder_forward.14} parent=0 // pred_region
    _
  $region17: #{decoder_forward.14} parent=0 // pred_fallthru
    _
  %v17 = vld [vmem:[%s0] sm:$0xff]
  %v18 = vld [vmem:[%s0 + $0x8] sm:$0xff]
  %v19 = vld [vmem:[%s0 + $0x10] sm:$0xff]
  %v20 = vld [vmem:[%s0 + $0x18] sm:$0xff]
  %v21 = vld [vmem:[%s0 + $0x20] sm:$0xff]
  %v22 = vld [vmem:[%s0 + $0x28] sm:$0xff]
  %v23 = vld [vmem:[%s0 + $0x30] sm:$0xf]
  %v24 = vld [vmem:[%s0 + $0x34] sm:$0xff]
  %v25 = vld [vmem:[%s0 + $0x3c] sm:$0xff]
  %v26 = vld [vmem:[%s0 + $0x44] sm:$0xff]
  %v27 = vld [vmem:[%s0 + $0x4c] sm:$0xff]
  %v28 = vld [vmem:[%s0 + $0x54] sm:$0xff]
  %v29 = vld [vmem:[%s0 + $0x5c] sm:$0xff]
  %v30 = vld [vmem:[%s0 + $0x64] sm:$0xf]
  %v31 = vld [vmem:[%s0 + $0x68] sm:$0xff]
  %v32 = vld [vmem:[%s0 + $0x70] sm:$0xff]
  %v33 = vld [vmem:[%s0 + $0x78] sm:$0xff]
  %v34 = vld [vmem:[%s0 + $0x80] sm:$0xff]
  %v35 = vld [vmem:[%s0 + $0x88] sm:$0xff]
  %v36 = vld [vmem:[%s0 + $0x90] sm:$0xff]
  %v37 = vld [vmem:[%s0 + $0x98] sm:$0xf]
  %v38 = vld [vmem:[%s0 + $0x9c] sm:$0xff]
  %v39 = vld [vmem:[%s0 + $0xa4] sm:$0xff]
  %v40 = vld [vmem:[%s0 + $0xac] sm:$0xff]
  %v41 = vld [vmem:[%s0 + $0xb4] sm:$0xff]
  %v42 = vld [vmem:[%s0 + $0xbc] sm:$0xff]
  %v43 = vld [vmem:[%s0 + $0xc4] sm:$0xff]
  %v44 = vld [vmem:[%s0 + $0xcc] sm:$0xf]
  %v45 = vld [vmem:[%s1] sm:$0xf]
  %v46 = vld [vmem:[%s1 + $0x4] sm:$0xf]
  %v47 = vld [vmem:[%s1 + $0x8] sm:$0xf]
  %v48 = vld [vmem:[%s1 + $0xc] sm:$0xf]
  %v49 = vld [vmem:[%s1 + $0x10] sm:$0xf]
  %v50 = vld [vmem:[%s1 + $0x14] sm:$0xf]
  %v51 = vld [vmem:[%s1 + $0x18] sm:$0xf]
  %v52 = vld [vmem:[%s1 + $0x1c] sm:$0xf]
  %v53 = vld [vmem:[%s1 + $0x20] sm:$0xf]
  %v54 = vld [vmem:[%s1 + $0x24] sm:$0xf]
  %v55 = vld [vmem:[%s1 + $0x28] sm:$0xf]
  %v56 = vld [vmem:[%s1 + $0x2c] sm:$0xf]
  %v57 = vld [vmem:[%s1 + $0x30] sm:$0xf]
  %v58 = vld [vmem:[%s1 + $0x34] sm:$0xf]
  %v59 = vld [vmem:[%s1 + $0x38] sm:$0xf]
  %v60 = vld [vmem:[%s1 + $0x3c] sm:$0xf]
  %v61 = vld [vmem:[%s1 + $0x40] sm:$0xf]
  %v62 = vld [vmem:[%s1 + $0x44] sm:$0xf]
  %v63 = vld [vmem:[%s1 + $0x48] sm:$0xf]
  %v64 = vld [vmem:[%s1 + $0x4c] sm:$0xf]
  %v65 = vld [vmem:[%s1 + $0x50] sm:$0xf]
  %v66 = vld [vmem:[%s1 + $0x54] sm:$0xf]
  %v67 = vld [vmem:[%s1 + $0x58] sm:$0xf]
  %v68 = vld [vmem:[%s1 + $0x5c] sm:$0xf]
  %v69 = vld [vmem:[%s1 + $0x60] sm:$0xf]
  %v70 = vld [vmem:[%s1 + $0x64] sm:$0xf]
  %v71 = vld [vmem:[%s1 + $0x68] sm:$0xf]
  %v72 = vld [vmem:[%s1 + $0x6c] sm:$0xf]
  %v73 = vld [vmem:[%s1 + $0x70] sm:$0xf]
  %v74 = vld [vmem:[%s1 + $0x74] sm:$0xf]
  %v75 = vld [vmem:[%s1 + $0x78] sm:$0xf]
  %v76 = vld [vmem:[%s1 + $0x7c] sm:$0xf]
  %v77 = vld [vmem:[%s1 + $0x80] sm:$0xf]
  %v78 = vld [vmem:[%s1 + $0x84] sm:$0xf]
  %v79 = vld [vmem:[%s1 + $0x88] sm:$0xf]
  %v80 = vld [vmem:[%s1 + $0x8c] sm:$0xf]
  %v81 = vld [vmem:[%s1 + $0x90] sm:$0xf]
  %v82 = vld [vmem:[%s1 + $0x94] sm:$0xf]
  %v83 = vld [vmem:[%s1 + $0x98] sm:$0xf]
  %v84 = vld [vmem:[%s1 + $0x9c] sm:$0xf]
  %v85 = vld [vmem:[%s1 + $0xa0] sm:$0xf]
  %v86 = vld [vmem:[%s1 + $0xa4] sm:$0xf]
  %v87 = vld [vmem:[%s1 + $0xa8] sm:$0xf]
  %v88 = vld [vmem:[%s1 + $0xac] sm:$0xf]
  %v89 = vld [vmem:[%s1 + $0xb0] sm:$0xf]
  %v90 = vld [vmem:[%s1 + $0xb4] sm:$0xf]
  %v91 = vld [vmem:[%s1 + $0xb8] sm:$0xf]
  %v92 = vld [vmem:[%s1 + $0xbc] sm:$0xf]
  %v93 = vld [vmem:[%s1 + $0xc0] sm:$0xf]
  %v94 = vld [vmem:[%s1 + $0xc4] sm:$0xf]
  %v95 = vld [vmem:[%s1 + $0xc8] sm:$0xf]
  %v96 = vld [vmem:[%s1 + $0xcc] sm:$0xf]
  %v97 = vld [vmem:[%s1 + $0xd0] sm:$0xf]
  %v98 = vld [vmem:[%s1 + $0xd4] sm:$0xf]
  %v99 = vld [vmem:[%s1 + $0xd8] sm:$0xf]
  %v100 = vld [vmem:[%s1 + $0xdc] sm:$0xf]
  %v101 = vld [vmem:[%s1 + $0xe0] sm:$0xf]
  %v102 = vld [vmem:[%s1 + $0xe4] sm:$0xf]
  %v103 = vld [vmem:[%s1 + $0xe8] sm:$0xf]
  %v104 = vld [vmem:[%s1 + $0xec] sm:$0xf]
  %v105 = vld [vmem:[%s1 + $0xf0] sm:$0xf]
  %v106 = vld [vmem:[%s1 + $0xf4] sm:$0xf]
  %v107 = vld [vmem:[%s1 + $0xf8] sm:$0xf]
  %v108 = vld [vmem:[%s1 + $0xfc] sm:$0xf]
  %v109 = vld [vmem:[%s1 + $0x100] sm:$0xf]
  %v110 = vld [vmem:[%s1 + $0x104] sm:$0xf]
  %v111 = vld [vmem:[%s1 + $0x108] sm:$0xf]
  %v112 = vld [vmem:[%s1 + $0x10c] sm:$0xf]
  %v113 = vld [vmem:[%s1 + $0x110] sm:$0xf]
  %v114 = vld [vmem:[%s1 + $0x114] sm:$0xf]
  %v115 = vld [vmem:[%s1 + $0x118] sm:$0xf]
  %v116 = vld [vmem:[%s1 + $0x11c] sm:$0xf]
  %v117 = vld [vmem:[%s1 + $0x120] sm:$0xf]
  %v118 = vld [vmem:[%s1 + $0x124] sm:$0xf]
  %v119 = vld [vmem:[%s1 + $0x128] sm:$0xf]
  %v120 = vld [vmem:[%s1 + $0x12c] sm:$0xf]
  %v121 = vld [vmem:[%s1 + $0x130] sm:$0xf]
  %v122 = vld [vmem:[%s1 + $0x134] sm:$0xf]
  %v123 = vld [vmem:[%s1 + $0x138] sm:$0xf]
  %v124 = vld [vmem:[%s1 + $0x13c] sm:$0xf]
  %v125 = vld [vmem:[%s1 + $0x140] sm:$0xf]
  %v126 = vld [vmem:[%s1 + $0x144] sm:$0xf]
  %v127 = vld [vmem:[%s1 + $0x148] sm:$0xf]
  %v128 = vld [vmem:[%s1 + $0x14c] sm:$0xf]
  %v129 = vld [vmem:[%s1 + $0x150] sm:$0xf]
  %v130 = vld [vmem:[%s1 + $0x154] sm:$0xf]
  %v131 = vld [vmem:[%s1 + $0x158] sm:$0xf]
  %v132 = vld [vmem:[%s1 + $0x15c] sm:$0xf]
  %v133 = vld [vmem:[%s1 + $0x160] sm:$0xf]
  %v134 = vld [vmem:[%s1 + $0x164] sm:$0xf]
  %v135 = vld [vmem:[%s1 + $0x168] sm:$0xf]
  %v136 = vld [vmem:[%s1 + $0x16c] sm:$0xf]
  %v137 = vld [vmem:[%s1 + $0x170] sm:$0xf]
  %v138 = vld [vmem:[%s1 + $0x174] sm:$0xf]
  %v139 = vld [vmem:[%s1 + $0x178] sm:$0xf]
  %v140 = vld [vmem:[%s1 + $0x17c] sm:$0xf]
  %v141 = vld [vmem:[%s1 + $0x180] sm:$0xf]
  %v142 = vld [vmem:[%s1 + $0x184] sm:$0xf]
  %v143 = vld [vmem:[%s1 + $0x188] sm:$0xf]
  %v144 = vld [vmem:[%s1 + $0x18c] sm:$0xf]
  %v145 = vld [vmem:[%s1 + $0x190] sm:$0xf]
  %v146 = vld [vmem:[%s1 + $0x194] sm:$0xf]
  %v147 = vld [vmem:[%s1 + $0x198] sm:$0xf]
  %v148 = vld [vmem:[%s1 + $0x19c] sm:$0xf]
  %v149 = vld [vmem:[%s1 + $0x1a0] sm:$0xf]
  %v150 = vld [vmem:[%s1 + $0x1a4] sm:$0xf]
  %v151 = vld [vmem:[%s1 + $0x1a8] sm:$0xf]
  %v152 = vld [vmem:[%s1 + $0x1ac] sm:$0xf]
  %v153 = vld [vmem:[%s1 + $0x1b0] sm:$0xf]
  %v154 = vld [vmem:[%s1 + $0x1b4] sm:$0xf]
  %v155 = vld [vmem:[%s1 + $0x1b8] sm:$0xf]
  %v156 = vld [vmem:[%s1 + $0x1bc] sm:$0xf]
  %v157 = vld [vmem:[%s1 + $0x1c0] sm:$0xf]
  %v158 = vld [vmem:[%s1 + $0x1c4] sm:$0xf]
  %v159 = vld [vmem:[%s1 + $0x1c8] sm:$0xf]
  %v160 = vld [vmem:[%s1 + $0x1cc] sm:$0xf]
  %v161 = vld [vmem:[%s1 + $0x1d0] sm:$0xf]
  %v162 = vld [vmem:[%s1 + $0x1d4] sm:$0xf]
  %v163 = vld [vmem:[%s1 + $0x1d8] sm:$0xf]
  %v164 = vld [vmem:[%s1 + $0x1dc] sm:$0xf]
  %v165 = vld [vmem:[%s1 + $0x1e0] sm:$0xf]
  %v166 = vld [vmem:[%s1 + $0x1e4] sm:$0xf]
  %v167 = vld [vmem:[%s1 + $0x1e8] sm:$0xf]
  %v168 = vld [vmem:[%s1 + $0x1ec] sm:$0xf]
  %v169 = vld [vmem:[%s1 + $0x1f0] sm:$0xf]
  %v170 = vld [vmem:[%s1 + $0x1f4] sm:$0xf]
  %v171 = vld [vmem:[%s1 + $0x1f8] sm:$0xf]
  %v172 = vld [vmem:[%s1 + $0x1fc] sm:$0xf]
  %v173 = vld [vmem:[%s1 + $0x200] sm:$0xf]
  %v174 = vld [vmem:[%s1 + $0x204] sm:$0xf]
  %v175 = vld [vmem:[%s1 + $0x208] sm:$0xf]
  %v176 = vld [vmem:[%s1 + $0x20c] sm:$0xf]
  %v177 = vld [vmem:[%s1 + $0x210] sm:$0xf]
  %v178 = vld [vmem:[%s1 + $0x214] sm:$0xf]
  %v179 = vld [vmem:[%s1 + $0x218] sm:$0xf]
  %v180 = vld [vmem:[%s1 + $0x21c] sm:$0xf]
  %v181 = vld [vmem:[%s1 + $0x220] sm:$0xf]
  %v182 = vld [vmem:[%s1 + $0x224] sm:$0xf]
  %v183 = vld [vmem:[%s1 + $0x228] sm:$0xf]
  %v184 = vld [vmem:[%s1 + $0x22c] sm:$0xf]
  %v185 = vld [vmem:[%s1 + $0x230] sm:$0xf]
  %v186 = vld [vmem:[%s1 + $0x234] sm:$0xf]
  %v187 = vld [vmem:[%s1 + $0x238] sm:$0xf]
  %v188 = vld [vmem:[%s1 + $0x23c] sm:$0xf]
  %v189 = vld [vmem:[%s1 + $0x240] sm:$0xf]
  %v190 = vld [vmem:[%s1 + $0x244] sm:$0xf]
  %v191 = vld [vmem:[%s1 + $0x248] sm:$0xf]
  %v192 = vld [vmem:[%s1 + $0x24c] sm:$0xf]
  %v193 = vld [vmem:[%s1 + $0x250] sm:$0xf]
  %v194 = vld [vmem:[%s1 + $0x254] sm:$0xf]
  %v195 = vld [vmem:[%s1 + $0x258] sm:$0xf]
  %v196 = vld [vmem:[%s1 + $0x25c] sm:$0xf]
  %v197 = vld [vmem:[%s1 + $0x260] sm:$0xf]
  %v198 = vld [vmem:[%s1 + $0x264] sm:$0xf]
  %v199 = vld [vmem:[%s1 + $0x268] sm:$0xf]
  %v200 = vld [vmem:[%s1 + $0x26c] sm:$0xf]
  %v201 = vld [vmem:[%s1 + $0x270] sm:$0xf]
  %v202 = vld [vmem:[%s1 + $0x274] sm:$0xf]
  %v203 = vld [vmem:[%s1 + $0x278] sm:$0xf]
  %v204 = vld [vmem:[%s1 + $0x27c] sm:$0xf]
  %v205 = vld [vmem:[%s1 + $0x280] sm:$0xf]
  %v206 = vld [vmem:[%s1 + $0x284] sm:$0xf]
  %v207 = vld [vmem:[%s1 + $0x288] sm:$0xf]
  %v208 = vld [vmem:[%s1 + $0x28c] sm:$0xf]
  %v209 = vld [vmem:[%s1 + $0x290] sm:$0xf]
  %v210 = vld [vmem:[%s1 + $0x294] sm:$0xf]
  %v211 = vld [vmem:[%s1 + $0x298] sm:$0xf]
  %v212 = vld [vmem:[%s1 + $0x29c] sm:$0xf]
  %v213 = vld [vmem:[%s1 + $0x2a0] sm:$0xf]
  %v214 = vld [vmem:[%s1 + $0x2a4] sm:$0xf]
  %v215 = vld [vmem:[%s1 + $0x2a8] sm:$0xf]
  %v216 = vld [vmem:[%s1 + $0x2ac] sm:$0xf]
  %v217 = vld [vmem:[%s1 + $0x2b0] sm:$0xf]
  %v218 = vld [vmem:[%s1 + $0x2b4] sm:$0xf]
  %v219 = vld [vmem:[%s1 + $0x2b8] sm:$0xf]
  %v220 = vld [vmem:[%s1 + $0x2bc] sm:$0xf]
  %v221 = vld [vmem:[%s1 + $0x2c0] sm:$0xf]
  %v222 = vld [vmem:[%s1 + $0x2c4] sm:$0xf]
  %v223 = vld [vmem:[%s1 + $0x2c8] sm:$0xf]
  %v224 = vld [vmem:[%s1 + $0x2cc] sm:$0xf]
  %v225 = vld [vmem:[%s1 + $0x2d0] sm:$0xf]
  %v226 = vld [vmem:[%s1 + $0x2d4] sm:$0xf]
  %v227 = vld [vmem:[%s1 + $0x2d8] sm:$0xf]
  %v228 = vld [vmem:[%s1 + $0x2dc] sm:$0xf]
  %v229 = vld [vmem:[%s1 + $0x2e0] sm:$0xf]
  %v230 = vld [vmem:[%s1 + $0x2e4] sm:$0xf]
  %v231 = vld [vmem:[%s1 + $0x2e8] sm:$0xf]
  %v232 = vld [vmem:[%s1 + $0x2ec] sm:$0xf]
  %v233 = vld [vmem:[%s1 + $0x2f0] sm:$0xf]
  %v234 = vld [vmem:[%s1 + $0x2f4] sm:$0xf]
  %v235 = vld [vmem:[%s1 + $0x2f8] sm:$0xf]
  %v236 = vld [vmem:[%s1 + $0x2fc] sm:$0xf]
  %v237 = vld [vmem:[%s1 + $0x300] sm:$0xf]
  %v238 = vld [vmem:[%s1 + $0x304] sm:$0xf]
  %v239 = vld [vmem:[%s1 + $0x308] sm:$0xf]
  %v240 = vld [vmem:[%s1 + $0x30c] sm:$0xf]
  %v241 = vld [vmem:[%s1 + $0x310] sm:$0xf]
  %v242 = vld [vmem:[%s1 + $0x314] sm:$0xf]
  %v243 = vld [vmem:[%s1 + $0x318] sm:$0xf]
  %v244 = vld [vmem:[%s1 + $0x31c] sm:$0xf]
  %v245 = vld [vmem:[%s1 + $0x320] sm:$0xf]
  %v246 = vld [vmem:[%s1 + $0x324] sm:$0xf]
  %v247 = vld [vmem:[%s1 + $0x328] sm:$0xf]
  %v248 = vld [vmem:[%s1 + $0x32c] sm:$0xf]
  %v249 = vld [vmem:[%s1 + $0x330] sm:$0xf]
  %v250 = vld [vmem:[%s1 + $0x334] sm:$0xf]
  %v251 = vld [vmem:[%s1 + $0x338] sm:$0xf]
  %v252 = vld [vmem:[%s1 + $0x33c] sm:$0xf]
  %v281 = vunpack.c.l.b16 %v17
  %v282 = vunpack.c.h.b16 %v17
  %v283 = vunpack.c.l.b16 %v18
  %v284 = vunpack.c.h.b16 %v18
  %v285 = vunpack.c.l.b16 %v19
  %v286 = vunpack.c.h.b16 %v19
  %v287 = vunpack.c.l.b16 %v20
  %v288 = vunpack.c.h.b16 %v20
  %v289 = vunpack.c.l.b16 %v21
  %v290 = vunpack.c.h.b16 %v21
  %v291 = vunpack.c.l.b16 %v22
  %v292 = vunpack.c.h.b16 %v22
  %v293 = vunpack.c.l.b16 %v23
  %v294 = vunpack.c.l.b16 %v24
  %v295 = vunpack.c.h.b16 %v24
  %v296 = vunpack.c.l.b16 %v25
  %v297 = vunpack.c.h.b16 %v25
  %v298 = vunpack.c.l.b16 %v26
  %v299 = vunpack.c.h.b16 %v26
  %v300 = vunpack.c.l.b16 %v27
  %v301 = vunpack.c.h.b16 %v27
  %v302 = vunpack.c.l.b16 %v28
  %v303 = vunpack.c.h.b16 %v28
  %v304 = vunpack.c.l.b16 %v29
  %v305 = vunpack.c.h.b16 %v29
  %v306 = vunpack.c.l.b16 %v30
  %v307 = vunpack.c.l.b16 %v31
  %v308 = vunpack.c.h.b16 %v31
  %v309 = vunpack.c.l.b16 %v32
  %v310 = vunpack.c.h.b16 %v32
  %v311 = vunpack.c.l.b16 %v33
  %v312 = vunpack.c.h.b16 %v33
  %v313 = vunpack.c.l.b16 %v34
  %v314 = vunpack.c.h.b16 %v34
  %v315 = vunpack.c.l.b16 %v35
  %v316 = vunpack.c.h.b16 %v35
  %v317 = vunpack.c.l.b16 %v36
  %v318 = vunpack.c.h.b16 %v36
  %v319 = vunpack.c.l.b16 %v37
  %v320 = vunpack.c.l.b16 %v38
  %v321 = vunpack.c.h.b16 %v38
  %v322 = vunpack.c.l.b16 %v39
  %v323 = vunpack.c.h.b16 %v39
  %v324 = vunpack.c.l.b16 %v40
  %v325 = vunpack.c.h.b16 %v40
  %v326 = vunpack.c.l.b16 %v41
  %v327 = vunpack.c.h.b16 %v41
  %v328 = vunpack.c.l.b16 %v42
  %v329 = vunpack.c.h.b16 %v42
  %v330 = vunpack.c.l.b16 %v43
  %v331 = vunpack.c.h.b16 %v43
  %v332 = vunpack.c.l.b16 %v44
  %v333 = vpack.c.b16 %v294, %v281
  %v334 = vpack.c.b16 %v295, %v282
  %v335 = vpack.c.b16 %v296, %v283
  %v336 = vpack.c.b16 %v297, %v284
  %v337 = vpack.c.b16 %v298, %v285
  %v338 = vpack.c.b16 %v299, %v286
  %v339 = vpack.c.b16 %v300, %v287
  %v340 = vpack.c.b16 %v301, %v288
  %v341 = vpack.c.b16 %v302, %v289
  %v342 = vpack.c.b16 %v303, %v290
  %v343 = vpack.c.b16 %v304, %v291
  %v344 = vpack.c.b16 %v305, %v292
  %v345 = vpack.c.b16 %v306, %v293
  %v346 = vpack.c.b16 %v320, %v307
  %v347 = vpack.c.b16 %v321, %v308
  %v348 = vpack.c.b16 %v322, %v309
  %v349 = vpack.c.b16 %v323, %v310
  %v350 = vpack.c.b16 %v324, %v311
  %v351 = vpack.c.b16 %v325, %v312
  %v352 = vpack.c.b16 %v326, %v313
  %v353 = vpack.c.b16 %v327, %v314
  %v354 = vpack.c.b16 %v328, %v315
  %v355 = vpack.c.b16 %v329, %v316
  %v356 = vpack.c.b16 %v330, %v317
  %v357 = vpack.c.b16 %v331, %v318
  %v358 = vpack.c.b16 %v332, %v319
  %v593 = vunpack.c.l.b16 %v45
  %v594 = vunpack.c.l.b16 %v46
  %v595 = vunpack.c.l.b16 %v47
  %v596 = vunpack.c.l.b16 %v48
  %v597 = vunpack.c.l.b16 %v49
  %v598 = vunpack.c.l.b16 %v50
  %v599 = vunpack.c.l.b16 %v51
  %v600 = vunpack.c.l.b16 %v52
  %v601 = vunpack.c.l.b16 %v53
  %v602 = vunpack.c.l.b16 %v54
  %v603 = vunpack.c.l.b16 %v55
  %v604 = vunpack.c.l.b16 %v56
  %v605 = vunpack.c.l.b16 %v57
  %v606 = vunpack.c.l.b16 %v58
  %v607 = vunpack.c.l.b16 %v59
  %v608 = vunpack.c.l.b16 %v60
  %v609 = vunpack.c.l.b16 %v61
  %v610 = vunpack.c.l.b16 %v62
  %v611 = vunpack.c.l.b16 %v63
  %v612 = vunpack.c.l.b16 %v64
  %v613 = vunpack.c.l.b16 %v65
  %v614 = vunpack.c.l.b16 %v66
  %v615 = vunpack.c.l.b16 %v67
  %v616 = vunpack.c.l.b16 %v68
  %v617 = vunpack.c.l.b16 %v69
  %v618 = vunpack.c.l.b16 %v70
  %v619 = vunpack.c.l.b16 %v71
  %v620 = vunpack.c.l.b16 %v72
  %v621 = vunpack.c.l.b16 %v73
  %v622 = vunpack.c.l.b16 %v74
  %v623 = vunpack.c.l.b16 %v75
  %v624 = vunpack.c.l.b16 %v76
  %v625 = vunpack.c.l.b16 %v77
  %v626 = vunpack.c.l.b16 %v78
  %v627 = vunpack.c.l.b16 %v79
  %v628 = vunpack.c.l.b16 %v80
  %v629 = vunpack.c.l.b16 %v81
  %v630 = vunpack.c.l.b16 %v82
  %v631 = vunpack.c.l.b16 %v83
  %v632 = vunpack.c.l.b16 %v84
  %v633 = vunpack.c.l.b16 %v85
  %v634 = vunpack.c.l.b16 %v86
  %v635 = vunpack.c.l.b16 %v87
  %v636 = vunpack.c.l.b16 %v88
  %v637 = vunpack.c.l.b16 %v89
  %v638 = vunpack.c.l.b16 %v90
  %v639 = vunpack.c.l.b16 %v91
  %v640 = vunpack.c.l.b16 %v92
  %v641 = vunpack.c.l.b16 %v93
  %v642 = vunpack.c.l.b16 %v94
  %v643 = vunpack.c.l.b16 %v95
  %v644 = vunpack.c.l.b16 %v96
  %v645 = vunpack.c.l.b16 %v97
  %v646 = vunpack.c.l.b16 %v98
  %v647 = vunpack.c.l.b16 %v99
  %v648 = vunpack.c.l.b16 %v100
  %v649 = vunpack.c.l.b16 %v101
  %v650 = vunpack.c.l.b16 %v102
  %v651 = vunpack.c.l.b16 %v103
  %v652 = vunpack.c.l.b16 %v104
  %v653 = vunpack.c.l.b16 %v105
  %v654 = vunpack.c.l.b16 %v106
  %v655 = vunpack.c.l.b16 %v107
  %v656 = vunpack.c.l.b16 %v108
  %v657 = vunpack.c.l.b16 %v109
  %v658 = vunpack.c.l.b16 %v110
  %v659 = vunpack.c.l.b16 %v111
  %v660 = vunpack.c.l.b16 %v112
  %v661 = vunpack.c.l.b16 %v113
  %v662 = vunpack.c.l.b16 %v114
  %v663 = vunpack.c.l.b16 %v115
  %v664 = vunpack.c.l.b16 %v116
  %v665 = vunpack.c.l.b16 %v117
  %v666 = vunpack.c.l.b16 %v118
  %v667 = vunpack.c.l.b16 %v119
  %v668 = vunpack.c.l.b16 %v120
  %v669 = vunpack.c.l.b16 %v121
  %v670 = vunpack.c.l.b16 %v122
  %v671 = vunpack.c.l.b16 %v123
  %v672 = vunpack.c.l.b16 %v124
  %v673 = vunpack.c.l.b16 %v125
  %v674 = vunpack.c.l.b16 %v126
  %v675 = vunpack.c.l.b16 %v127
  %v676 = vunpack.c.l.b16 %v128
  %v677 = vunpack.c.l.b16 %v129
  %v678 = vunpack.c.l.b16 %v130
  %v679 = vunpack.c.l.b16 %v131
  %v680 = vunpack.c.l.b16 %v132
  %v681 = vunpack.c.l.b16 %v133
  %v682 = vunpack.c.l.b16 %v134
  %v683 = vunpack.c.l.b16 %v135
  %v684 = vunpack.c.l.b16 %v136
  %v685 = vunpack.c.l.b16 %v137
  %v686 = vunpack.c.l.b16 %v138
  %v687 = vunpack.c.l.b16 %v139
  %v688 = vunpack.c.l.b16 %v140
  %v689 = vunpack.c.l.b16 %v141
  %v690 = vunpack.c.l.b16 %v142
  %v691 = vunpack.c.l.b16 %v143
  %v692 = vunpack.c.l.b16 %v144
  %v693 = vunpack.c.l.b16 %v145
  %v694 = vunpack.c.l.b16 %v146
  %v695 = vunpack.c.l.b16 %v147
  %v696 = vunpack.c.l.b16 %v148
  %v697 = vunpack.c.l.b16 %v149
  %v698 = vunpack.c.l.b16 %v150
  %v699 = vunpack.c.l.b16 %v151
  %v700 = vunpack.c.l.b16 %v152
  %v701 = vunpack.c.l.b16 %v153
  %v702 = vunpack.c.l.b16 %v154
  %v703 = vunpack.c.l.b16 %v155
  %v704 = vunpack.c.l.b16 %v156
  %v705 = vunpack.c.l.b16 %v157
  %v706 = vunpack.c.l.b16 %v158
  %v707 = vunpack.c.l.b16 %v159
  %v708 = vunpack.c.l.b16 %v160
  %v709 = vunpack.c.l.b16 %v161
  %v710 = vunpack.c.l.b16 %v162
  %v711 = vunpack.c.l.b16 %v163
  %v712 = vunpack.c.l.b16 %v164
  %v713 = vunpack.c.l.b16 %v165
  %v714 = vunpack.c.l.b16 %v166
  %v715 = vunpack.c.l.b16 %v167
  %v716 = vunpack.c.l.b16 %v168
  %v717 = vunpack.c.l.b16 %v169
  %v718 = vunpack.c.l.b16 %v170
  %v719 = vunpack.c.l.b16 %v171
  %v720 = vunpack.c.l.b16 %v172
  %v721 = vunpack.c.l.b16 %v173
  %v722 = vunpack.c.l.b16 %v174
  %v723 = vunpack.c.l.b16 %v175
  %v724 = vunpack.c.l.b16 %v176
  %v725 = vunpack.c.l.b16 %v177
  %v726 = vunpack.c.l.b16 %v178
  %v727 = vunpack.c.l.b16 %v179
  %v728 = vunpack.c.l.b16 %v180
  %v729 = vunpack.c.l.b16 %v181
  %v730 = vunpack.c.l.b16 %v182
  %v731 = vunpack.c.l.b16 %v183
  %v732 = vunpack.c.l.b16 %v184
  %v733 = vunpack.c.l.b16 %v185
  %v734 = vunpack.c.l.b16 %v186
  %v735 = vunpack.c.l.b16 %v187
  %v736 = vunpack.c.l.b16 %v188
  %v737 = vunpack.c.l.b16 %v189
  %v738 = vunpack.c.l.b16 %v190
  %v739 = vunpack.c.l.b16 %v191
  %v740 = vunpack.c.l.b16 %v192
  %v741 = vunpack.c.l.b16 %v193
  %v742 = vunpack.c.l.b16 %v194
  %v743 = vunpack.c.l.b16 %v195
  %v744 = vunpack.c.l.b16 %v196
  %v745 = vunpack.c.l.b16 %v197
  %v746 = vunpack.c.l.b16 %v198
  %v747 = vunpack.c.l.b16 %v199
  %v748 = vunpack.c.l.b16 %v200
  %v749 = vunpack.c.l.b16 %v201
  %v750 = vunpack.c.l.b16 %v202
  %v751 = vunpack.c.l.b16 %v203
  %v752 = vunpack.c.l.b16 %v204
  %v753 = vunpack.c.l.b16 %v205
  %v754 = vunpack.c.l.b16 %v206
  %v755 = vunpack.c.l.b16 %v207
  %v756 = vunpack.c.l.b16 %v208
  %v757 = vunpack.c.l.b16 %v209
  %v758 = vunpack.c.l.b16 %v210
  %v759 = vunpack.c.l.b16 %v211
  %v760 = vunpack.c.l.b16 %v212
  %v761 = vunpack.c.l.b16 %v213
  %v762 = vunpack.c.l.b16 %v214
  %v763 = vunpack.c.l.b16 %v215
  %v764 = vunpack.c.l.b16 %v216
  %v765 = vunpack.c.l.b16 %v217
  %v766 = vunpack.c.l.b16 %v218
  %v767 = vunpack.c.l.b16 %v219
  %v768 = vunpack.c.l.b16 %v220
  %v769 = vunpack.c.l.b16 %v221
  %v770 = vunpack.c.l.b16 %v222
  %v771 = vunpack.c.l.b16 %v223
  %v772 = vunpack.c.l.b16 %v224
  %v773 = vunpack.c.l.b16 %v225
  %v774 = vunpack.c.l.b16 %v226
  %v775 = vunpack.c.l.b16 %v227
  %v776 = vunpack.c.l.b16 %v228
  %v777 = vunpack.c.l.b16 %v229
  %v778 = vunpack.c.l.b16 %v230
  %v779 = vunpack.c.l.b16 %v231
  %v780 = vunpack.c.l.b16 %v232
  %v781 = vunpack.c.l.b16 %v233
  %v782 = vunpack.c.l.b16 %v234
  %v783 = vunpack.c.l.b16 %v235
  %v784 = vunpack.c.l.b16 %v236
  %v785 = vunpack.c.l.b16 %v237
  %v786 = vunpack.c.l.b16 %v238
  %v787 = vunpack.c.l.b16 %v239
  %v788 = vunpack.c.l.b16 %v240
  %v789 = vunpack.c.l.b16 %v241
  %v790 = vunpack.c.l.b16 %v242
  %v791 = vunpack.c.l.b16 %v243
  %v792 = vunpack.c.l.b16 %v244
  %v793 = vunpack.c.l.b16 %v245
  %v794 = vunpack.c.l.b16 %v246
  %v795 = vunpack.c.l.b16 %v247
  %v796 = vunpack.c.l.b16 %v248
  %v797 = vunpack.c.l.b16 %v249
  %v798 = vunpack.c.l.b16 %v250
  %v799 = vunpack.c.l.b16 %v251
  %v800 = vunpack.c.l.b16 %v252
  %v801 = vpack.c.b16 %v594, %v593
  %v802 = vpack.c.b16 %v596, %v595
  %v803 = vpack.c.b16 %v598, %v597
  %v804 = vpack.c.b16 %v600, %v599
  %v805 = vpack.c.b16 %v602, %v601
  %v806 = vpack.c.b16 %v604, %v603
  %v807 = vpack.c.b16 %v606, %v605
  %v808 = vpack.c.b16 %v608, %v607
  %v809 = vpack.c.b16 %v610, %v609
  %v810 = vpack.c.b16 %v612, %v611
  %v811 = vpack.c.b16 %v614, %v613
  %v812 = vpack.c.b16 %v616, %v615
  %v813 = vpack.c.b16 %v618, %v617
  %v814 = vpack.c.b16 %v620, %v619
  %v815 = vpack.c.b16 %v622, %v621
  %v816 = vpack.c.b16 %v624, %v623
  %v817 = vpack.c.b16 %v626, %v625
  %v818 = vpack.c.b16 %v628, %v627
  %v819 = vpack.c.b16 %v630, %v629
  %v820 = vpack.c.b16 %v632, %v631
  %v821 = vpack.c.b16 %v634, %v633
  %v822 = vpack.c.b16 %v636, %v635
  %v823 = vpack.c.b16 %v638, %v637
  %v824 = vpack.c.b16 %v640, %v639
  %v825 = vpack.c.b16 %v642, %v641
  %v826 = vpack.c.b16 %v644, %v643
  %v827 = vpack.c.b16 %v646, %v645
  %v828 = vpack.c.b16 %v648, %v647
  %v829 = vpack.c.b16 %v650, %v649
  %v830 = vpack.c.b16 %v652, %v651
  %v831 = vpack.c.b16 %v654, %v653
  %v832 = vpack.c.b16 %v656, %v655
  %v833 = vpack.c.b16 %v658, %v657
  %v834 = vpack.c.b16 %v660, %v659
  %v835 = vpack.c.b16 %v662, %v661
  %v836 = vpack.c.b16 %v664, %v663
  %v837 = vpack.c.b16 %v666, %v665
  %v838 = vpack.c.b16 %v668, %v667
  %v839 = vpack.c.b16 %v670, %v669
  %v840 = vpack.c.b16 %v672, %v671
  %v841 = vpack.c.b16 %v674, %v673
  %v842 = vpack.c.b16 %v676, %v675
  %v843 = vpack.c.b16 %v678, %v677
  %v844 = vpack.c.b16 %v680, %v679
  %v845 = vpack.c.b16 %v682, %v681
  %v846 = vpack.c.b16 %v684, %v683
  %v847 = vpack.c.b16 %v686, %v685
  %v848 = vpack.c.b16 %v688, %v687
  %v849 = vpack.c.b16 %v690, %v689
  %v850 = vpack.c.b16 %v692, %v691
  %v851 = vpack.c.b16 %v694, %v693
  %v852 = vpack.c.b16 %v696, %v695
  %v853 = vpack.c.b16 %v698, %v697
  %v854 = vpack.c.b16 %v700, %v699
  %v855 = vpack.c.b16 %v702, %v701
  %v856 = vpack.c.b16 %v704, %v703
  %v857 = vpack.c.b16 %v706, %v705
  %v858 = vpack.c.b16 %v708, %v707
  %v859 = vpack.c.b16 %v710, %v709
  %v860 = vpack.c.b16 %v712, %v711
  %v861 = vpack.c.b16 %v714, %v713
  %v862 = vpack.c.b16 %v716, %v715
  %v863 = vpack.c.b16 %v718, %v717
  %v864 = vpack.c.b16 %v720, %v719
  %v865 = vpack.c.b16 %v722, %v721
  %v866 = vpack.c.b16 %v724, %v723
  %v867 = vpack.c.b16 %v726, %v725
  %v868 = vpack.c.b16 %v728, %v727
  %v869 = vpack.c.b16 %v730, %v729
  %v870 = vpack.c.b16 %v732, %v731
  %v871 = vpack.c.b16 %v734, %v733
  %v872 = vpack.c.b16 %v736, %v735
  %v873 = vpack.c.b16 %v738, %v737
  %v874 = vpack.c.b16 %v740, %v739
  %v875 = vpack.c.b16 %v742, %v741
  %v876 = vpack.c.b16 %v744, %v743
  %v877 = vpack.c.b16 %v746, %v745
  %v878 = vpack.c.b16 %v748, %v747
  %v879 = vpack.c.b16 %v750, %v749
  %v880 = vpack.c.b16 %v752, %v751
  %v881 = vpack.c.b16 %v754, %v753
  %v882 = vpack.c.b16 %v756, %v755
  %v883 = vpack.c.b16 %v758, %v757
  %v884 = vpack.c.b16 %v760, %v759
  %v885 = vpack.c.b16 %v762, %v761
  %v886 = vpack.c.b16 %v764, %v763
  %v887 = vpack.c.b16 %v766, %v765
  %v888 = vpack.c.b16 %v768, %v767
  %v889 = vpack.c.b16 %v770, %v769
  %v890 = vpack.c.b16 %v772, %v771
  %v891 = vpack.c.b16 %v774, %v773
  %v892 = vpack.c.b16 %v776, %v775
  %v893 = vpack.c.b16 %v778, %v777
  %v894 = vpack.c.b16 %v780, %v779
  %v895 = vpack.c.b16 %v782, %v781
  %v896 = vpack.c.b16 %v784, %v783
  %v897 = vpack.c.b16 %v786, %v785
  %v898 = vpack.c.b16 %v788, %v787
  %v899 = vpack.c.b16 %v790, %v789
  %v900 = vpack.c.b16 %v792, %v791
  %v901 = vpack.c.b16 %v794, %v793
  %v902 = vpack.c.b16 %v796, %v795
  %v903 = vpack.c.b16 %v798, %v797
  %v904 = vpack.c.b16 %v800, %v799
  %1009 = vmatpush.bf16.msra.mxu0 %v808
  %1010 = vmatpush.bf16.msra.mxu0 %v807
  %1011 = vmatpush.bf16.msra.mxu0 %v806
  %1012 = vmatpush.bf16.msra.mxu0 %v805
  %1013 = vmatpush.bf16.msra.mxu0 %v804
  %1014 = vmatpush.bf16.msra.mxu0 %v803
  %1015 = vmatpush.bf16.msra.mxu0 %v802
  %1016 = vmatpush.bf16.msra.mxu0 %v801
  %1017 = vmatmul.bf16.gmra.mxu0 %v333
  %v1018 = vpop.f32.mrf.mxu0
  %v1019 = vadd.f32 0.0, %v1018
  %v1020 = vpop.f32.mrf.mxu0
  %v1021 = vadd.f32 0.0, %v1020
  %1022 = vmatmul.bf16.gmra.mxu0 %v346
  %v1023 = vpop.f32.mrf.mxu0
  %v1024 = vadd.f32 0.0, %v1023
  %v1025 = vpop.f32.mrf.mxu0
  %v1026 = vadd.f32 0.0, %v1025
  %1027 = vdwg.mxu0
  %1028 = vmatpush.bf16.msra.mxu0 %v816
  %1029 = vmatpush.bf16.msra.mxu0 %v815
  %1030 = vmatpush.bf16.msra.mxu0 %v814
  %1031 = vmatpush.bf16.msra.mxu0 %v813
  %1032 = vmatpush.bf16.msra.mxu0 %v812
  %1033 = vmatpush.bf16.msra.mxu0 %v811
  %1034 = vmatpush.bf16.msra.mxu0 %v810
  %1035 = vmatpush.bf16.msra.mxu0 %v809
  %1036 = vmatmul.bf16.gmra.mxu0 %v334
  %v1037 = vpop.f32.mrf.mxu0
  %v1038 = vadd.f32 %v1019, %v1037
  %v1039 = vpop.f32.mrf.mxu0
  %v1040 = vadd.f32 %v1021, %v1039
  %1041 = vmatmul.bf16.gmra.mxu0 %v347
  %v1042 = vpop.f32.mrf.mxu0
  %v1043 = vadd.f32 %v1024, %v1042
  %v1044 = vpop.f32.mrf.mxu0
  %v1045 = vadd.f32 %v1026, %v1044
  %1046 = vdwg.mxu0
  %1047 = vmatpush.bf16.msra.mxu0 %v824
  %1048 = vmatpush.bf16.msra.mxu0 %v823
  %1049 = vmatpush.bf16.msra.mxu0 %v822
  %1050 = vmatpush.bf16.msra.mxu0 %v821
  %1051 = vmatpush.bf16.msra.mxu0 %v820
  %1052 = vmatpush.bf16.msra.mxu0 %v819
  %1053 = vmatpush.bf16.msra.mxu0 %v818
  %1054 = vmatpush.bf16.msra.mxu0 %v817
  %1055 = vmatmul.bf16.gmra.mxu0 %v335
  %v1056 = vpop.f32.mrf.mxu0
  %v1057 = vadd.f32 %v1038, %v1056
  %v1058 = vpop.f32.mrf.mxu0
  %v1059 = vadd.f32 %v1040, %v1058
  %1060 = vmatmul.bf16.gmra.mxu0 %v348
  %v1061 = vpop.f32.mrf.mxu0
  %v1062 = vadd.f32 %v1043, %v1061
  %v1063 = vpop.f32.mrf.mxu0
  %v1064 = vadd.f32 %v1045, %v1063
  %1065 = vdwg.mxu0
  %1066 = vmatpush.bf16.msra.mxu0 %v832
  %1067 = vmatpush.bf16.msra.mxu0 %v831
  %1068 = vmatpush.bf16.msra.mxu0 %v830
  %1069 = vmatpush.bf16.msra.mxu0 %v829
  %1070 = vmatpush.bf16.msra.mxu0 %v828
  %1071 = vmatpush.bf16.msra.mxu0 %v827
  %1072 = vmatpush.bf16.msra.mxu0 %v826
  %1073 = vmatpush.bf16.msra.mxu0 %v825
  %1074 = vmatmul.bf16.gmra.mxu0 %v336
  %v1075 = vpop.f32.mrf.mxu0
  %v1076 = vadd.f32 %v1057, %v1075
  %v1077 = vpop.f32.mrf.mxu0
  %v1078 = vadd.f32 %v1059, %v1077
  %1079 = vmatmul.bf16.gmra.mxu0 %v349
  %v1080 = vpop.f32.mrf.mxu0
  %v1081 = vadd.f32 %v1062, %v1080
  %v1082 = vpop.f32.mrf.mxu0
  %v1083 = vadd.f32 %v1064, %v1082
  %1084 = vdwg.mxu0
  %1085 = vmatpush.bf16.msra.mxu0 %v840
  %1086 = vmatpush.bf16.msra.mxu0 %v839
  %1087 = vmatpush.bf16.msra.mxu0 %v838
  %1088 = vmatpush.bf16.msra.mxu0 %v837
  %1089 = vmatpush.bf16.msra.mxu0 %v836
  %1090 = vmatpush.bf16.msra.mxu0 %v835
  %1091 = vmatpush.bf16.msra.mxu0 %v834
  %1092 = vmatpush.bf16.msra.mxu0 %v833
  %1093 = vmatmul.bf16.gmra.mxu0 %v337
  %v1094 = vpop.f32.mrf.mxu0
  %v1095 = vadd.f32 %v1076, %v1094
  %v1096 = vpop.f32.mrf.mxu0
  %v1097 = vadd.f32 %v1078, %v1096
  %1098 = vmatmul.bf16.gmra.mxu0 %v350
  %v1099 = vpop.f32.mrf.mxu0
  %v1100 = vadd.f32 %v1081, %v1099
  %v1101 = vpop.f32.mrf.mxu0
  %v1102 = vadd.f32 %v1083, %v1101
  %1103 = vdwg.mxu0
  %1104 = vmatpush.bf16.msra.mxu0 %v848
  %1105 = vmatpush.bf16.msra.mxu0 %v847
  %1106 = vmatpush.bf16.msra.mxu0 %v846
  %1107 = vmatpush.bf16.msra.mxu0 %v845
  %1108 = vmatpush.bf16.msra.mxu0 %v844
  %1109 = vmatpush.bf16.msra.mxu0 %v843
  %1110 = vmatpush.bf16.msra.mxu0 %v842
  %1111 = vmatpush.bf16.msra.mxu0 %v841
  %1112 = vmatmul.bf16.gmra.mxu0 %v338
  %v1113 = vpop.f32.mrf.mxu0
  %v1114 = vadd.f32 %v1095, %v1113
  %v1115 = vpop.f32.mrf.mxu0
  %v1116 = vadd.f32 %v1097, %v1115
  %1117 = vmatmul.bf16.gmra.mxu0 %v351
  %v1118 = vpop.f32.mrf.mxu0
  %v1119 = vadd.f32 %v1100, %v1118
  %v1120 = vpop.f32.mrf.mxu0
  %v1121 = vadd.f32 %v1102, %v1120
  %1122 = vdwg.mxu0
  %1123 = vmatpush.bf16.msra.mxu0 %v856
  %1124 = vmatpush.bf16.msra.mxu0 %v855
  %1125 = vmatpush.bf16.msra.mxu0 %v854
  %1126 = vmatpush.bf16.msra.mxu0 %v853
  %1127 = vmatpush.bf16.msra.mxu0 %v852
  %1128 = vmatpush.bf16.msra.mxu0 %v851
  %1129 = vmatpush.bf16.msra.mxu0 %v850
  %1130 = vmatpush.bf16.msra.mxu0 %v849
  %1131 = vmatmul.bf16.gmra.mxu0 %v339
  %v1132 = vpop.f32.mrf.mxu0
  %v1133 = vadd.f32 %v1114, %v1132
  %v1134 = vpop.f32.mrf.mxu0
  %v1135 = vadd.f32 %v1116, %v1134
  %1136 = vmatmul.bf16.gmra.mxu0 %v352
  %v1137 = vpop.f32.mrf.mxu0
  %v1138 = vadd.f32 %v1119, %v1137
  %v1139 = vpop.f32.mrf.mxu0
  %v1140 = vadd.f32 %v1121, %v1139
  %1141 = vdwg.mxu0
  %1142 = vmatpush.bf16.msra.mxu0 %v864
  %1143 = vmatpush.bf16.msra.mxu0 %v863
  %1144 = vmatpush.bf16.msra.mxu0 %v862
  %1145 = vmatpush.bf16.msra.mxu0 %v861
  %1146 = vmatpush.bf16.msra.mxu0 %v860
  %1147 = vmatpush.bf16.msra.mxu0 %v859
  %1148 = vmatpush.bf16.msra.mxu0 %v858
  %1149 = vmatpush.bf16.msra.mxu0 %v857
  %1150 = vmatmul.bf16.gmra.mxu0 %v340
  %v1151 = vpop.f32.mrf.mxu0
  %v1152 = vadd.f32 %v1133, %v1151
  %v1153 = vpop.f32.mrf.mxu0
  %v1154 = vadd.f32 %v1135, %v1153
  %1155 = vmatmul.bf16.gmra.mxu0 %v353
  %v1156 = vpop.f32.mrf.mxu0
  %v1157 = vadd.f32 %v1138, %v1156
  %v1158 = vpop.f32.mrf.mxu0
  %v1159 = vadd.f32 %v1140, %v1158
  %1160 = vdwg.mxu0
  %1161 = vmatpush.bf16.msra.mxu0 %v872
  %1162 = vmatpush.bf16.msra.mxu0 %v871
  %1163 = vmatpush.bf16.msra.mxu0 %v870
  %1164 = vmatpush.bf16.msra.mxu0 %v869
  %1165 = vmatpush.bf16.msra.mxu0 %v868
  %1166 = vmatpush.bf16.msra.mxu0 %v867
  %1167 = vmatpush.bf16.msra.mxu0 %v866
  %1168 = vmatpush.bf16.msra.mxu0 %v865
  %1169 = vmatmul.bf16.gmra.mxu0 %v341
  %v1170 = vpop.f32.mrf.mxu0
  %v1171 = vadd.f32 %v1152, %v1170
  %v1172 = vpop.f32.mrf.mxu0
  %v1173 = vadd.f32 %v1154, %v1172
  %1174 = vmatmul.bf16.gmra.mxu0 %v354
  %v1175 = vpop.f32.mrf.mxu0
  %v1176 = vadd.f32 %v1157, %v1175
  %v1177 = vpop.f32.mrf.mxu0
  %v1178 = vadd.f32 %v1159, %v1177
  %1179 = vdwg.mxu0
  %1180 = vmatpush.bf16.msra.mxu0 %v880
  %1181 = vmatpush.bf16.msra.mxu0 %v879
  %1182 = vmatpush.bf16.msra.mxu0 %v878
  %1183 = vmatpush.bf16.msra.mxu0 %v877
  %1184 = vmatpush.bf16.msra.mxu0 %v876
  %1185 = vmatpush.bf16.msra.mxu0 %v875
  %1186 = vmatpush.bf16.msra.mxu0 %v874
  %1187 = vmatpush.bf16.msra.mxu0 %v873
  %1188 = vmatmul.bf16.gmra.mxu0 %v342
  %v1189 = vpop.f32.mrf.mxu0
  %v1190 = vadd.f32 %v1171, %v1189
  %v1191 = vpop.f32.mrf.mxu0
  %v1192 = vadd.f32 %v1173, %v1191
  %1193 = vmatmul.bf16.gmra.mxu0 %v355
  %v1194 = vpop.f32.mrf.mxu0
  %v1195 = vadd.f32 %v1176, %v1194
  %v1196 = vpop.f32.mrf.mxu0
  %v1197 = vadd.f32 %v1178, %v1196
  %1198 = vdwg.mxu0
  %1199 = vmatpush.bf16.msra.mxu0 %v888
  %1200 = vmatpush.bf16.msra.mxu0 %v887
  %1201 = vmatpush.bf16.msra.mxu0 %v886
  %1202 = vmatpush.bf16.msra.mxu0 %v885
  %1203 = vmatpush.bf16.msra.mxu0 %v884
  %1204 = vmatpush.bf16.msra.mxu0 %v883
  %1205 = vmatpush.bf16.msra.mxu0 %v882
  %1206 = vmatpush.bf16.msra.mxu0 %v881
  %1207 = vmatmul.bf16.gmra.mxu0 %v343
  %v1208 = vpop.f32.mrf.mxu0
  %v1209 = vadd.f32 %v1190, %v1208
  %v1210 = vpop.f32.mrf.mxu0
  %v1211 = vadd.f32 %v1192, %v1210
  %1212 = vmatmul.bf16.gmra.mxu0 %v356
  %v1213 = vpop.f32.mrf.mxu0
  %v1214 = vadd.f32 %v1195, %v1213
  %v1215 = vpop.f32.mrf.mxu0
  %v1216 = vadd.f32 %v1197, %v1215
  %1217 = vdwg.mxu0
  %1218 = vmatpush.bf16.msra.mxu0 %v896
  %1219 = vmatpush.bf16.msra.mxu0 %v895
  %1220 = vmatpush.bf16.msra.mxu0 %v894
  %1221 = vmatpush.bf16.msra.mxu0 %v893
  %1222 = vmatpush.bf16.msra.mxu0 %v892
  %1223 = vmatpush.bf16.msra.mxu0 %v891
  %1224 = vmatpush.bf16.msra.mxu0 %v890
  %1225 = vmatpush.bf16.msra.mxu0 %v889
  %1226 = vmatmul.bf16.gmra.mxu0 %v344
  %v1227 = vpop.f32.mrf.mxu0
  %v1228 = vadd.f32 %v1209, %v1227
  %v1229 = vpop.f32.mrf.mxu0
  %v1230 = vadd.f32 %v1211, %v1229
  %1231 = vmatmul.bf16.gmra.mxu0 %v357
  %v1232 = vpop.f32.mrf.mxu0
  %v1233 = vadd.f32 %v1214, %v1232
  %v1234 = vpop.f32.mrf.mxu0
  %v1235 = vadd.f32 %v1216, %v1234
  %1236 = vdwg.mxu0
  %1237 = vmatpush.bf16.msra.mxu0 %v904
  %1238 = vmatpush.bf16.msra.mxu0 %v903
  %1239 = vmatpush.bf16.msra.mxu0 %v902
  %1240 = vmatpush.bf16.msra.mxu0 %v901
  %1241 = vmatpush.bf16.msra.mxu0 %v900
  %1242 = vmatpush.bf16.msra.mxu0 %v899
  %1243 = vmatpush.bf16.msra.mxu0 %v898
  %1244 = vmatpush.bf16.msra.mxu0 %v897
  %1245 = vmatmul.bf16.gmra.mxu0 %v345
  %v1246 = vpop.f32.mrf.mxu0
  %v1247 = vadd.f32 %v1228, %v1246
  %v1248 = vpop.f32.mrf.mxu0
  %v1249 = vadd.f32 %v1230, %v1248
  %1250 = vmatmul.bf16.gmra.mxu0 %v358
  %v1251 = vpop.f32.mrf.mxu0
  %v1252 = vadd.f32 %v1233, %v1251
  %v1253 = vpop.f32.mrf.mxu0
  %v1254 = vadd.f32 %v1235, %v1253
  %1255 = vdwg.mxu0
  %v1256 = vld [vmem:[%s2] sm:$0x1]
  %v1258 = vperm.slane %v1256, 0
  %v1260 = vmul.f32 %v1247, %v1258
  %v1261 = vmul.f32 %v1249, %v1258
  %v1262 = vmul.f32 %v1252, %v1258
  %v1263 = vmul.f32 %v1254, %v1258
  %v1264 = vld [vmem:[%s3] sm:$0x1]
  %v1266 = vperm.slane %v1264, 0
  %v1268 = vadd.f32 %v1260, %v1266
  %v1269 = vadd.f32 %v1261, %v1266
  %v1270 = vadd.f32 %v1262, %v1266
  %v1271 = vadd.f32 %v1263, %v1266
  %v1272 = vmul.f32 %v1268, 0.5
  %v1273 = vmul.f32 %v1269, 0.5
  %v1274 = vmul.f32 %v1270, 0.5
  %v1275 = vmul.f32 %v1271, 0.5
  %v1276 = vmul.f32 %v1268, 0.70710677
  %v1277 = vmul.f32 %v1269, 0.70710677
  %v1278 = vmul.f32 %v1270, 0.70710677
  %v1279 = vmul.f32 %v1271, 0.70710677
  %v1280 = vmul.f32 %v1276, %v1276
  %v1281 = vmin.f32 16.0, %v1280
  %v1282 = vmul.f32 %v1281, 2.1237322e-06
  %v1283 = vadd.f32 %v1282, 0.00028619796
  %v1284 = vmul.f32 %v1281, %v1283
  %v1285 = vadd.f32 %v1284, 0.0036580483
  %v1286 = vmul.f32 %v1281, %v1285
  %v1287 = vadd.f32 %v1286, 0.05243302
  %v1288 = vmul.f32 %v1281, %v1287
  %v1289 = vadd.f32 %v1288, 0.18741608
  %v1290 = vmul.f32 %v1281, %v1289
  %v1291 = vadd.f32 %v1290, 1.1283791
  %v1292 = vmul.f32 %v1276, %v1291
  %v1293 = vmul.f32 %v1281, 3.8918573e-05
  %v1294 = vadd.f32 %v1293, 0.001143296
  %v1295 = vmul.f32 %v1281, %v1294
  %v1296 = vadd.f32 %v1295, 0.014752088
  %v1297 = vmul.f32 %v1281, %v1296
  %v1298 = vadd.f32 %v1297, 0.112945676
  %v1299 = vmul.f32 %v1281, %v1298
  %v1300 = vadd.f32 %v1299, 0.4994258
  %v1301 = vmul.f32 %v1281, %v1300
  %v1302 = vadd.f32 %v1301, 1.0
  %v1303 = vrcp.pop %v1302
  %v1304 = vmul.f32 %v1302, %v1303
  %v1305 = vsub.f32 1.0, %v1304
  %v1306 = vmul.f32 %v1303, %v1305
  %v1307 = vadd.f32 %v1303, %v1306
  %vm1308 = vweird.f32 %v1302
  %vm1309 = vweird.f32 %v1303
  %vm1310 = vmor %vm1308, %vm1309
  %v1311 = vsel %vm1310, %v1303, %v1307
  %v1312 = vand.u32 2147483647, %v1302
  %vm1313 = vcmp.eq.f32.partialorder %v1312, 8.507059e+37
  %v1314 = vand.u32 %v1302, 2147483648
  %v1315 = vor.u32 1.1754944e-38, %v1314
  %v1316 = vsel %vm1313, %v1315, %v1311
  %v1317 = vmul.f32 %v1292, %v1316
  %v1318 = vmin.f32 %v1317, 1.0
  %v1319 = vmax.f32 %v1318, -1.0
  %v1320 = vmul.f32 %v1277, %v1277
  %v1321 = vmin.f32 16.0, %v1320
  %v1322 = vmul.f32 %v1321, 2.1237322e-06
  %v1323 = vadd.f32 %v1322, 0.00028619796
  %v1324 = vmul.f32 %v1321, %v1323
  %v1325 = vadd.f32 %v1324, 0.0036580483
  %v1326 = vmul.f32 %v1321, %v1325
  %v1327 = vadd.f32 %v1326, 0.05243302
  %v1328 = vmul.f32 %v1321, %v1327
  %v1329 = vadd.f32 %v1328, 0.18741608
  %v1330 = vmul.f32 %v1321, %v1329
  %v1331 = vadd.f32 %v1330, 1.1283791
  %v1332 = vmul.f32 %v1277, %v1331
  %v1333 = vmul.f32 %v1321, 3.8918573e-05
  %v1334 = vadd.f32 %v1333, 0.001143296
  %v1335 = vmul.f32 %v1321, %v1334
  %v1336 = vadd.f32 %v1335, 0.014752088
  %v1337 = vmul.f32 %v1321, %v1336
  %v1338 = vadd.f32 %v1337, 0.112945676
  %v1339 = vmul.f32 %v1321, %v1338
  %v1340 = vadd.f32 %v1339, 0.4994258
  %v1341 = vmul.f32 %v1321, %v1340
  %v1342 = vadd.f32 %v1341, 1.0
  %v1343 = vrcp.pop %v1342
  %v1344 = vmul.f32 %v1342, %v1343
  %v1345 = vsub.f32 1.0, %v1344
  %v1346 = vmul.f32 %v1343, %v1345
  %v1347 = vadd.f32 %v1343, %v1346
  %vm1348 = vweird.f32 %v1342
  %vm1349 = vweird.f32 %v1343
  %vm1350 = vmor %vm1348, %vm1349
  %v1351 = vsel %vm1350, %v1343, %v1347
  %v1352 = vand.u32 2147483647, %v1342
  %vm1353 = vcmp.eq.f32.partialorder %v1352, 8.507059e+37
  %v1354 = vand.u32 %v1342, 2147483648
  %v1355 = vor.u32 1.1754944e-38, %v1354
  %v1356 = vsel %vm1353, %v1355, %v1351
  %v1357 = vmul.f32 %v1332, %v1356
  %v1358 = vmin.f32 %v1357, 1.0
  %v1359 = vmax.f32 %v1358, -1.0
  %v1360 = vmul.f32 %v1278, %v1278
  %v1361 = vmin.f32 16.0, %v1360
  %v1362 = vmul.f32 %v1361, 2.1237322e-06
  %v1363 = vadd.f32 %v1362, 0.00028619796
  %v1364 = vmul.f32 %v1361, %v1363
  %v1365 = vadd.f32 %v1364, 0.0036580483
  %v1366 = vmul.f32 %v1361, %v1365
  %v1367 = vadd.f32 %v1366, 0.05243302
  %v1368 = vmul.f32 %v1361, %v1367
  %v1369 = vadd.f32 %v1368, 0.18741608
  %v1370 = vmul.f32 %v1361, %v1369
  %v1371 = vadd.f32 %v1370, 1.1283791
  %v1372 = vmul.f32 %v1278, %v1371
  %v1373 = vmul.f32 %v1361, 3.8918573e-05
  %v1374 = vadd.f32 %v1373, 0.001143296
  %v1375 = vmul.f32 %v1361, %v1374
  %v1376 = vadd.f32 %v1375, 0.014752088
  %v1377 = vmul.f32 %v1361, %v1376
  %v1378 = vadd.f32 %v1377, 0.112945676
  %v1379 = vmul.f32 %v1361, %v1378
  %v1380 = vadd.f32 %v1379, 0.4994258
  %v1381 = vmul.f32 %v1361, %v1380
  %v1382 = vadd.f32 %v1381, 1.0
  %v1383 = vrcp.pop %v1382
  %v1384 = vmul.f32 %v1382, %v1383
  %v1385 = vsub.f32 1.0, %v1384
  %v1386 = vmul.f32 %v1383, %v1385
  %v1387 = vadd.f32 %v1383, %v1386
  %vm1388 = vweird.f32 %v1382
  %vm1389 = vweird.f32 %v1383
  %vm1390 = vmor %vm1388, %vm1389
  %v1391 = vsel %vm1390, %v1383, %v1387
  %v1392 = vand.u32 2147483647, %v1382
  %vm1393 = vcmp.eq.f32.partialorder %v1392, 8.507059e+37
  %v1394 = vand.u32 %v1382, 2147483648
  %v1395 = vor.u32 1.1754944e-38, %v1394
  %v1396 = vsel %vm1393, %v1395, %v1391
  %v1397 = vmul.f32 %v1372, %v1396
  %v1398 = vmin.f32 %v1397, 1.0
  %v1399 = vmax.f32 %v1398, -1.0
  %v1400 = vmul.f32 %v1279, %v1279
  %v1401 = vmin.f32 16.0, %v1400
  %v1402 = vmul.f32 %v1401, 2.1237322e-06
  %v1403 = vadd.f32 %v1402, 0.00028619796
  %v1404 = vmul.f32 %v1401, %v1403
  %v1405 = vadd.f32 %v1404, 0.0036580483
  %v1406 = vmul.f32 %v1401, %v1405
  %v1407 = vadd.f32 %v1406, 0.05243302
  %v1408 = vmul.f32 %v1401, %v1407
  %v1409 = vadd.f32 %v1408, 0.18741608
  %v1410 = vmul.f32 %v1401, %v1409
  %v1411 = vadd.f32 %v1410, 1.1283791
  %v1412 = vmul.f32 %v1279, %v1411
  %v1413 = vmul.f32 %v1401, 3.8918573e-05
  %v1414 = vadd.f32 %v1413, 0.001143296
  %v1415 = vmul.f32 %v1401, %v1414
  %v1416 = vadd.f32 %v1415, 0.014752088
  %v1417 = vmul.f32 %v1401, %v1416
  %v1418 = vadd.f32 %v1417, 0.112945676
  %v1419 = vmul.f32 %v1401, %v1418
  %v1420 = vadd.f32 %v1419, 0.4994258
  %v1421 = vmul.f32 %v1401, %v1420
  %v1422 = vadd.f32 %v1421, 1.0
  %v1423 = vrcp.pop %v1422
  %v1424 = vmul.f32 %v1422, %v1423
  %v1425 = vsub.f32 1.0, %v1424
  %v1426 = vmul.f32 %v1423, %v1425
  %v1427 = vadd.f32 %v1423, %v1426
  %vm1428 = vweird.f32 %v1422
  %vm1429 = vweird.f32 %v1423
  %vm1430 = vmor %vm1428, %vm1429
  %v1431 = vsel %vm1430, %v1423, %v1427
  %v1432 = vand.u32 2147483647, %v1422
  %vm1433 = vcmp.eq.f32.partialorder %v1432, 8.507059e+37
  %v1434 = vand.u32 %v1422, 2147483648
  %v1435 = vor.u32 1.1754944e-38, %v1434
  %v1436 = vsel %vm1433, %v1435, %v1431
  %v1437 = vmul.f32 %v1412, %v1436
  %v1438 = vmin.f32 %v1437, 1.0
  %v1439 = vmax.f32 %v1438, -1.0
  %v1440 = vadd.f32 %v1319, 1.0
  %v1441 = vadd.f32 %v1359, 1.0
  %v1442 = vadd.f32 %v1399, 1.0
  %v1443 = vadd.f32 %v1439, 1.0
  %v1444 = vmul.f32 %v1272, %v1440
  %v1445 = vmul.f32 %v1273, %v1441
  %v1446 = vmul.f32 %v1274, %v1442
  %v1447 = vmul.f32 %v1275, %v1443
  %v1448 = vpack.c.bf16 %v1444, %v1444
  %v1449 = vpack.c.bf16 %v1445, %v1445
  %v1450 = vpack.c.bf16 %v1446, %v1446
  %v1451 = vpack.c.bf16 %v1447, %v1447
  %1452 = vst [vmem:[%s4] sm:$0xf] %v1448
  %1453 = vst [vmem:[%s4 + $0x4] sm:$0xf] %v1449
  %1454 = vst [vmem:[%s4 + $0x8] sm:$0xf] %v1450
  %1455 = vst [vmem:[%s4 + $0xc] sm:$0xf] %v1451
  // Predicated region
  $region18: #{decoder_forward.14} parent=0 // pred_check
    _
  $region19: #{decoder_forward.14} parent=0 // pred_check_branch
    %1457 = sbr.rel (0) target = $region21
  $region20: #{decoder_forward.14} parent=0 // pred_region
    _
  $region21: #{decoder_forward.14} parent=0 // pred_fallthru
    _
  // Predicated region
  $region22: #{decoder_forward.14} parent=0 // pred_check
    _
  $region23: #{decoder_forward.14} parent=0 // pred_check_branch
    %1459 = sbr.rel (0) target = $region25
  $region24: #{decoder_forward.14} parent=0 // pred_region
    _
  $region25: #{decoder_forward.14} parent=0 // pred_fallthru
    _

// kernel: decoder_forward.16
$region0: #{decoder_forward.16}
  #allocation0 [shape = 'u32[]', space=smem, size = 0x4, offset = 0x4, fixed_abs, tag = 'smem constant byte address 0x4 - core index']
  #allocation1 [shape = 'u32[72,128]{1,0:T(1,128)}', space=vmem, size = 0x9000, scoped, tag = 'internal scratch']
  %s0 = inlined_call_operand.vmem [shape: bf16[32,256], index: 0, kind: input, shape index: {}]
  %s1 = inlined_call_operand.vmem [shape: bf16[256,128], index: 1, kind: input, shape index: {}]
  %s2 = inlined_call_operand.vmem [shape: f32[1,128], index: 2, kind: input, shape index: {}]
  %s3 = inlined_call_operand.vmem [shape: f32[1,128], index: 3, kind: input, shape index: {}]
  %s4 = inlined_call_operand.vmem [shape: bf16[32,128], index: 4, kind: output, shape index: {}]
  %s5 = sld [smem:[#allocation0]]
  $region26: #{decoder_forward.16} parent=0
    _
  %s7 = ssub.s32 1, %s5
  %s8 = scalar_select 0, %s7, %s5
  // Predicated region
  $region2: #{decoder_forward.16} parent=0 // pred_check
    _
  $region3: #{decoder_forward.16} parent=0 // pred_check_branch
    %10 = sbr.rel (0) target = $region5
  $region4: #{decoder_forward.16} parent=0 // pred_region
    _
  $region5: #{decoder_forward.16} parent=0 // pred_fallthru
    _
  // Predicated region
  $region6: #{decoder_forward.16} parent=0 // pred_check
    _
  $region7: #{decoder_forward.16} parent=0 // pred_check_branch
    %12 = sbr.rel (0) target = $region9
  $region8: #{decoder_forward.16} parent=0 // pred_region
    _
  $region9: #{decoder_forward.16} parent=0 // pred_fallthru
    _
  // Predicated region
  $region10: #{decoder_forward.16} parent=0 // pred_check
    _
  $region11: #{decoder_forward.16} parent=0 // pred_check_branch
    %14 = sbr.rel (0) target = $region13
  $region12: #{decoder_forward.16} parent=0 // pred_region
    _
  $region13: #{decoder_forward.16} parent=0 // pred_fallthru
    _
  // Predicated region
  $region14: #{decoder_forward.16} parent=0 // pred_check
    _
  $region15: #{decoder_forward.16} parent=0 // pred_check_branch
    %16 = sbr.rel (0) target = $region17
  $region16: #{decoder_forward.16} parent=0 // pred_region
    _
  $region17: #{decoder_forward.16} parent=0 // pred_fallthru
    _
  %v17 = vld [vmem:[%s0] sm:$0xff]
  %v18 = vld [vmem:[%s0 + $0x8] sm:$0xff]
  %v19 = vld [vmem:[%s0 + $0x10] sm:$0xff]
  %v20 = vld [vmem:[%s0 + $0x18] sm:$0xff]
  %v21 = vld [vmem:[%s1] sm:$0xf]
  %v22 = vld [vmem:[%s1 + $0x4] sm:$0xf]
  %v23 = vld [vmem:[%s1 + $0x8] sm:$0xf]
  %v24 = vld [vmem:[%s1 + $0xc] sm:$0xf]
  %v25 = vld [vmem:[%s1 + $0x10] sm:$0xf]
  %v26 = vld [vmem:[%s1 + $0x14] sm:$0xf]
  %v27 = vld [vmem:[%s1 + $0x18] sm:$0xf]
  %v28 = vld [vmem:[%s1 + $0x1c] sm:$0xf]
  %v29 = vld [vmem:[%s1 + $0x20] sm:$0xf]
  %v30 = vld [vmem:[%s1 + $0x24] sm:$0xf]
  %v31 = vld [vmem:[%s1 + $0x28] sm:$0xf]
  %v32 = vld [vmem:[%s1 + $0x2c] sm:$0xf]
  %v33 = vld [vmem:[%s1 + $0x30] sm:$0xf]
  %v34 = vld [vmem:[%s1 + $0x34] sm:$0xf]
  %v35 = vld [vmem:[%s1 + $0x38] sm:$0xf]
  %v36 = vld [vmem:[%s1 + $0x3c] sm:$0xf]
  %v37 = vld [vmem:[%s1 + $0x40] sm:$0xf]
  %v38 = vld [vmem:[%s1 + $0x44] sm:$0xf]
  %v39 = vld [vmem:[%s1 + $0x48] sm:$0xf]
  %v40 = vld [vmem:[%s1 + $0x4c] sm:$0xf]
  %v41 = vld [vmem:[%s1 + $0x50] sm:$0xf]
  %v42 = vld [vmem:[%s1 + $0x54] sm:$0xf]
  %v43 = vld [vmem:[%s1 + $0x58] sm:$0xf]
  %v44 = vld [vmem:[%s1 + $0x5c] sm:$0xf]
  %v45 = vld [vmem:[%s1 + $0x60] sm:$0xf]
  %v46 = vld [vmem:[%s1 + $0x64] sm:$0xf]
  %v47 = vld [vmem:[%s1 + $0x68] sm:$0xf]
  %v48 = vld [vmem:[%s1 + $0x6c] sm:$0xf]
  %v49 = vld [vmem:[%s1 + $0x70] sm:$0xf]
  %v50 = vld [vmem:[%s1 + $0x74] sm:$0xf]
  %v51 = vld [vmem:[%s1 + $0x78] sm:$0xf]
  %v52 = vld [vmem:[%s1 + $0x7c] sm:$0xf]
  %v57 = vunpack.c.l.b16 %v17
  %v58 = vunpack.c.h.b16 %v17
  %v59 = vunpack.c.l.b16 %v18
  %v60 = vunpack.c.h.b16 %v18
  %v61 = vunpack.c.l.b16 %v19
  %v62 = vunpack.c.h.b16 %v19
  %v63 = vunpack.c.l.b16 %v20
  %v64 = vunpack.c.h.b16 %v20
  %v65 = vpack.c.b16 %v59, %v57
  %v66 = vpack.c.b16 %v60, %v58
  %v67 = vpack.c.b16 %v63, %v61
  %v68 = vpack.c.b16 %v64, %v62
  %v105 = vunpack.c.l.b16 %v21
  %v106 = vunpack.c.l.b16 %v22
  %v107 = vunpack.c.l.b16 %v23
  %v108 = vunpack.c.l.b16 %v24
  %v109 = vunpack.c.l.b16 %v25
  %v110 = vunpack.c.l.b16 %v26
  %v111 = vunpack.c.l.b16 %v27
  %v112 = vunpack.c.l.b16 %v28
  %v113 = vunpack.c.l.b16 %v29
  %v114 = vunpack.c.l.b16 %v30
  %v115 = vunpack.c.l.b16 %v31
  %v116 = vunpack.c.l.b16 %v32
  %v117 = vunpack.c.l.b16 %v33
  %v118 = vunpack.c.l.b16 %v34
  %v119 = vunpack.c.l.b16 %v35
  %v120 = vunpack.c.l.b16 %v36
  %v121 = vunpack.c.l.b16 %v37
  %v122 = vunpack.c.l.b16 %v38
  %v123 = vunpack.c.l.b16 %v39
  %v124 = vunpack.c.l.b16 %v40
  %v125 = vunpack.c.l.b16 %v41
  %v126 = vunpack.c.l.b16 %v42
  %v127 = vunpack.c.l.b16 %v43
  %v128 = vunpack.c.l.b16 %v44
  %v129 = vunpack.c.l.b16 %v45
  %v130 = vunpack.c.l.b16 %v46
  %v131 = vunpack.c.l.b16 %v47
  %v132 = vunpack.c.l.b16 %v48
  %v133 = vunpack.c.l.b16 %v49
  %v134 = vunpack.c.l.b16 %v50
  %v135 = vunpack.c.l.b16 %v51
  %v136 = vunpack.c.l.b16 %v52
  %v137 = vpack.c.b16 %v106, %v105
  %v138 = vpack.c.b16 %v108, %v107
  %v139 = vpack.c.b16 %v110, %v109
  %v140 = vpack.c.b16 %v112, %v111
  %v141 = vpack.c.b16 %v114, %v113
  %v142 = vpack.c.b16 %v116, %v115
  %v143 = vpack.c.b16 %v118, %v117
  %v144 = vpack.c.b16 %v120, %v119
  %v145 = vpack.c.b16 %v122, %v121
  %v146 = vpack.c.b16 %v124, %v123
  %v147 = vpack.c.b16 %v126, %v125
  %v148 = vpack.c.b16 %v128, %v127
  %v149 = vpack.c.b16 %v130, %v129
  %v150 = vpack.c.b16 %v132, %v131
  %v151 = vpack.c.b16 %v134, %v133
  %v152 = vpack.c.b16 %v136, %v135
  %169 = vmatpush.bf16.msra.mxu0 %v144
  %170 = vmatpush.bf16.msra.mxu0 %v143
  %171 = vmatpush.bf16.msra.mxu0 %v142
  %172 = vmatpush.bf16.msra.mxu0 %v141
  %173 = vmatpush.bf16.msra.mxu0 %v140
  %174 = vmatpush.bf16.msra.mxu0 %v139
  %175 = vmatpush.bf16.msra.mxu0 %v138
  %176 = vmatpush.bf16.msra.mxu0 %v137
  %177 = vmatmul.bf16.gmra.mxu0 %v65
  %v178 = vpop.f32.mrf.mxu0
  %v179 = vadd.f32 0.0, %v178
  %v180 = vpop.f32.mrf.mxu0
  %v181 = vadd.f32 0.0, %v180
  %182 = vmatmul.bf16.gmra.mxu0 %v67
  %v183 = vpop.f32.mrf.mxu0
  %v184 = vadd.f32 0.0, %v183
  %v185 = vpop.f32.mrf.mxu0
  %v186 = vadd.f32 0.0, %v185
  %187 = vdwg.mxu0
  %188 = vmatpush.bf16.msra.mxu0 %v152
  %189 = vmatpush.bf16.msra.mxu0 %v151
  %190 = vmatpush.bf16.msra.mxu0 %v150
  %191 = vmatpush.bf16.msra.mxu0 %v149
  %192 = vmatpush.bf16.msra.mxu0 %v148
  %193 = vmatpush.bf16.msra.mxu0 %v147
  %194 = vmatpush.bf16.msra.mxu0 %v146
  %195 = vmatpush.bf16.msra.mxu0 %v145
  %196 = vmatmul.bf16.gmra.mxu0 %v66
  %v197 = vpop.f32.mrf.mxu0
  %v198 = vadd.f32 %v179, %v197
  %v199 = vpop.f32.mrf.mxu0
  %v200 = vadd.f32 %v181, %v199
  %201 = vmatmul.bf16.gmra.mxu0 %v68
  %v202 = vpop.f32.mrf.mxu0
  %v203 = vadd.f32 %v184, %v202
  %v204 = vpop.f32.mrf.mxu0
  %v205 = vadd.f32 %v186, %v204
  %206 = vdwg.mxu0
  %v207 = vld [vmem:[%s2] sm:$0x1]
  %v209 = vperm.slane %v207, 0
  %v211 = vmul.f32 %v198, %v209
  %v212 = vmul.f32 %v200, %v209
  %v213 = vmul.f32 %v203, %v209
  %v214 = vmul.f32 %v205, %v209
  %v215 = vld [vmem:[%s3] sm:$0x1]
  %v217 = vperm.slane %v215, 0
  %v219 = vadd.f32 %v211, %v217
  %v220 = vadd.f32 %v212, %v217
  %v221 = vadd.f32 %v213, %v217
  %v222 = vadd.f32 %v214, %v217
  %v223 = vmul.f32 %v219, 0.5
  %v224 = vmul.f32 %v220, 0.5
  %v225 = vmul.f32 %v221, 0.5
  %v226 = vmul.f32 %v222, 0.5
  %v227 = vmul.f32 %v219, 0.70710677
  %v228 = vmul.f32 %v220, 0.70710677
  %v229 = vmul.f32 %v221, 0.70710677
  %v230 = vmul.f32 %v222, 0.70710677
  %v231 = vmul.f32 %v227, %v227
  %v232 = vmin.f32 16.0, %v231
  %v233 = vmul.f32 %v232, 2.1237322e-06
  %v234 = vadd.f32 %v233, 0.00028619796
  %v235 = vmul.f32 %v232, %v234
  %v236 = vadd.f32 %v235, 0.0036580483
  %v237 = vmul.f32 %v232, %v236
  %v238 = vadd.f32 %v237, 0.05243302
  %v239 = vmul.f32 %v232, %v238
  %v240 = vadd.f32 %v239, 0.18741608
  %v241 = vmul.f32 %v232, %v240
  %v242 = vadd.f32 %v241, 1.1283791
  %v243 = vmul.f32 %v227, %v242
  %v244 = vmul.f32 %v232, 3.8918573e-05
  %v245 = vadd.f32 %v244, 0.001143296
  %v246 = vmul.f32 %v232, %v245
  %v247 = vadd.f32 %v246, 0.014752088
  %v248 = vmul.f32 %v232, %v247
  %v249 = vadd.f32 %v248, 0.112945676
  %v250 = vmul.f32 %v232, %v249
  %v251 = vadd.f32 %v250, 0.4994258
  %v252 = vmul.f32 %v232, %v251
  %v253 = vadd.f32 %v252, 1.0
  %v254 = vrcp.pop %v253
  %v255 = vmul.f32 %v253, %v254
  %v256 = vsub.f32 1.0, %v255
  %v257 = vmul.f32 %v254, %v256
  %v258 = vadd.f32 %v254, %v257
  %vm259 = vweird.f32 %v253
  %vm260 = vweird.f32 %v254
  %vm261 = vmor %vm259, %vm260
  %v262 = vsel %vm261, %v254, %v258
  %v263 = vand.u32 2147483647, %v253
  %vm264 = vcmp.eq.f32.partialorder %v263, 8.507059e+37
  %v265 = vand.u32 %v253, 2147483648
  %v266 = vor.u32 1.1754944e-38, %v265
  %v267 = vsel %vm264, %v266, %v262
  %v268 = vmul.f32 %v243, %v267
  %v269 = vmin.f32 %v268, 1.0
  %v270 = vmax.f32 %v269, -1.0
  %v271 = vmul.f32 %v228, %v228
  %v272 = vmin.f32 16.0, %v271
  %v273 = vmul.f32 %v272, 2.1237322e-06
  %v274 = vadd.f32 %v273, 0.00028619796
  %v275 = vmul.f32 %v272, %v274
  %v276 = vadd.f32 %v275, 0.0036580483
  %v277 = vmul.f32 %v272, %v276
  %v278 = vadd.f32 %v277, 0.05243302
  %v279 = vmul.f32 %v272, %v278
  %v280 = vadd.f32 %v279, 0.18741608
  %v281 = vmul.f32 %v272, %v280
  %v282 = vadd.f32 %v281, 1.1283791
  %v283 = vmul.f32 %v228, %v282
  %v284 = vmul.f32 %v272, 3.8918573e-05
  %v285 = vadd.f32 %v284, 0.001143296
  %v286 = vmul.f32 %v272, %v285
  %v287 = vadd.f32 %v286, 0.014752088
  %v288 = vmul.f32 %v272, %v287
  %v289 = vadd.f32 %v288, 0.112945676
  %v290 = vmul.f32 %v272, %v289
  %v291 = vadd.f32 %v290, 0.4994258
  %v292 = vmul.f32 %v272, %v291
  %v293 = vadd.f32 %v292, 1.0
  %v294 = vrcp.pop %v293
  %v295 = vmul.f32 %v293, %v294
  %v296 = vsub.f32 1.0, %v295
  %v297 = vmul.f32 %v294, %v296
  %v298 = vadd.f32 %v294, %v297
  %vm299 = vweird.f32 %v293
  %vm300 = vweird.f32 %v294
  %vm301 = vmor %vm299, %vm300
  %v302 = vsel %vm301, %v294, %v298
  %v303 = vand.u32 2147483647, %v293
  %vm304 = vcmp.eq.f32.partialorder %v303, 8.507059e+37
  %v305 = vand.u32 %v293, 2147483648
  %v306 = vor.u32 1.1754944e-38, %v305
  %v307 = vsel %vm304, %v306, %v302
  %v308 = vmul.f32 %v283, %v307
  %v309 = vmin.f32 %v308, 1.0
  %v310 = vmax.f32 %v309, -1.0
  %v311 = vmul.f32 %v229, %v229
  %v312 = vmin.f32 16.0, %v311
  %v313 = vmul.f32 %v312, 2.1237322e-06
  %v314 = vadd.f32 %v313, 0.00028619796
  %v315 = vmul.f32 %v312, %v314
  %v316 = vadd.f32 %v315, 0.0036580483
  %v317 = vmul.f32 %v312, %v316
  %v318 = vadd.f32 %v317, 0.05243302
  %v319 = vmul.f32 %v312, %v318
  %v320 = vadd.f32 %v319, 0.18741608
  %v321 = vmul.f32 %v312, %v320
  %v322 = vadd.f32 %v321, 1.1283791
  %v323 = vmul.f32 %v229, %v322
  %v324 = vmul.f32 %v312, 3.8918573e-05
  %v325 = vadd.f32 %v324, 0.001143296
  %v326 = vmul.f32 %v312, %v325
  %v327 = vadd.f32 %v326, 0.014752088
  %v328 = vmul.f32 %v312, %v327
  %v329 = vadd.f32 %v328, 0.112945676
  %v330 = vmul.f32 %v312, %v329
  %v331 = vadd.f32 %v330, 0.4994258
  %v332 = vmul.f32 %v312, %v331
  %v333 = vadd.f32 %v332, 1.0
  %v334 = vrcp.pop %v333
  %v335 = vmul.f32 %v333, %v334
  %v336 = vsub.f32 1.0, %v335
  %v337 = vmul.f32 %v334, %v336
  %v338 = vadd.f32 %v334, %v337
  %vm339 = vweird.f32 %v333
  %vm340 = vweird.f32 %v334
  %vm341 = vmor %vm339, %vm340
  %v342 = vsel %vm341, %v334, %v338
  %v343 = vand.u32 2147483647, %v333
  %vm344 = vcmp.eq.f32.partialorder %v343, 8.507059e+37
  %v345 = vand.u32 %v333, 2147483648
  %v346 = vor.u32 1.1754944e-38, %v345
  %v347 = vsel %vm344, %v346, %v342
  %v348 = vmul.f32 %v323, %v347
  %v349 = vmin.f32 %v348, 1.0
  %v350 = vmax.f32 %v349, -1.0
  %v351 = vmul.f32 %v230, %v230
  %v352 = vmin.f32 16.0, %v351
  %v353 = vmul.f32 %v352, 2.1237322e-06
  %v354 = vadd.f32 %v353, 0.00028619796
  %v355 = vmul.f32 %v352, %v354
  %v356 = vadd.f32 %v355, 0.0036580483
  %v357 = vmul.f32 %v352, %v356
  %v358 = vadd.f32 %v357, 0.05243302
  %v359 = vmul.f32 %v352, %v358
  %v360 = vadd.f32 %v359, 0.18741608
  %v361 = vmul.f32 %v352, %v360
  %v362 = vadd.f32 %v361, 1.1283791
  %v363 = vmul.f32 %v230, %v362
  %v364 = vmul.f32 %v352, 3.8918573e-05
  %v365 = vadd.f32 %v364, 0.001143296
  %v366 = vmul.f32 %v352, %v365
  %v367 = vadd.f32 %v366, 0.014752088
  %v368 = vmul.f32 %v352, %v367
  %v369 = vadd.f32 %v368, 0.112945676
  %v370 = vmul.f32 %v352, %v369
  %v371 = vadd.f32 %v370, 0.4994258
  %v372 = vmul.f32 %v352, %v371
  %v373 = vadd.f32 %v372, 1.0
  %v374 = vrcp.pop %v373
  %v375 = vmul.f32 %v373, %v374
  %v376 = vsub.f32 1.0, %v375
  %v377 = vmul.f32 %v374, %v376
  %v378 = vadd.f32 %v374, %v377
  %vm379 = vweird.f32 %v373
  %vm380 = vweird.f32 %v374
  %vm381 = vmor %vm379, %vm380
  %v382 = vsel %vm381, %v374, %v378
  %v383 = vand.u32 2147483647, %v373
  %vm384 = vcmp.eq.f32.partialorder %v383, 8.507059e+37
  %v385 = vand.u32 %v373, 2147483648
  %v386 = vor.u32 1.1754944e-38, %v385
  %v387 = vsel %vm384, %v386, %v382
  %v388 = vmul.f32 %v363, %v387
  %v389 = vmin.f32 %v388, 1.0
  %v390 = vmax.f32 %v389, -1.0
  %v391 = vadd.f32 %v270, 1.0
  %v392 = vadd.f32 %v310, 1.0
  %v393 = vadd.f32 %v350, 1.0
  %v394 = vadd.f32 %v390, 1.0
  %v395 = vmul.f32 %v223, %v391
  %v396 = vmul.f32 %v224, %v392
  %v397 = vmul.f32 %v225, %v393
  %v398 = vmul.f32 %v226, %v394
  %v399 = vpack.c.bf16 %v395, %v395
  %v400 = vpack.c.bf16 %v396, %v396
  %v401 = vpack.c.bf16 %v397, %v397
  %v402 = vpack.c.bf16 %v398, %v398
  %403 = vst [vmem:[%s4] sm:$0xf] %v399
  %404 = vst [vmem:[%s4 + $0x4] sm:$0xf] %v400
  %405 = vst [vmem:[%s4 + $0x8] sm:$0xf] %v401
  %406 = vst [vmem:[%s4 + $0xc] sm:$0xf] %v402
  // Predicated region
  $region18: #{decoder_forward.16} parent=0 // pred_check
    _
  $region19: #{decoder_forward.16} parent=0 // pred_check_branch
    %408 = sbr.rel (0) target = $region21
  $region20: #{decoder_forward.16} parent=0 // pred_region
    _
  $region21: #{decoder_forward.16} parent=0 // pred_fallthru
    _
  // Predicated region
  $region22: #{decoder_forward.16} parent=0 // pred_check
    _
  $region23: #{decoder_forward.16} parent=0 // pred_check_branch
    %410 = sbr.rel (0) target = $region25
  $region24: #{decoder_forward.16} parent=0 // pred_region
    _
  $region25: #{decoder_forward.16} parent=0 // pred_fallthru
    _

// kernel: decoder_forward.20
$region0: #{decoder_forward.20}
  #allocation0 [shape = 'u32[]', space=smem, size = 0x4, offset = 0x4, fixed_abs, tag = 'smem constant byte address 0x4 - core index']
  #allocation1 [shape = 'u32[72,128]{1,0:T(1,128)}', space=vmem, size = 0x9000, scoped, tag = 'internal scratch']
  %s0 = inlined_call_operand.vmem [shape: bf16[128,896], index: 0, kind: input, shape index: {}]
  %s1 = inlined_call_operand.vmem [shape: bf16[896,128], index: 1, kind: input, shape index: {}]
  %s2 = inlined_call_operand.vmem [shape: f32[1,128], index: 2, kind: input, shape index: {}]
  %s3 = inlined_call_operand.vmem [shape: f32[1,128], index: 3, kind: input, shape index: {}]
  %s4 = inlined_call_operand.vmem [shape: bf16[128,128], index: 4, kind: output, shape index: {}]
  %s5 = sld [smem:[#allocation0]]
  $region26: #{decoder_forward.20} parent=0
    _
  %s7 = ssub.s32 1, %s5
  %s8 = scalar_select 0, %s7, %s5
  // Predicated region
  $region2: #{decoder_forward.20} parent=0 // pred_check
    _
  $region3: #{decoder_forward.20} parent=0 // pred_check_branch
    %10 = sbr.rel (0) target = $region5
  $region4: #{decoder_forward.20} parent=0 // pred_region
    _
  $region5: #{decoder_forward.20} parent=0 // pred_fallthru
    _
  // Predicated region
  $region6: #{decoder_forward.20} parent=0 // pred_check
    _
  $region7: #{decoder_forward.20} parent=0 // pred_check_branch
    %12 = sbr.rel (0) target = $region9
  $region8: #{decoder_forward.20} parent=0 // pred_region
    _
  $region9: #{decoder_forward.20} parent=0 // pred_fallthru
    _
  // Predicated region
  $region10: #{decoder_forward.20} parent=0 // pred_check
    _
  $region11: #{decoder_forward.20} parent=0 // pred_check_branch
    %14 = sbr.rel (0) target = $region13
  $region12: #{decoder_forward.20} parent=0 // pred_region
    _
  $region13: #{decoder_forward.20} parent=0 // pred_fallthru
    _
  // Predicated region
  $region14: #{decoder_forward.20} parent=0 // pred_check
    _
  $region15: #{decoder_forward.20} parent=0 // pred_check_branch
    %16 = sbr.rel (0) target = $region17
  $region16: #{decoder_forward.20} parent=0 // pred_region
    _
  $region17: #{decoder_forward.20} parent=0 // pred_fallthru
    _
  %v17 = vld [vmem:[%s0] sm:$0xff]
  %v18 = vld [vmem:[%s0 + $0x8] sm:$0xff]
  %v19 = vld [vmem:[%s0 + $0x10] sm:$0xff]
  %v20 = vld [vmem:[%s0 + $0x18] sm:$0xf]
  %v21 = vld [vmem:[%s0 + $0x1c] sm:$0xff]
  %v22 = vld [vmem:[%s0 + $0x24] sm:$0xff]
  %v23 = vld [vmem:[%s0 + $0x2c] sm:$0xff]
  %v24 = vld [vmem:[%s0 + $0x34] sm:$0xf]
  %v25 = vld [vmem:[%s0 + $0x38] sm:$0xff]
  %v26 = vld [vmem:[%s0 + $0x40] sm:$0xff]
  %v27 = vld [vmem:[%s0 + $0x48] sm:$0xff]
  %v28 = vld [vmem:[%s0 + $0x50] sm:$0xf]
  %v29 = vld [vmem:[%s0 + $0x54] sm:$0xff]
  %v30 = vld [vmem:[%s0 + $0x5c] sm:$0xff]
  %v31 = vld [vmem:[%s0 + $0x64] sm:$0xff]
  %v32 = vld [vmem:[%s0 + $0x6c] sm:$0xf]
  %v33 = vld [vmem:[%s0 + $0x70] sm:$0xff]
  %v34 = vld [vmem:[%s0 + $0x78] sm:$0xff]
  %v35 = vld [vmem:[%s0 + $0x80] sm:$0xff]
  %v36 = vld [vmem:[%s0 + $0x88] sm:$0xf]
  %v37 = vld [vmem:[%s0 + $0x8c] sm:$0xff]
  %v38 = vld [vmem:[%s0 + $0x94] sm:$0xff]
  %v39 = vld [vmem:[%s0 + $0x9c] sm:$0xff]
  %v40 = vld [vmem:[%s0 + $0xa4] sm:$0xf]
  %v41 = vld [vmem:[%s0 + $0xa8] sm:$0xff]
  %v42 = vld [vmem:[%s0 + $0xb0] sm:$0xff]
  %v43 = vld [vmem:[%s0 + $0xb8] sm:$0xff]
  %v44 = vld [vmem:[%s0 + $0xc0] sm:$0xf]
  %v45 = vld [vmem:[%s0 + $0xc4] sm:$0xff]
  %v46 = vld [vmem:[%s0 + $0xcc] sm:$0xff]
  %v47 = vld [vmem:[%s0 + $0xd4] sm:$0xff]
  %v48 = vld [vmem:[%s0 + $0xdc] sm:$0xf]
  %v49 = vld [vmem:[%s0 + $0xe0] sm:$0xff]
  %v50 = vld [vmem:[%s0 + $0xe8] sm:$0xff]
  %v51 = vld [vmem:[%s0 + $0xf0] sm:$0xff]
  %v52 = vld [vmem:[%s0 + $0xf8] sm:$0xf]
  %v53 = vld [vmem:[%s0 + $0xfc] sm:$0xff]
  %v54 = vld [vmem:[%s0 + $0x104] sm:$0xff]
  %v55 = vld [vmem:[%s0 + $0x10c] sm:$0xff]
  %v56 = vld [vmem:[%s0 + $0x114] sm:$0xf]
  %v57 = vld [vmem:[%s0 + $0x118] sm:$0xff]
  %v58 = vld [vmem:[%s0 + $0x120] sm:$0xff]
  %v59 = vld [vmem:[%s0 + $0x128] sm:$0xff]
  %v60 = vld [vmem:[%s0 + $0x130] sm:$0xf]
  %v61 = vld [vmem:[%s0 + $0x134] sm:$0xff]
  %v62 = vld [vmem:[%s0 + $0x13c] sm:$0xff]
  %v63 = vld [vmem:[%s0 + $0x144] sm:$0xff]
  %v64 = vld [vmem:[%s0 + $0x14c] sm:$0xf]
  %v65 = vld [vmem:[%s0 + $0x150] sm:$0xff]
  %v66 = vld [vmem:[%s0 + $0x158] sm:$0xff]
  %v67 = vld [vmem:[%s0 + $0x160] sm:$0xff]
  %v68 = vld [vmem:[%s0 + $0x168] sm:$0xf]
  %v69 = vld [vmem:[%s0 + $0x16c] sm:$0xff]
  %v70 = vld [vmem:[%s0 + $0x174] sm:$0xff]
  %v71 = vld [vmem:[%s0 + $0x17c] sm:$0xff]
  %v72 = vld [vmem:[%s0 + $0x184] sm:$0xf]
  %v73 = vld [vmem:[%s0 + $0x188] sm:$0xff]
  %v74 = vld [vmem:[%s0 + $0x190] sm:$0xff]
  %v75 = vld [vmem:[%s0 + $0x198] sm:$0xff]
  %v76 = vld [vmem:[%s0 + $0x1a0] sm:$0xf]
  %v77 = vld [vmem:[%s0 + $0x1a4] sm:$0xff]
  %v78 = vld [vmem:[%s0 + $0x1ac] sm:$0xff]
  %v79 = vld [vmem:[%s0 + $0x1b4] sm:$0xff]
  %v80 = vld [vmem:[%s0 + $0x1bc] sm:$0xf]
  %v81 = vld [vmem:[%s1] sm:$0xf]
  %v82 = vld [vmem:[%s1 + $0x4] sm:$0xf]
  %v83 = vld [vmem:[%s1 + $0x8] sm:$0xf]
  %v84 = vld [vmem:[%s1 + $0xc] sm:$0xf]
  %v85 = vld [vmem:[%s1 + $0x10] sm:$0xf]
  %v86 = vld [vmem:[%s1 + $0x14] sm:$0xf]
  %v87 = vld [vmem:[%s1 + $0x18] sm:$0xf]
  %v88 = vld [vmem:[%s1 + $0x1c] sm:$0xf]
  %v89 = vld [vmem:[%s1 + $0x20] sm:$0xf]
  %v90 = vld [vmem:[%s1 + $0x24] sm:$0xf]
  %v91 = vld [vmem:[%s1 + $0x28] sm:$0xf]
  %v92 = vld [vmem:[%s1 + $0x2c] sm:$0xf]
  %v93 = vld [vmem:[%s1 + $0x30] sm:$0xf]
  %v94 = vld [vmem:[%s1 + $0x34] sm:$0xf]
  %v95 = vld [vmem:[%s1 + $0x38] sm:$0xf]
  %v96 = vld [vmem:[%s1 + $0x3c] sm:$0xf]
  %v97 = vld [vmem:[%s1 + $0x40] sm:$0xf]
  %v98 = vld [vmem:[%s1 + $0x44] sm:$0xf]
  %v99 = vld [vmem:[%s1 + $0x48] sm:$0xf]
  %v100 = vld [vmem:[%s1 + $0x4c] sm:$0xf]
  %v101 = vld [vmem:[%s1 + $0x50] sm:$0xf]
  %v102 = vld [vmem:[%s1 + $0x54] sm:$0xf]
  %v103 = vld [vmem:[%s1 + $0x58] sm:$0xf]
  %v104 = vld [vmem:[%s1 + $0x5c] sm:$0xf]
  %v105 = vld [vmem:[%s1 + $0x60] sm:$0xf]
  %v106 = vld [vmem:[%s1 + $0x64] sm:$0xf]
  %v107 = vld [vmem:[%s1 + $0x68] sm:$0xf]
  %v108 = vld [vmem:[%s1 + $0x6c] sm:$0xf]
  %v109 = vld [vmem:[%s1 + $0x70] sm:$0xf]
  %v110 = vld [vmem:[%s1 + $0x74] sm:$0xf]
  %v111 = vld [vmem:[%s1 + $0x78] sm:$0xf]
  %v112 = vld [vmem:[%s1 + $0x7c] sm:$0xf]
  %v113 = vld [vmem:[%s1 + $0x80] sm:$0xf]
  %v114 = vld [vmem:[%s1 + $0x84] sm:$0xf]
  %v115 = vld [vmem:[%s1 + $0x88] sm:$0xf]
  %v116 = vld [vmem:[%s1 + $0x8c] sm:$0xf]
  %v117 = vld [vmem:[%s1 + $0x90] sm:$0xf]
  %v118 = vld [vmem:[%s1 + $0x94] sm:$0xf]
  %v119 = vld [vmem:[%s1 + $0x98] sm:$0xf]
  %v120 = vld [vmem:[%s1 + $0x9c] sm:$0xf]
  %v121 = vld [vmem:[%s1 + $0xa0] sm:$0xf]
  %v122 = vld [vmem:[%s1 + $0xa4] sm:$0xf]
  %v123 = vld [vmem:[%s1 + $0xa8] sm:$0xf]
  %v124 = vld [vmem:[%s1 + $0xac] sm:$0xf]
  %v125 = vld [vmem:[%s1 + $0xb0] sm:$0xf]
  %v126 = vld [vmem:[%s1 + $0xb4] sm:$0xf]
  %v127 = vld [vmem:[%s1 + $0xb8] sm:$0xf]
  %v128 = vld [vmem:[%s1 + $0xbc] sm:$0xf]
  %v129 = vld [vmem:[%s1 + $0xc0] sm:$0xf]
  %v130 = vld [vmem:[%s1 + $0xc4] sm:$0xf]
  %v131 = vld [vmem:[%s1 + $0xc8] sm:$0xf]
  %v132 = vld [vmem:[%s1 + $0xcc] sm:$0xf]
  %v133 = vld [vmem:[%s1 + $0xd0] sm:$0xf]
  %v134 = vld [vmem:[%s1 + $0xd4] sm:$0xf]
  %v135 = vld [vmem:[%s1 + $0xd8] sm:$0xf]
  %v136 = vld [vmem:[%s1 + $0xdc] sm:$0xf]
  %v137 = vld [vmem:[%s1 + $0xe0] sm:$0xf]
  %v138 = vld [vmem:[%s1 + $0xe4] sm:$0xf]
  %v139 = vld [vmem:[%s1 + $0xe8] sm:$0xf]
  %v140 = vld [vmem:[%s1 + $0xec] sm:$0xf]
  %v141 = vld [vmem:[%s1 + $0xf0] sm:$0xf]
  %v142 = vld [vmem:[%s1 + $0xf4] sm:$0xf]
  %v143 = vld [vmem:[%s1 + $0xf8] sm:$0xf]
  %v144 = vld [vmem:[%s1 + $0xfc] sm:$0xf]
  %v145 = vld [vmem:[%s1 + $0x100] sm:$0xf]
  %v146 = vld [vmem:[%s1 + $0x104] sm:$0xf]
  %v147 = vld [vmem:[%s1 + $0x108] sm:$0xf]
  %v148 = vld [vmem:[%s1 + $0x10c] sm:$0xf]
  %v149 = vld [vmem:[%s1 + $0x110] sm:$0xf]
  %v150 = vld [vmem:[%s1 + $0x114] sm:$0xf]
  %v151 = vld [vmem:[%s1 + $0x118] sm:$0xf]
  %v152 = vld [vmem:[%s1 + $0x11c] sm:$0xf]
  %v153 = vld [vmem:[%s1 + $0x120] sm:$0xf]
  %v154 = vld [vmem:[%s1 + $0x124] sm:$0xf]
  %v155 = vld [vmem:[%s1 + $0x128] sm:$0xf]
  %v156 = vld [vmem:[%s1 + $0x12c] sm:$0xf]
  %v157 = vld [vmem:[%s1 + $0x130] sm:$0xf]
  %v158 = vld [vmem:[%s1 + $0x134] sm:$0xf]
  %v159 = vld [vmem:[%s1 + $0x138] sm:$0xf]
  %v160 = vld [vmem:[%s1 + $0x13c] sm:$0xf]
  %v161 = vld [vmem:[%s1 + $0x140] sm:$0xf]
  %v162 = vld [vmem:[%s1 + $0x144] sm:$0xf]
  %v163 = vld [vmem:[%s1 + $0x148] sm:$0xf]
  %v164 = vld [vmem:[%s1 + $0x14c] sm:$0xf]
  %v165 = vld [vmem:[%s1 + $0x150] sm:$0xf]
  %v166 = vld [vmem:[%s1 + $0x154] sm:$0xf]
  %v167 = vld [vmem:[%s1 + $0x158] sm:$0xf]
  %v168 = vld [vmem:[%s1 + $0x15c] sm:$0xf]
  %v169 = vld [vmem:[%s1 + $0x160] sm:$0xf]
  %v170 = vld [vmem:[%s1 + $0x164] sm:$0xf]
  %v171 = vld [vmem:[%s1 + $0x168] sm:$0xf]
  %v172 = vld [vmem:[%s1 + $0x16c] sm:$0xf]
  %v173 = vld [vmem:[%s1 + $0x170] sm:$0xf]
  %v174 = vld [vmem:[%s1 + $0x174] sm:$0xf]
  %v175 = vld [vmem:[%s1 + $0x178] sm:$0xf]
  %v176 = vld [vmem:[%s1 + $0x17c] sm:$0xf]
  %v177 = vld [vmem:[%s1 + $0x180] sm:$0xf]
  %v178 = vld [vmem:[%s1 + $0x184] sm:$0xf]
  %v179 = vld [vmem:[%s1 + $0x188] sm:$0xf]
  %v180 = vld [vmem:[%s1 + $0x18c] sm:$0xf]
  %v181 = vld [vmem:[%s1 + $0x190] sm:$0xf]
  %v182 = vld [vmem:[%s1 + $0x194] sm:$0xf]
  %v183 = vld [vmem:[%s1 + $0x198] sm:$0xf]
  %v184 = vld [vmem:[%s1 + $0x19c] sm:$0xf]
  %v185 = vld [vmem:[%s1 + $0x1a0] sm:$0xf]
  %v186 = vld [vmem:[%s1 + $0x1a4] sm:$0xf]
  %v187 = vld [vmem:[%s1 + $0x1a8] sm:$0xf]
  %v188 = vld [vmem:[%s1 + $0x1ac] sm:$0xf]
  %v189 = vld [vmem:[%s1 + $0x1b0] sm:$0xf]
  %v190 = vld [vmem:[%s1 + $0x1b4] sm:$0xf]
  %v191 = vld [vmem:[%s1 + $0x1b8] sm:$0xf]
  %v192 = vld [vmem:[%s1 + $0x1bc] sm:$0xf]
  %v257 = vunpack.c.l.b16 %v17
  %v258 = vunpack.c.h.b16 %v17
  %v259 = vunpack.c.l.b16 %v18
  %v260 = vunpack.c.h.b16 %v18
  %v261 = vunpack.c.l.b16 %v19
  %v262 = vunpack.c.h.b16 %v19
  %v263 = vunpack.c.l.b16 %v20
  %v264 = vunpack.c.l.b16 %v21
  %v265 = vunpack.c.h.b16 %v21
  %v266 = vunpack.c.l.b16 %v22
  %v267 = vunpack.c.h.b16 %v22
  %v268 = vunpack.c.l.b16 %v23
  %v269 = vunpack.c.h.b16 %v23
  %v270 = vunpack.c.l.b16 %v24
  %v271 = vunpack.c.l.b16 %v25
  %v272 = vunpack.c.h.b16 %v25
  %v273 = vunpack.c.l.b16 %v26
  %v274 = vunpack.c.h.b16 %v26
  %v275 = vunpack.c.l.b16 %v27
  %v276 = vunpack.c.h.b16 %v27
  %v277 = vunpack.c.l.b16 %v28
  %v278 = vunpack.c.l.b16 %v29
  %v279 = vunpack.c.h.b16 %v29
  %v280 = vunpack.c.l.b16 %v30
  %v281 = vunpack.c.h.b16 %v30
  %v282 = vunpack.c.l.b16 %v31
  %v283 = vunpack.c.h.b16 %v31
  %v284 = vunpack.c.l.b16 %v32
  %v285 = vunpack.c.l.b16 %v33
  %v286 = vunpack.c.h.b16 %v33
  %v287 = vunpack.c.l.b16 %v34
  %v288 = vunpack.c.h.b16 %v34
  %v289 = vunpack.c.l.b16 %v35
  %v290 = vunpack.c.h.b16 %v35
  %v291 = vunpack.c.l.b16 %v36
  %v292 = vunpack.c.l.b16 %v37
  %v293 = vunpack.c.h.b16 %v37
  %v294 = vunpack.c.l.b16 %v38
  %v295 = vunpack.c.h.b16 %v38
  %v296 = vunpack.c.l.b16 %v39
  %v297 = vunpack.c.h.b16 %v39
  %v298 = vunpack.c.l.b16 %v40
  %v299 = vunpack.c.l.b16 %v41
  %v300 = vunpack.c.h.b16 %v41
  %v301 = vunpack.c.l.b16 %v42
  %v302 = vunpack.c.h.b16 %v42
  %v303 = vunpack.c.l.b16 %v43
  %v304 = vunpack.c.h.b16 %v43
  %v305 = vunpack.c.l.b16 %v44
  %v306 = vunpack.c.l.b16 %v45
  %v307 = vunpack.c.h.b16 %v45
  %v308 = vunpack.c.l.b16 %v46
  %v309 = vunpack.c.h.b16 %v46
  %v310 = vunpack.c.l.b16 %v47
  %v311 = vunpack.c.h.b16 %v47
  %v312 = vunpack.c.l.b16 %v48
  %v313 = vunpack.c.l.b16 %v49
  %v314 = vunpack.c.h.b16 %v49
  %v315 = vunpack.c.l.b16 %v50
  %v316 = vunpack.c.h.b16 %v50
  %v317 = vunpack.c.l.b16 %v51
  %v318 = vunpack.c.h.b16 %v51
  %v319 = vunpack.c.l.b16 %v52
  %v320 = vunpack.c.l.b16 %v53
  %v321 = vunpack.c.h.b16 %v53
  %v322 = vunpack.c.l.b16 %v54
  %v323 = vunpack.c.h.b16 %v54
  %v324 = vunpack.c.l.b16 %v55
  %v325 = vunpack.c.h.b16 %v55
  %v326 = vunpack.c.l.b16 %v56
  %v327 = vunpack.c.l.b16 %v57
  %v328 = vunpack.c.h.b16 %v57
  %v329 = vunpack.c.l.b16 %v58
  %v330 = vunpack.c.h.b16 %v58
  %v331 = vunpack.c.l.b16 %v59
  %v332 = vunpack.c.h.b16 %v59
  %v333 = vunpack.c.l.b16 %v60
  %v334 = vunpack.c.l.b16 %v61
  %v335 = vunpack.c.h.b16 %v61
  %v336 = vunpack.c.l.b16 %v62
  %v337 = vunpack.c.h.b16 %v62
  %v338 = vunpack.c.l.b16 %v63
  %v339 = vunpack.c.h.b16 %v63
  %v340 = vunpack.c.l.b16 %v64
  %v341 = vunpack.c.l.b16 %v65
  %v342 = vunpack.c.h.b16 %v65
  %v343 = vunpack.c.l.b16 %v66
  %v344 = vunpack.c.h.b16 %v66
  %v345 = vunpack.c.l.b16 %v67
  %v346 = vunpack.c.h.b16 %v67
  %v347 = vunpack.c.l.b16 %v68
  %v348 = vunpack.c.l.b16 %v69
  %v349 = vunpack.c.h.b16 %v69
  %v350 = vunpack.c.l.b16 %v70
  %v351 = vunpack.c.h.b16 %v70
  %v352 = vunpack.c.l.b16 %v71
  %v353 = vunpack.c.h.b16 %v71
  %v354 = vunpack.c.l.b16 %v72
  %v355 = vunpack.c.l.b16 %v73
  %v356 = vunpack.c.h.b16 %v73
  %v357 = vunpack.c.l.b16 %v74
  %v358 = vunpack.c.h.b16 %v74
  %v359 = vunpack.c.l.b16 %v75
  %v360 = vunpack.c.h.b16 %v75
  %v361 = vunpack.c.l.b16 %v76
  %v362 = vunpack.c.l.b16 %v77
  %v363 = vunpack.c.h.b16 %v77
  %v364 = vunpack.c.l.b16 %v78
  %v365 = vunpack.c.h.b16 %v78
  %v366 = vunpack.c.l.b16 %v79
  %v367 = vunpack.c.h.b16 %v79
  %v368 = vunpack.c.l.b16 %v80
  %v369 = vpack.c.b16 %v264, %v257
  %v370 = vpack.c.b16 %v265, %v258
  %v371 = vpack.c.b16 %v266, %v259
  %v372 = vpack.c.b16 %v267, %v260
  %v373 = vpack.c.b16 %v268, %v261
  %v374 = vpack.c.b16 %v269, %v262
  %v375 = vpack.c.b16 %v270, %v263
  %v376 = vpack.c.b16 %v278, %v271
  %v377 = vpack.c.b16 %v279, %v272
  %v378 = vpack.c.b16 %v280, %v273
  %v379 = vpack.c.b16 %v281, %v274
  %v380 = vpack.c.b16 %v282, %v275
  %v381 = vpack.c.b16 %v283, %v276
  %v382 = vpack.c.b16 %v284, %v277
  %v383 = vpack.c.b16 %v292, %v285
  %v384 = vpack.c.b16 %v293, %v286
  %v385 = vpack.c.b16 %v294, %v287
  %v386 = vpack.c.b16 %v295, %v288
  %v387 = vpack.c.b16 %v296, %v289
  %v388 = vpack.c.b16 %v297, %v290
  %v389 = vpack.c.b16 %v298, %v291
  %v390 = vpack.c.b16 %v306, %v299
  %v391 = vpack.c.b16 %v307, %v300
  %v392 = vpack.c.b16 %v308, %v301
  %v393 = vpack.c.b16 %v309, %v302
  %v394 = vpack.c.b16 %v310, %v303
  %v395 = vpack.c.b16 %v311, %v304
  %v396 = vpack.c.b16 %v312, %v305
  %v397 = vpack.c.b16 %v320, %v313
  %v398 = vpack.c.b16 %v321, %v314
  %v399 = vpack.c.b16 %v322, %v315
  %v400 = vpack.c.b16 %v323, %v316
  %v401 = vpack.c.b16 %v324, %v317
  %v402 = vpack.c.b16 %v325, %v318
  %v403 = vpack.c.b16 %v326, %v319
  %v404 = vpack.c.b16 %v334, %v327
  %v405 = vpack.c.b16 %v335, %v328
  %v406 = vpack.c.b16 %v336, %v329
  %v407 = vpack.c.b16 %v337, %v330
  %v408 = vpack.c.b16 %v338, %v331
  %v409 = vpack.c.b16 %v339, %v332
  %v410 = vpack.c.b16 %v340, %v333
  %v411 = vpack.c.b16 %v348, %v341
  %v412 = vpack.c.b16 %v349, %v342
  %v413 = vpack.c.b16 %v350, %v343
  %v414 = vpack.c.b16 %v351, %v344
  %v415 = vpack.c.b16 %v352, %v345
  %v416 = vpack.c.b16 %v353, %v346
  %v417 = vpack.c.b16 %v354, %v347
  %v418 = vpack.c.b16 %v362, %v355
  %v419 = vpack.c.b16 %v363, %v356
  %v420 = vpack.c.b16 %v364, %v357
  %v421 = vpack.c.b16 %v365, %v358
  %v422 = vpack.c.b16 %v366, %v359
  %v423 = vpack.c.b16 %v367, %v360
  %v424 = vpack.c.b16 %v368, %v361
  %v593 = vunpack.c.l.b16 %v81
  %v594 = vunpack.c.l.b16 %v82
  %v595 = vunpack.c.l.b16 %v83
  %v596 = vunpack.c.l.b16 %v84
  %v597 = vunpack.c.l.b16 %v85
  %v598 = vunpack.c.l.b16 %v86
  %v599 = vunpack.c.l.b16 %v87
  %v600 = vunpack.c.l.b16 %v88
  %v601 = vunpack.c.l.b16 %v89
  %v602 = vunpack.c.l.b16 %v90
  %v603 = vunpack.c.l.b16 %v91
  %v604 = vunpack.c.l.b16 %v92
  %v605 = vunpack.c.l.b16 %v93
  %v606 = vunpack.c.l.b16 %v94
  %v607 = vunpack.c.l.b16 %v95
  %v608 = vunpack.c.l.b16 %v96
  %v609 = vunpack.c.l.b16 %v97
  %v610 = vunpack.c.l.b16 %v98
  %v611 = vunpack.c.l.b16 %v99
  %v612 = vunpack.c.l.b16 %v100
  %v613 = vunpack.c.l.b16 %v101
  %v614 = vunpack.c.l.b16 %v102
  %v615 = vunpack.c.l.b16 %v103
  %v616 = vunpack.c.l.b16 %v104
  %v617 = vunpack.c.l.b16 %v105
  %v618 = vunpack.c.l.b16 %v106
  %v619 = vunpack.c.l.b16 %v107
  %v620 = vunpack.c.l.b16 %v108
  %v621 = vunpack.c.l.b16 %v109
  %v622 = vunpack.c.l.b16 %v110
  %v623 = vunpack.c.l.b16 %v111
  %v624 = vunpack.c.l.b16 %v112
  %v625 = vunpack.c.l.b16 %v113
  %v626 = vunpack.c.l.b16 %v114
  %v627 = vunpack.c.l.b16 %v115
  %v628 = vunpack.c.l.b16 %v116
  %v629 = vunpack.c.l.b16 %v117
  %v630 = vunpack.c.l.b16 %v118
  %v631 = vunpack.c.l.b16 %v119
  %v632 = vunpack.c.l.b16 %v120
  %v633 = vunpack.c.l.b16 %v121
  %v634 = vunpack.c.l.b16 %v122
  %v635 = vunpack.c.l.b16 %v123
  %v636 = vunpack.c.l.b16 %v124
  %v637 = vunpack.c.l.b16 %v125
  %v638 = vunpack.c.l.b16 %v126
  %v639 = vunpack.c.l.b16 %v127
  %v640 = vunpack.c.l.b16 %v128
  %v641 = vunpack.c.l.b16 %v129
  %v642 = vunpack.c.l.b16 %v130
  %v643 = vunpack.c.l.b16 %v131
  %v644 = vunpack.c.l.b16 %v132
  %v645 = vunpack.c.l.b16 %v133
  %v646 = vunpack.c.l.b16 %v134
  %v647 = vunpack.c.l.b16 %v135
  %v648 = vunpack.c.l.b16 %v136
  %v649 = vunpack.c.l.b16 %v137
  %v650 = vunpack.c.l.b16 %v138
  %v651 = vunpack.c.l.b16 %v139
  %v652 = vunpack.c.l.b16 %v140
  %v653 = vunpack.c.l.b16 %v141
  %v654 = vunpack.c.l.b16 %v142
  %v655 = vunpack.c.l.b16 %v143
  %v656 = vunpack.c.l.b16 %v144
  %v657 = vunpack.c.l.b16 %v145
  %v658 = vunpack.c.l.b16 %v146
  %v659 = vunpack.c.l.b16 %v147
  %v660 = vunpack.c.l.b16 %v148
  %v661 = vunpack.c.l.b16 %v149
  %v662 = vunpack.c.l.b16 %v150
  %v663 = vunpack.c.l.b16 %v151
  %v664 = vunpack.c.l.b16 %v152
  %v665 = vunpack.c.l.b16 %v153
  %v666 = vunpack.c.l.b16 %v154
  %v667 = vunpack.c.l.b16 %v155
  %v668 = vunpack.c.l.b16 %v156
  %v669 = vunpack.c.l.b16 %v157
  %v670 = vunpack.c.l.b16 %v158
  %v671 = vunpack.c.l.b16 %v159
  %v672 = vunpack.c.l.b16 %v160
  %v673 = vunpack.c.l.b16 %v161
  %v674 = vunpack.c.l.b16 %v162
  %v675 = vunpack.c.l.b16 %v163
  %v676 = vunpack.c.l.b16 %v164
  %v677 = vunpack.c.l.b16 %v165
  %v678 = vunpack.c.l.b16 %v166
  %v679 = vunpack.c.l.b16 %v167
  %v680 = vunpack.c.l.b16 %v168
  %v681 = vunpack.c.l.b16 %v169
  %v682 = vunpack.c.l.b16 %v170
  %v683 = vunpack.c.l.b16 %v171
  %v684 = vunpack.c.l.b16 %v172
  %v685 = vunpack.c.l.b16 %v173
  %v686 = vunpack.c.l.b16 %v174
  %v687 = vunpack.c.l.b16 %v175
  %v688 = vunpack.c.l.b16 %v176
  %v689 = vunpack.c.l.b16 %v177
  %v690 = vunpack.c.l.b16 %v178
  %v691 = vunpack.c.l.b16 %v179
  %v692 = vunpack.c.l.b16 %v180
  %v693 = vunpack.c.l.b16 %v181
  %v694 = vunpack.c.l.b16 %v182
  %v695 = vunpack.c.l.b16 %v183
  %v696 = vunpack.c.l.b16 %v184
  %v697 = vunpack.c.l.b16 %v185
  %v698 = vunpack.c.l.b16 %v186
  %v699 = vunpack.c.l.b16 %v187
  %v700 = vunpack.c.l.b16 %v188
  %v701 = vunpack.c.l.b16 %v189
  %v702 = vunpack.c.l.b16 %v190
  %v703 = vunpack.c.l.b16 %v191
  %v704 = vunpack.c.l.b16 %v192
  %v705 = vpack.c.b16 %v594, %v593
  %v706 = vpack.c.b16 %v596, %v595
  %v707 = vpack.c.b16 %v598, %v597
  %v708 = vpack.c.b16 %v600, %v599
  %v709 = vpack.c.b16 %v602, %v601
  %v710 = vpack.c.b16 %v604, %v603
  %v711 = vpack.c.b16 %v606, %v605
  %v712 = vpack.c.b16 %v608, %v607
  %v713 = vpack.c.b16 %v610, %v609
  %v714 = vpack.c.b16 %v612, %v611
  %v715 = vpack.c.b16 %v614, %v613
  %v716 = vpack.c.b16 %v616, %v615
  %v717 = vpack.c.b16 %v618, %v617
  %v718 = vpack.c.b16 %v620, %v619
  %v719 = vpack.c.b16 %v622, %v621
  %v720 = vpack.c.b16 %v624, %v623
  %v721 = vpack.c.b16 %v626, %v625
  %v722 = vpack.c.b16 %v628, %v627
  %v723 = vpack.c.b16 %v630, %v629
  %v724 = vpack.c.b16 %v632, %v631
  %v725 = vpack.c.b16 %v634, %v633
  %v726 = vpack.c.b16 %v636, %v635
  %v727 = vpack.c.b16 %v638, %v637
  %v728 = vpack.c.b16 %v640, %v639
  %v729 = vpack.c.b16 %v642, %v641
  %v730 = vpack.c.b16 %v644, %v643
  %v731 = vpack.c.b16 %v646, %v645
  %v732 = vpack.c.b16 %v648, %v647
  %v733 = vpack.c.b16 %v650, %v649
  %v734 = vpack.c.b16 %v652, %v651
  %v735 = vpack.c.b16 %v654, %v653
  %v736 = vpack.c.b16 %v656, %v655
  %v737 = vpack.c.b16 %v658, %v657
  %v738 = vpack.c.b16 %v660, %v659
  %v739 = vpack.c.b16 %v662, %v661
  %v740 = vpack.c.b16 %v664, %v663
  %v741 = vpack.c.b16 %v666, %v665
  %v742 = vpack.c.b16 %v668, %v667
  %v743 = vpack.c.b16 %v670, %v669
  %v744 = vpack.c.b16 %v672, %v671
  %v745 = vpack.c.b16 %v674, %v673
  %v746 = vpack.c.b16 %v676, %v675
  %v747 = vpack.c.b16 %v678, %v677
  %v748 = vpack.c.b16 %v680, %v679
  %v749 = vpack.c.b16 %v682, %v681
  %v750 = vpack.c.b16 %v684, %v683
  %v751 = vpack.c.b16 %v686, %v685
  %v752 = vpack.c.b16 %v688, %v687
  %v753 = vpack.c.b16 %v690, %v689
  %v754 = vpack.c.b16 %v692, %v691
  %v755 = vpack.c.b16 %v694, %v693
  %v756 = vpack.c.b16 %v696, %v695
  %v757 = vpack.c.b16 %v698, %v697
  %v758 = vpack.c.b16 %v700, %v699
  %v759 = vpack.c.b16 %v702, %v701
  %v760 = vpack.c.b16 %v704, %v703
  %817 = vmatpush.bf16.msra.mxu0 %v712
  %818 = vmatpush.bf16.msra.mxu0 %v711
  %819 = vmatpush.bf16.msra.mxu0 %v710
  %820 = vmatpush.bf16.msra.mxu0 %v709
  %821 = vmatpush.bf16.msra.mxu0 %v708
  %822 = vmatpush.bf16.msra.mxu0 %v707
  %823 = vmatpush.bf16.msra.mxu0 %v706
  %824 = vmatpush.bf16.msra.mxu0 %v705
  %825 = vmatmul.bf16.gmra.mxu0 %v369
  %v826 = vpop.f32.mrf.mxu0
  %v827 = vadd.f32 0.0, %v826
  %v828 = vpop.f32.mrf.mxu0
  %v829 = vadd.f32 0.0, %v828
  %830 = vmatmul.bf16.gmra.mxu0 %v376
  %v831 = vpop.f32.mrf.mxu0
  %v832 = vadd.f32 0.0, %v831
  %v833 = vpop.f32.mrf.mxu0
  %v834 = vadd.f32 0.0, %v833
  %835 = vmatmul.bf16.gmra.mxu0 %v383
  %v836 = vpop.f32.mrf.mxu0
  %v837 = vadd.f32 0.0, %v836
  %v838 = vpop.f32.mrf.mxu0
  %v839 = vadd.f32 0.0, %v838
  %840 = vmatmul.bf16.gmra.mxu0 %v390
  %v841 = vpop.f32.mrf.mxu0
  %v842 = vadd.f32 0.0, %v841
  %v843 = vpop.f32.mrf.mxu0
  %v844 = vadd.f32 0.0, %v843
  %845 = vmatmul.bf16.gmra.mxu0 %v397
  %v846 = vpop.f32.mrf.mxu0
  %v847 = vadd.f32 0.0, %v846
  %v848 = vpop.f32.mrf.mxu0
  %v849 = vadd.f32 0.0, %v848
  %850 = vmatmul.bf16.gmra.mxu0 %v404
  %v851 = vpop.f32.mrf.mxu0
  %v852 = vadd.f32 0.0, %v851
  %v853 = vpop.f32.mrf.mxu0
  %v854 = vadd.f32 0.0, %v853
  %855 = vmatmul.bf16.gmra.mxu0 %v411
  %v856 = vpop.f32.mrf.mxu0
  %v857 = vadd.f32 0.0, %v856
  %v858 = vpop.f32.mrf.mxu0
  %v859 = vadd.f32 0.0, %v858
  %860 = vmatmul.bf16.gmra.mxu0 %v418
  %v861 = vpop.f32.mrf.mxu0
  %v862 = vadd.f32 0.0, %v861
  %v863 = vpop.f32.mrf.mxu0
  %v864 = vadd.f32 0.0, %v863
  %865 = vdwg.mxu0
  %866 = vmatpush.bf16.msra.mxu0 %v720
  %867 = vmatpush.bf16.msra.mxu0 %v719
  %868 = vmatpush.bf16.msra.mxu0 %v718
  %869 = vmatpush.bf16.msra.mxu0 %v717
  %870 = vmatpush.bf16.msra.mxu0 %v716
  %871 = vmatpush.bf16.msra.mxu0 %v715
  %872 = vmatpush.bf16.msra.mxu0 %v714
  %873 = vmatpush.bf16.msra.mxu0 %v713
  %874 = vmatmul.bf16.gmra.mxu0 %v370
  %v875 = vpop.f32.mrf.mxu0
  %v876 = vadd.f32 %v827, %v875
  %v877 = vpop.f32.mrf.mxu0
  %v878 = vadd.f32 %v829, %v877
  %879 = vmatmul.bf16.gmra.mxu0 %v377
  %v880 = vpop.f32.mrf.mxu0
  %v881 = vadd.f32 %v832, %v880
  %v882 = vpop.f32.mrf.mxu0
  %v883 = vadd.f32 %v834, %v882
  %884 = vmatmul.bf16.gmra.mxu0 %v384
  %v885 = vpop.f32.mrf.mxu0
  %v886 = vadd.f32 %v837, %v885
  %v887 = vpop.f32.mrf.mxu0
  %v888 = vadd.f32 %v839, %v887
  %889 = vmatmul.bf16.gmra.mxu0 %v391
  %v890 = vpop.f32.mrf.mxu0
  %v891 = vadd.f32 %v842, %v890
  %v892 = vpop.f32.mrf.mxu0
  %v893 = vadd.f32 %v844, %v892
  %894 = vmatmul.bf16.gmra.mxu0 %v398
  %v895 = vpop.f32.mrf.mxu0
  %v896 = vadd.f32 %v847, %v895
  %v897 = vpop.f32.mrf.mxu0
  %v898 = vadd.f32 %v849, %v897
  %899 = vmatmul.bf16.gmra.mxu0 %v405
  %v900 = vpop.f32.mrf.mxu0
  %v901 = vadd.f32 %v852, %v900
  %v902 = vpop.f32.mrf.mxu0
  %v903 = vadd.f32 %v854, %v902
  %904 = vmatmul.bf16.gmra.mxu0 %v412
  %v905 = vpop.f32.mrf.mxu0
  %v906 = vadd.f32 %v857, %v905
  %v907 = vpop.f32.mrf.mxu0
  %v908 = vadd.f32 %v859, %v907
  %909 = vmatmul.bf16.gmra.mxu0 %v419
  %v910 = vpop.f32.mrf.mxu0
  %v911 = vadd.f32 %v862, %v910
  %v912 = vpop.f32.mrf.mxu0
  %v913 = vadd.f32 %v864, %v912
  %914 = vdwg.mxu0
  %915 = vmatpush.bf16.msra.mxu0 %v728
  %916 = vmatpush.bf16.msra.mxu0 %v727
  %917 = vmatpush.bf16.msra.mxu0 %v726
  %918 = vmatpush.bf16.msra.mxu0 %v725
  %919 = vmatpush.bf16.msra.mxu0 %v724
  %920 = vmatpush.bf16.msra.mxu0 %v723
  %921 = vmatpush.bf16.msra.mxu0 %v722
  %922 = vmatpush.bf16.msra.mxu0 %v721
  %923 = vmatmul.bf16.gmra.mxu0 %v371
  %v924 = vpop.f32.mrf.mxu0
  %v925 = vadd.f32 %v876, %v924
  %v926 = vpop.f32.mrf.mxu0
  %v927 = vadd.f32 %v878, %v926
  %928 = vmatmul.bf16.gmra.mxu0 %v378
  %v929 = vpop.f32.mrf.mxu0
  %v930 = vadd.f32 %v881, %v929
  %v931 = vpop.f32.mrf.mxu0
  %v932 = vadd.f32 %v883, %v931
  %933 = vmatmul.bf16.gmra.mxu0 %v385
  %v934 = vpop.f32.mrf.mxu0
  %v935 = vadd.f32 %v886, %v934
  %v936 = vpop.f32.mrf.mxu0
  %v937 = vadd.f32 %v888, %v936
  %938 = vmatmul.bf16.gmra.mxu0 %v392
  %v939 = vpop.f32.mrf.mxu0
  %v940 = vadd.f32 %v891, %v939
  %v941 = vpop.f32.mrf.mxu0
  %v942 = vadd.f32 %v893, %v941
  %943 = vmatmul.bf16.gmra.mxu0 %v399
  %v944 = vpop.f32.mrf.mxu0
  %v945 = vadd.f32 %v896, %v944
  %v946 = vpop.f32.mrf.mxu0
  %v947 = vadd.f32 %v898, %v946
  %948 = vmatmul.bf16.gmra.mxu0 %v406
  %v949 = vpop.f32.mrf.mxu0
  %v950 = vadd.f32 %v901, %v949
  %v951 = vpop.f32.mrf.mxu0
  %v952 = vadd.f32 %v903, %v951
  %953 = vmatmul.bf16.gmra.mxu0 %v413
  %v954 = vpop.f32.mrf.mxu0
  %v955 = vadd.f32 %v906, %v954
  %v956 = vpop.f32.mrf.mxu0
  %v957 = vadd.f32 %v908, %v956
  %958 = vmatmul.bf16.gmra.mxu0 %v420
  %v959 = vpop.f32.mrf.mxu0
  %v960 = vadd.f32 %v911, %v959
  %v961 = vpop.f32.mrf.mxu0
  %v962 = vadd.f32 %v913, %v961
  %963 = vdwg.mxu0
  %964 = vmatpush.bf16.msra.mxu0 %v736
  %965 = vmatpush.bf16.msra.mxu0 %v735
  %966 = vmatpush.bf16.msra.mxu0 %v734
  %967 = vmatpush.bf16.msra.mxu0 %v733
  %968 = vmatpush.bf16.msra.mxu0 %v732
  %969 = vmatpush.bf16.msra.mxu0 %v731
  %970 = vmatpush.bf16.msra.mxu0 %v730
  %971 = vmatpush.bf16.msra.mxu0 %v729
  %972 = vmatmul.bf16.gmra.mxu0 %v372
  %v973 = vpop.f32.mrf.mxu0
  %v974 = vadd.f32 %v925, %v973
  %v975 = vpop.f32.mrf.mxu0
  %v976 = vadd.f32 %v927, %v975
  %977 = vmatmul.bf16.gmra.mxu0 %v379
  %v978 = vpop.f32.mrf.mxu0
  %v979 = vadd.f32 %v930, %v978
  %v980 = vpop.f32.mrf.mxu0
  %v981 = vadd.f32 %v932, %v980
  %982 = vmatmul.bf16.gmra.mxu0 %v386
  %v983 = vpop.f32.mrf.mxu0
  %v984 = vadd.f32 %v935, %v983
  %v985 = vpop.f32.mrf.mxu0
  %v986 = vadd.f32 %v937, %v985
  %987 = vmatmul.bf16.gmra.mxu0 %v393
  %v988 = vpop.f32.mrf.mxu0
  %v989 = vadd.f32 %v940, %v988
  %v990 = vpop.f32.mrf.mxu0
  %v991 = vadd.f32 %v942, %v990
  %992 = vmatmul.bf16.gmra.mxu0 %v400
  %v993 = vpop.f32.mrf.mxu0
  %v994 = vadd.f32 %v945, %v993
  %v995 = vpop.f32.mrf.mxu0
  %v996 = vadd.f32 %v947, %v995
  %997 = vmatmul.bf16.gmra.mxu0 %v407
  %v998 = vpop.f32.mrf.mxu0
  %v999 = vadd.f32 %v950, %v998
  %v1000 = vpop.f32.mrf.mxu0
  %v1001 = vadd.f32 %v952, %v1000
  %1002 = vmatmul.bf16.gmra.mxu0 %v414
  %v1003 = vpop.f32.mrf.mxu0
  %v1004 = vadd.f32 %v955, %v1003
  %v1005 = vpop.f32.mrf.mxu0
  %v1006 = vadd.f32 %v957, %v1005
  %1007 = vmatmul.bf16.gmra.mxu0 %v421
  %v1008 = vpop.f32.mrf.mxu0
  %v1009 = vadd.f32 %v960, %v1008
  %v1010 = vpop.f32.mrf.mxu0
  %v1011 = vadd.f32 %v962, %v1010
  %1012 = vdwg.mxu0
  %1013 = vmatpush.bf16.msra.mxu0 %v744
  %1014 = vmatpush.bf16.msra.mxu0 %v743
  %1015 = vmatpush.bf16.msra.mxu0 %v742
  %1016 = vmatpush.bf16.msra.mxu0 %v741
  %1017 = vmatpush.bf16.msra.mxu0 %v740
  %1018 = vmatpush.bf16.msra.mxu0 %v739
  %1019 = vmatpush.bf16.msra.mxu0 %v738
  %1020 = vmatpush.bf16.msra.mxu0 %v737
  %1021 = vmatmul.bf16.gmra.mxu0 %v373
  %v1022 = vpop.f32.mrf.mxu0
  %v1023 = vadd.f32 %v974, %v1022
  %v1024 = vpop.f32.mrf.mxu0
  %v1025 = vadd.f32 %v976, %v1024
  %1026 = vmatmul.bf16.gmra.mxu0 %v380
  %v1027 = vpop.f32.mrf.mxu0
  %v1028 = vadd.f32 %v979, %v1027
  %v1029 = vpop.f32.mrf.mxu0
  %v1030 = vadd.f32 %v981, %v1029
  %1031 = vmatmul.bf16.gmra.mxu0 %v387
  %v1032 = vpop.f32.mrf.mxu0
  %v1033 = vadd.f32 %v984, %v1032
  %v1034 = vpop.f32.mrf.mxu0
  %v1035 = vadd.f32 %v986, %v1034
  %1036 = vmatmul.bf16.gmra.mxu0 %v394
  %v1037 = vpop.f32.mrf.mxu0
  %v1038 = vadd.f32 %v989, %v1037
  %v1039 = vpop.f32.mrf.mxu0
  %v1040 = vadd.f32 %v991, %v1039
  %1041 = vmatmul.bf16.gmra.mxu0 %v401
  %v1042 = vpop.f32.mrf.mxu0
  %v1043 = vadd.f32 %v994, %v1042
  %v1044 = vpop.f32.mrf.mxu0
  %v1045 = vadd.f32 %v996, %v1044
  %1046 = vmatmul.bf16.gmra.mxu0 %v408
  %v1047 = vpop.f32.mrf.mxu0
  %v1048 = vadd.f32 %v999, %v1047
  %v1049 = vpop.f32.mrf.mxu0
  %v1050 = vadd.f32 %v1001, %v1049
  %1051 = vmatmul.bf16.gmra.mxu0 %v415
  %v1052 = vpop.f32.mrf.mxu0
  %v1053 = vadd.f32 %v1004, %v1052
  %v1054 = vpop.f32.mrf.mxu0
  %v1055 = vadd.f32 %v1006, %v1054
  %1056 = vmatmul.bf16.gmra.mxu0 %v422
  %v1057 = vpop.f32.mrf.mxu0
  %v1058 = vadd.f32 %v1009, %v1057
  %v1059 = vpop.f32.mrf.mxu0
  %v1060 = vadd.f32 %v1011, %v1059
  %1061 = vdwg.mxu0
  %1062 = vmatpush.bf16.msra.mxu0 %v752
  %1063 = vmatpush.bf16.msra.mxu0 %v751
  %1064 = vmatpush.bf16.msra.mxu0 %v750
  %1065 = vmatpush.bf16.msra.mxu0 %v749
  %1066 = vmatpush.bf16.msra.mxu0 %v748
  %1067 = vmatpush.bf16.msra.mxu0 %v747
  %1068 = vmatpush.bf16.msra.mxu0 %v746
  %1069 = vmatpush.bf16.msra.mxu0 %v745
  %1070 = vmatmul.bf16.gmra.mxu0 %v374
  %v1071 = vpop.f32.mrf.mxu0
  %v1072 = vadd.f32 %v1023, %v1071
  %v1073 = vpop.f32.mrf.mxu0
  %v1074 = vadd.f32 %v1025, %v1073
  %1075 = vmatmul.bf16.gmra.mxu0 %v381
  %v1076 = vpop.f32.mrf.mxu0
  %v1077 = vadd.f32 %v1028, %v1076
  %v1078 = vpop.f32.mrf.mxu0
  %v1079 = vadd.f32 %v1030, %v1078
  %1080 = vmatmul.bf16.gmra.mxu0 %v388
  %v1081 = vpop.f32.mrf.mxu0
  %v1082 = vadd.f32 %v1033, %v1081
  %v1083 = vpop.f32.mrf.mxu0
  %v1084 = vadd.f32 %v1035, %v1083
  %1085 = vmatmul.bf16.gmra.mxu0 %v395
  %v1086 = vpop.f32.mrf.mxu0
  %v1087 = vadd.f32 %v1038, %v1086
  %v1088 = vpop.f32.mrf.mxu0
  %v1089 = vadd.f32 %v1040, %v1088
  %1090 = vmatmul.bf16.gmra.mxu0 %v402
  %v1091 = vpop.f32.mrf.mxu0
  %v1092 = vadd.f32 %v1043, %v1091
  %v1093 = vpop.f32.mrf.mxu0
  %v1094 = vadd.f32 %v1045, %v1093
  %1095 = vmatmul.bf16.gmra.mxu0 %v409
  %v1096 = vpop.f32.mrf.mxu0
  %v1097 = vadd.f32 %v1048, %v1096
  %v1098 = vpop.f32.mrf.mxu0
  %v1099 = vadd.f32 %v1050, %v1098
  %1100 = vmatmul.bf16.gmra.mxu0 %v416
  %v1101 = vpop.f32.mrf.mxu0
  %v1102 = vadd.f32 %v1053, %v1101
  %v1103 = vpop.f32.mrf.mxu0
  %v1104 = vadd.f32 %v1055, %v1103
  %1105 = vmatmul.bf16.gmra.mxu0 %v423
  %v1106 = vpop.f32.mrf.mxu0
  %v1107 = vadd.f32 %v1058, %v1106
  %v1108 = vpop.f32.mrf.mxu0
  %v1109 = vadd.f32 %v1060, %v1108
  %1110 = vdwg.mxu0
  %1111 = vmatpush.bf16.msra.mxu0 %v760
  %1112 = vmatpush.bf16.msra.mxu0 %v759
  %1113 = vmatpush.bf16.msra.mxu0 %v758
  %1114 = vmatpush.bf16.msra.mxu0 %v757
  %1115 = vmatpush.bf16.msra.mxu0 %v756
  %1116 = vmatpush.bf16.msra.mxu0 %v755
  %1117 = vmatpush.bf16.msra.mxu0 %v754
  %1118 = vmatpush.bf16.msra.mxu0 %v753
  %1119 = vmatmul.bf16.gmra.mxu0 %v375
  %v1120 = vpop.f32.mrf.mxu0
  %v1121 = vadd.f32 %v1072, %v1120
  %v1122 = vpop.f32.mrf.mxu0
  %v1123 = vadd.f32 %v1074, %v1122
  %1124 = vmatmul.bf16.gmra.mxu0 %v382
  %v1125 = vpop.f32.mrf.mxu0
  %v1126 = vadd.f32 %v1077, %v1125
  %v1127 = vpop.f32.mrf.mxu0
  %v1128 = vadd.f32 %v1079, %v1127
  %1129 = vmatmul.bf16.gmra.mxu0 %v389
  %v1130 = vpop.f32.mrf.mxu0
  %v1131 = vadd.f32 %v1082, %v1130
  %v1132 = vpop.f32.mrf.mxu0
  %v1133 = vadd.f32 %v1084, %v1132
  %1134 = vmatmul.bf16.gmra.mxu0 %v396
  %v1135 = vpop.f32.mrf.mxu0
  %v1136 = vadd.f32 %v1087, %v1135
  %v1137 = vpop.f32.mrf.mxu0
  %v1138 = vadd.f32 %v1089, %v1137
  %1139 = vmatmul.bf16.gmra.mxu0 %v403
  %v1140 = vpop.f32.mrf.mxu0
  %v1141 = vadd.f32 %v1092, %v1140
  %v1142 = vpop.f32.mrf.mxu0
  %v1143 = vadd.f32 %v1094, %v1142
  %1144 = vmatmul.bf16.gmra.mxu0 %v410
  %v1145 = vpop.f32.mrf.mxu0
  %v1146 = vadd.f32 %v1097, %v1145
  %v1147 = vpop.f32.mrf.mxu0
  %v1148 = vadd.f32 %v1099, %v1147
  %1149 = vmatmul.bf16.gmra.mxu0 %v417
  %v1150 = vpop.f32.mrf.mxu0
  %v1151 = vadd.f32 %v1102, %v1150
  %v1152 = vpop.f32.mrf.mxu0
  %v1153 = vadd.f32 %v1104, %v1152
  %1154 = vmatmul.bf16.gmra.mxu0 %v424
  %v1155 = vpop.f32.mrf.mxu0
  %v1156 = vadd.f32 %v1107, %v1155
  %v1157 = vpop.f32.mrf.mxu0
  %v1158 = vadd.f32 %v1109, %v1157
  %1159 = vdwg.mxu0
  %v1160 = vld [vmem:[%s2] sm:$0x1]
  %v1162 = vperm.slane %v1160, 0
  %v1164 = vmul.f32 %v1121, %v1162
  %v1165 = vmul.f32 %v1123, %v1162
  %v1166 = vmul.f32 %v1126, %v1162
  %v1167 = vmul.f32 %v1128, %v1162
  %v1168 = vmul.f32 %v1131, %v1162
  %v1169 = vmul.f32 %v1133, %v1162
  %v1170 = vmul.f32 %v1136, %v1162
  %v1171 = vmul.f32 %v1138, %v1162
  %v1172 = vmul.f32 %v1141, %v1162
  %v1173 = vmul.f32 %v1143, %v1162
  %v1174 = vmul.f32 %v1146, %v1162
  %v1175 = vmul.f32 %v1148, %v1162
  %v1176 = vmul.f32 %v1151, %v1162
  %v1177 = vmul.f32 %v1153, %v1162
  %v1178 = vmul.f32 %v1156, %v1162
  %v1179 = vmul.f32 %v1158, %v1162
  %v1180 = vld [vmem:[%s3] sm:$0x1]
  %v1182 = vperm.slane %v1180, 0
  %v1184 = vadd.f32 %v1164, %v1182
  %v1185 = vadd.f32 %v1165, %v1182
  %v1186 = vadd.f32 %v1166, %v1182
  %v1187 = vadd.f32 %v1167, %v1182
  %v1188 = vadd.f32 %v1168, %v1182
  %v1189 = vadd.f32 %v1169, %v1182
  %v1190 = vadd.f32 %v1170, %v1182
  %v1191 = vadd.f32 %v1171, %v1182
  %v1192 = vadd.f32 %v1172, %v1182
  %v1193 = vadd.f32 %v1173, %v1182
  %v1194 = vadd.f32 %v1174, %v1182
  %v1195 = vadd.f32 %v1175, %v1182
  %v1196 = vadd.f32 %v1176, %v1182
  %v1197 = vadd.f32 %v1177, %v1182
  %v1198 = vadd.f32 %v1178, %v1182
  %v1199 = vadd.f32 %v1179, %v1182
  %v1200 = vmul.f32 %v1184, 0.5
  %v1201 = vmul.f32 %v1185, 0.5
  %v1202 = vmul.f32 %v1186, 0.5
  %v1203 = vmul.f32 %v1187, 0.5
  %v1204 = vmul.f32 %v1188, 0.5
  %v1205 = vmul.f32 %v1189, 0.5
  %v1206 = vmul.f32 %v1190, 0.5
  %v1207 = vmul.f32 %v1191, 0.5
  %v1208 = vmul.f32 %v1192, 0.5
  %v1209 = vmul.f32 %v1193, 0.5
  %v1210 = vmul.f32 %v1194, 0.5
  %v1211 = vmul.f32 %v1195, 0.5
  %v1212 = vmul.f32 %v1196, 0.5
  %v1213 = vmul.f32 %v1197, 0.5
  %v1214 = vmul.f32 %v1198, 0.5
  %v1215 = vmul.f32 %v1199, 0.5
  %v1216 = vmul.f32 %v1184, 0.70710677
  %v1217 = vmul.f32 %v1185, 0.70710677
  %v1218 = vmul.f32 %v1186, 0.70710677
  %v1219 = vmul.f32 %v1187, 0.70710677
  %v1220 = vmul.f32 %v1188, 0.70710677
  %v1221 = vmul.f32 %v1189, 0.70710677
  %v1222 = vmul.f32 %v1190, 0.70710677
  %v1223 = vmul.f32 %v1191, 0.70710677
  %v1224 = vmul.f32 %v1192, 0.70710677
  %v1225 = vmul.f32 %v1193, 0.70710677
  %v1226 = vmul.f32 %v1194, 0.70710677
  %v1227 = vmul.f32 %v1195, 0.70710677
  %v1228 = vmul.f32 %v1196, 0.70710677
  %v1229 = vmul.f32 %v1197, 0.70710677
  %v1230 = vmul.f32 %v1198, 0.70710677
  %v1231 = vmul.f32 %v1199, 0.70710677
  %v1232 = vmul.f32 %v1216, %v1216
  %v1233 = vmin.f32 16.0, %v1232
  %v1234 = vmul.f32 %v1233, 2.1237322e-06
  %v1235 = vadd.f32 %v1234, 0.00028619796
  %v1236 = vmul.f32 %v1233, %v1235
  %v1237 = vadd.f32 %v1236, 0.0036580483
  %v1238 = vmul.f32 %v1233, %v1237
  %v1239 = vadd.f32 %v1238, 0.05243302
  %v1240 = vmul.f32 %v1233, %v1239
  %v1241 = vadd.f32 %v1240, 0.18741608
  %v1242 = vmul.f32 %v1233, %v1241
  %v1243 = vadd.f32 %v1242, 1.1283791
  %v1244 = vmul.f32 %v1216, %v1243
  %v1245 = vmul.f32 %v1233, 3.8918573e-05
  %v1246 = vadd.f32 %v1245, 0.001143296
  %v1247 = vmul.f32 %v1233, %v1246
  %v1248 = vadd.f32 %v1247, 0.014752088
  %v1249 = vmul.f32 %v1233, %v1248
  %v1250 = vadd.f32 %v1249, 0.112945676
  %v1251 = vmul.f32 %v1233, %v1250
  %v1252 = vadd.f32 %v1251, 0.4994258
  %v1253 = vmul.f32 %v1233, %v1252
  %v1254 = vadd.f32 %v1253, 1.0
  %v1255 = vrcp.pop %v1254
  %v1256 = vmul.f32 %v1254, %v1255
  %v1257 = vsub.f32 1.0, %v1256
  %v1258 = vmul.f32 %v1255, %v1257
  %v1259 = vadd.f32 %v1255, %v1258
  %vm1260 = vweird.f32 %v1254
  %vm1261 = vweird.f32 %v1255
  %vm1262 = vmor %vm1260, %vm1261
  %v1263 = vsel %vm1262, %v1255, %v1259
  %v1264 = vand.u32 2147483647, %v1254
  %vm1265 = vcmp.eq.f32.partialorder %v1264, 8.507059e+37
  %v1266 = vand.u32 %v1254, 2147483648
  %v1267 = vor.u32 1.1754944e-38, %v1266
  %v1268 = vsel %vm1265, %v1267, %v1263
  %v1269 = vmul.f32 %v1244, %v1268
  %v1270 = vmin.f32 %v1269, 1.0
  %v1271 = vmax.f32 %v1270, -1.0
  %v1272 = vmul.f32 %v1217, %v1217
  %v1273 = vmin.f32 16.0, %v1272
  %v1274 = vmul.f32 %v1273, 2.1237322e-06
  %v1275 = vadd.f32 %v1274, 0.00028619796
  %v1276 = vmul.f32 %v1273, %v1275
  %v1277 = vadd.f32 %v1276, 0.0036580483
  %v1278 = vmul.f32 %v1273, %v1277
  %v1279 = vadd.f32 %v1278, 0.05243302
  %v1280 = vmul.f32 %v1273, %v1279
  %v1281 = vadd.f32 %v1280, 0.18741608
  %v1282 = vmul.f32 %v1273, %v1281
  %v1283 = vadd.f32 %v1282, 1.1283791
  %v1284 = vmul.f32 %v1217, %v1283
  %v1285 = vmul.f32 %v1273, 3.8918573e-05
  %v1286 = vadd.f32 %v1285, 0.001143296
  %v1287 = vmul.f32 %v1273, %v1286
  %v1288 = vadd.f32 %v1287, 0.014752088
  %v1289 = vmul.f32 %v1273, %v1288
  %v1290 = vadd.f32 %v1289, 0.112945676
  %v1291 = vmul.f32 %v1273, %v1290
  %v1292 = vadd.f32 %v1291, 0.4994258
  %v1293 = vmul.f32 %v1273, %v1292
  %v1294 = vadd.f32 %v1293, 1.0
  %v1295 = vrcp.pop %v1294
  %v1296 = vmul.f32 %v1294, %v1295
  %v1297 = vsub.f32 1.0, %v1296
  %v1298 = vmul.f32 %v1295, %v1297
  %v1299 = vadd.f32 %v1295, %v1298
  %vm1300 = vweird.f32 %v1294
  %vm1301 = vweird.f32 %v1295
  %vm1302 = vmor %vm1300, %vm1301
  %v1303 = vsel %vm1302, %v1295, %v1299
  %v1304 = vand.u32 2147483647, %v1294
  %vm1305 = vcmp.eq.f32.partialorder %v1304, 8.507059e+37
  %v1306 = vand.u32 %v1294, 2147483648
  %v1307 = vor.u32 1.1754944e-38, %v1306
  %v1308 = vsel %vm1305, %v1307, %v1303
  %v1309 = vmul.f32 %v1284, %v1308
  %v1310 = vmin.f32 %v1309, 1.0
  %v1311 = vmax.f32 %v1310, -1.0
  %v1312 = vmul.f32 %v1218, %v1218
  %v1313 = vmin.f32 16.0, %v1312
  %v1314 = vmul.f32 %v1313, 2.1237322e-06
  %v1315 = vadd.f32 %v1314, 0.00028619796
  %v1316 = vmul.f32 %v1313, %v1315
  %v1317 = vadd.f32 %v1316, 0.0036580483
  %v1318 = vmul.f32 %v1313, %v1317
  %v1319 = vadd.f32 %v1318, 0.05243302
  %v1320 = vmul.f32 %v1313, %v1319
  %v1321 = vadd.f32 %v1320, 0.18741608
  %v1322 = vmul.f32 %v1313, %v1321
  %v1323 = vadd.f32 %v1322, 1.1283791
  %v1324 = vmul.f32 %v1218, %v1323
  %v1325 = vmul.f32 %v1313, 3.8918573e-05
  %v1326 = vadd.f32 %v1325, 0.001143296
  %v1327 = vmul.f32 %v1313, %v1326
  %v1328 = vadd.f32 %v1327, 0.014752088
  %v1329 = vmul.f32 %v1313, %v1328
  %v1330 = vadd.f32 %v1329, 0.112945676
  %v1331 = vmul.f32 %v1313, %v1330
  %v1332 = vadd.f32 %v1331, 0.4994258
  %v1333 = vmul.f32 %v1313, %v1332
  %v1334 = vadd.f32 %v1333, 1.0
  %v1335 = vrcp.pop %v1334
  %v1336 = vmul.f32 %v1334, %v1335
  %v1337 = vsub.f32 1.0, %v1336
  %v1338 = vmul.f32 %v1335, %v1337
  %v1339 = vadd.f32 %v1335, %v1338
  %vm1340 = vweird.f32 %v1334
  %vm1341 = vweird.f32 %v1335
  %vm1342 = vmor %vm1340, %vm1341
  %v1343 = vsel %vm1342, %v1335, %v1339
  %v1344 = vand.u32 2147483647, %v1334
  %vm1345 = vcmp.eq.f32.partialorder %v1344, 8.507059e+37
  %v1346 = vand.u32 %v1334, 2147483648
  %v1347 = vor.u32 1.1754944e-38, %v1346
  %v1348 = vsel %vm1345, %v1347, %v1343
  %v1349 = vmul.f32 %v1324, %v1348
  %v1350 = vmin.f32 %v1349, 1.0
  %v1351 = vmax.f32 %v1350, -1.0
  %v1352 = vmul.f32 %v1219, %v1219
  %v1353 = vmin.f32 16.0, %v1352
  %v1354 = vmul.f32 %v1353, 2.1237322e-06
  %v1355 = vadd.f32 %v1354, 0.00028619796
  %v1356 = vmul.f32 %v1353, %v1355
  %v1357 = vadd.f32 %v1356, 0.0036580483
  %v1358 = vmul.f32 %v1353, %v1357
  %v1359 = vadd.f32 %v1358, 0.05243302
  %v1360 = vmul.f32 %v1353, %v1359
  %v1361 = vadd.f32 %v1360, 0.18741608
  %v1362 = vmul.f32 %v1353, %v1361
  %v1363 = vadd.f32 %v1362, 1.1283791
  %v1364 = vmul.f32 %v1219, %v1363
  %v1365 = vmul.f32 %v1353, 3.8918573e-05
  %v1366 = vadd.f32 %v1365, 0.001143296
  %v1367 = vmul.f32 %v1353, %v1366
  %v1368 = vadd.f32 %v1367, 0.014752088
  %v1369 = vmul.f32 %v1353, %v1368
  %v1370 = vadd.f32 %v1369, 0.112945676
  %v1371 = vmul.f32 %v1353, %v1370
  %v1372 = vadd.f32 %v1371, 0.4994258
  %v1373 = vmul.f32 %v1353, %v1372
  %v1374 = vadd.f32 %v1373, 1.0
  %v1375 = vrcp.pop %v1374
  %v1376 = vmul.f32 %v1374, %v1375
  %v1377 = vsub.f32 1.0, %v1376
  %v1378 = vmul.f32 %v1375, %v1377
  %v1379 = vadd.f32 %v1375, %v1378
  %vm1380 = vweird.f32 %v1374
  %vm1381 = vweird.f32 %v1375
  %vm1382 = vmor %vm1380, %vm1381
  %v1383 = vsel %vm1382, %v1375, %v1379
  %v1384 = vand.u32 2147483647, %v1374
  %vm1385 = vcmp.eq.f32.partialorder %v1384, 8.507059e+37
  %v1386 = vand.u32 %v1374, 2147483648
  %v1387 = vor.u32 1.1754944e-38, %v1386
  %v1388 = vsel %vm1385, %v1387, %v1383
  %v1389 = vmul.f32 %v1364, %v1388
  %v1390 = vmin.f32 %v1389, 1.0
  %v1391 = vmax.f32 %v1390, -1.0
  %v1392 = vmul.f32 %v1220, %v1220
  %v1393 = vmin.f32 16.0, %v1392
  %v1394 = vmul.f32 %v1393, 2.1237322e-06
  %v1395 = vadd.f32 %v1394, 0.00028619796
  %v1396 = vmul.f32 %v1393, %v1395
  %v1397 = vadd.f32 %v1396, 0.0036580483
  %v1398 = vmul.f32 %v1393, %v1397
  %v1399 = vadd.f32 %v1398, 0.05243302
  %v1400 = vmul.f32 %v1393, %v1399
  %v1401 = vadd.f32 %v1400, 0.18741608
  %v1402 = vmul.f32 %v1393, %v1401
  %v1403 = vadd.f32 %v1402, 1.1283791
  %v1404 = vmul.f32 %v1220, %v1403
  %v1405 = vmul.f32 %v1393, 3.8918573e-05
  %v1406 = vadd.f32 %v1405, 0.001143296
  %v1407 = vmul.f32 %v1393, %v1406
  %v1408 = vadd.f32 %v1407, 0.014752088
  %v1409 = vmul.f32 %v1393, %v1408
  %v1410 = vadd.f32 %v1409, 0.112945676
  %v1411 = vmul.f32 %v1393, %v1410
  %v1412 = vadd.f32 %v1411, 0.4994258
  %v1413 = vmul.f32 %v1393, %v1412
  %v1414 = vadd.f32 %v1413, 1.0
  %v1415 = vrcp.pop %v1414
  %v1416 = vmul.f32 %v1414, %v1415
  %v1417 = vsub.f32 1.0, %v1416
  %v1418 = vmul.f32 %v1415, %v1417
  %v1419 = vadd.f32 %v1415, %v1418
  %vm1420 = vweird.f32 %v1414
  %vm1421 = vweird.f32 %v1415
  %vm1422 = vmor %vm1420, %vm1421
  %v1423 = vsel %vm1422, %v1415, %v1419
  %v1424 = vand.u32 2147483647, %v1414
  %vm1425 = vcmp.eq.f32.partialorder %v1424, 8.507059e+37
  %v1426 = vand.u32 %v1414, 2147483648
  %v1427 = vor.u32 1.1754944e-38, %v1426
  %v1428 = vsel %vm1425, %v1427, %v1423
  %v1429 = vmul.f32 %v1404, %v1428
  %v1430 = vmin.f32 %v1429, 1.0
  %v1431 = vmax.f32 %v1430, -1.0
  %v1432 = vmul.f32 %v1221, %v1221
  %v1433 = vmin.f32 16.0, %v1432
  %v1434 = vmul.f32 %v1433, 2.1237322e-06
  %v1435 = vadd.f32 %v1434, 0.00028619796
  %v1436 = vmul.f32 %v1433, %v1435
  %v1437 = vadd.f32 %v1436, 0.0036580483
  %v1438 = vmul.f32 %v1433, %v1437
  %v1439 = vadd.f32 %v1438, 0.05243302
  %v1440 = vmul.f32 %v1433, %v1439
  %v1441 = vadd.f32 %v1440, 0.18741608
  %v1442 = vmul.f32 %v1433, %v1441
  %v1443 = vadd.f32 %v1442, 1.1283791
  %v1444 = vmul.f32 %v1221, %v1443
  %v1445 = vmul.f32 %v1433, 3.8918573e-05
  %v1446 = vadd.f32 %v1445, 0.001143296
  %v1447 = vmul.f32 %v1433, %v1446
  %v1448 = vadd.f32 %v1447, 0.014752088
  %v1449 = vmul.f32 %v1433, %v1448
  %v1450 = vadd.f32 %v1449, 0.112945676
  %v1451 = vmul.f32 %v1433, %v1450
  %v1452 = vadd.f32 %v1451, 0.4994258
  %v1453 = vmul.f32 %v1433, %v1452
  %v1454 = vadd.f32 %v1453, 1.0
  %v1455 = vrcp.pop %v1454
  %v1456 = vmul.f32 %v1454, %v1455
  %v1457 = vsub.f32 1.0, %v1456
  %v1458 = vmul.f32 %v1455, %v1457
  %v1459 = vadd.f32 %v1455, %v1458
  %vm1460 = vweird.f32 %v1454
  %vm1461 = vweird.f32 %v1455
  %vm1462 = vmor %vm1460, %vm1461
  %v1463 = vsel %vm1462, %v1455, %v1459
  %v1464 = vand.u32 2147483647, %v1454
  %vm1465 = vcmp.eq.f32.partialorder %v1464, 8.507059e+37
  %v1466 = vand.u32 %v1454, 2147483648
  %v1467 = vor.u32 1.1754944e-38, %v1466
  %v1468 = vsel %vm1465, %v1467, %v1463
  %v1469 = vmul.f32 %v1444, %v1468
  %v1470 = vmin.f32 %v1469, 1.0
  %v1471 = vmax.f32 %v1470, -1.0
  %v1472 = vmul.f32 %v1222, %v1222
  %v1473 = vmin.f32 16.0, %v1472
  %v1474 = vmul.f32 %v1473, 2.1237322e-06
  %v1475 = vadd.f32 %v1474, 0.00028619796
  %v1476 = vmul.f32 %v1473, %v1475
  %v1477 = vadd.f32 %v1476, 0.0036580483
  %v1478 = vmul.f32 %v1473, %v1477
  %v1479 = vadd.f32 %v1478, 0.05243302
  %v1480 = vmul.f32 %v1473, %v1479
  %v1481 = vadd.f32 %v1480, 0.18741608
  %v1482 = vmul.f32 %v1473, %v1481
  %v1483 = vadd.f32 %v1482, 1.1283791
  %v1484 = vmul.f32 %v1222, %v1483
  %v1485 = vmul.f32 %v1473, 3.8918573e-05
  %v1486 = vadd.f32 %v1485, 0.001143296
  %v1487 = vmul.f32 %v1473, %v1486
  %v1488 = vadd.f32 %v1487, 0.014752088
  %v1489 = vmul.f32 %v1473, %v1488
  %v1490 = vadd.f32 %v1489, 0.112945676
  %v1491 = vmul.f32 %v1473, %v1490
  %v1492 = vadd.f32 %v1491, 0.4994258
  %v1493 = vmul.f32 %v1473, %v1492
  %v1494 = vadd.f32 %v1493, 1.0
  %v1495 = vrcp.pop %v1494
  %v1496 = vmul.f32 %v1494, %v1495
  %v1497 = vsub.f32 1.0, %v1496
  %v1498 = vmul.f32 %v1495, %v1497
  %v1499 = vadd.f32 %v1495, %v1498
  %vm1500 = vweird.f32 %v1494
  %vm1501 = vweird.f32 %v1495
  %vm1502 = vmor %vm1500, %vm1501
  %v1503 = vsel %vm1502, %v1495, %v1499
  %v1504 = vand.u32 2147483647, %v1494
  %vm1505 = vcmp.eq.f32.partialorder %v1504, 8.507059e+37
  %v1506 = vand.u32 %v1494, 2147483648
  %v1507 = vor.u32 1.1754944e-38, %v1506
  %v1508 = vsel %vm1505, %v1507, %v1503
  %v1509 = vmul.f32 %v1484, %v1508
  %v1510 = vmin.f32 %v1509, 1.0
  %v1511 = vmax.f32 %v1510, -1.0
  %v1512 = vmul.f32 %v1223, %v1223
  %v1513 = vmin.f32 16.0, %v1512
  %v1514 = vmul.f32 %v1513, 2.1237322e-06
  %v1515 = vadd.f32 %v1514, 0.00028619796
  %v1516 = vmul.f32 %v1513, %v1515
  %v1517 = vadd.f32 %v1516, 0.0036580483
  %v1518 = vmul.f32 %v1513, %v1517
  %v1519 = vadd.f32 %v1518, 0.05243302
  %v1520 = vmul.f32 %v1513, %v1519
  %v1521 = vadd.f32 %v1520, 0.18741608
  %v1522 = vmul.f32 %v1513, %v1521
  %v1523 = vadd.f32 %v1522, 1.1283791
  %v1524 = vmul.f32 %v1223, %v1523
  %v1525 = vmul.f32 %v1513, 3.8918573e-05
  %v1526 = vadd.f32 %v1525, 0.001143296
  %v1527 = vmul.f32 %v1513, %v1526
  %v1528 = vadd.f32 %v1527, 0.014752088
  %v1529 = vmul.f32 %v1513, %v1528
  %v1530 = vadd.f32 %v1529, 0.112945676
  %v1531 = vmul.f32 %v1513, %v1530
  %v1532 = vadd.f32 %v1531, 0.4994258
  %v1533 = vmul.f32 %v1513, %v1532
  %v1534 = vadd.f32 %v1533, 1.0
  %v1535 = vrcp.pop %v1534
  %v1536 = vmul.f32 %v1534, %v1535
  %v1537 = vsub.f32 1.0, %v1536
  %v1538 = vmul.f32 %v1535, %v1537
  %v1539 = vadd.f32 %v1535, %v1538
  %vm1540 = vweird.f32 %v1534
  %vm1541 = vweird.f32 %v1535
  %vm1542 = vmor %vm1540, %vm1541
  %v1543 = vsel %vm1542, %v1535, %v1539
  %v1544 = vand.u32 2147483647, %v1534
  %vm1545 = vcmp.eq.f32.partialorder %v1544, 8.507059e+37
  %v1546 = vand.u32 %v1534, 2147483648
  %v1547 = vor.u32 1.1754944e-38, %v1546
  %v1548 = vsel %vm1545, %v1547, %v1543
  %v1549 = vmul.f32 %v1524, %v1548
  %v1550 = vmin.f32 %v1549, 1.0
  %v1551 = vmax.f32 %v1550, -1.0
  %v1552 = vmul.f32 %v1224, %v1224
  %v1553 = vmin.f32 16.0, %v1552
  %v1554 = vmul.f32 %v1553, 2.1237322e-06
  %v1555 = vadd.f32 %v1554, 0.00028619796
  %v1556 = vmul.f32 %v1553, %v1555
  %v1557 = vadd.f32 %v1556, 0.0036580483
  %v1558 = vmul.f32 %v1553, %v1557
  %v1559 = vadd.f32 %v1558, 0.05243302
  %v1560 = vmul.f32 %v1553, %v1559
  %v1561 = vadd.f32 %v1560, 0.18741608
  %v1562 = vmul.f32 %v1553, %v1561
  %v1563 = vadd.f32 %v1562, 1.1283791
  %v1564 = vmul.f32 %v1224, %v1563
  %v1565 = vmul.f32 %v1553, 3.8918573e-05
  %v1566 = vadd.f32 %v1565, 0.001143296
  %v1567 = vmul.f32 %v1553, %v1566
  %v1568 = vadd.f32 %v1567, 0.014752088
  %v1569 = vmul.f32 %v1553, %v1568
  %v1570 = vadd.f32 %v1569, 0.112945676
  %v1571 = vmul.f32 %v1553, %v1570
  %v1572 = vadd.f32 %v1571, 0.4994258
  %v1573 = vmul.f32 %v1553, %v1572
  %v1574 = vadd.f32 %v1573, 1.0
  %v1575 = vrcp.pop %v1574
  %v1576 = vmul.f32 %v1574, %v1575
  %v1577 = vsub.f32 1.0, %v1576
  %v1578 = vmul.f32 %v1575, %v1577
  %v1579 = vadd.f32 %v1575, %v1578
  %vm1580 = vweird.f32 %v1574
  %vm1581 = vweird.f32 %v1575
  %vm1582 = vmor %vm1580, %vm1581
  %v1583 = vsel %vm1582, %v1575, %v1579
  %v1584 = vand.u32 2147483647, %v1574
  %vm1585 = vcmp.eq.f32.partialorder %v1584, 8.507059e+37
  %v1586 = vand.u32 %v1574, 2147483648
  %v1587 = vor.u32 1.1754944e-38, %v1586
  %v1588 = vsel %vm1585, %v1587, %v1583
  %v1589 = vmul.f32 %v1564, %v1588
  %v1590 = vmin.f32 %v1589, 1.0
  %v1591 = vmax.f32 %v1590, -1.0
  %v1592 = vmul.f32 %v1225, %v1225
  %v1593 = vmin.f32 16.0, %v1592
  %v1594 = vmul.f32 %v1593, 2.1237322e-06
  %v1595 = vadd.f32 %v1594, 0.00028619796
  %v1596 = vmul.f32 %v1593, %v1595
  %v1597 = vadd.f32 %v1596, 0.0036580483
  %v1598 = vmul.f32 %v1593, %v1597
  %v1599 = vadd.f32 %v1598, 0.05243302
  %v1600 = vmul.f32 %v1593, %v1599
  %v1601 = vadd.f32 %v1600, 0.18741608
  %v1602 = vmul.f32 %v1593, %v1601
  %v1603 = vadd.f32 %v1602, 1.1283791
  %v1604 = vmul.f32 %v1225, %v1603
  %v1605 = vmul.f32 %v1593, 3.8918573e-05
  %v1606 = vadd.f32 %v1605, 0.001143296
  %v1607 = vmul.f32 %v1593, %v1606
  %v1608 = vadd.f32 %v1607, 0.014752088
  %v1609 = vmul.f32 %v1593, %v1608
  %v1610 = vadd.f32 %v1609, 0.112945676
  %v1611 = vmul.f32 %v1593, %v1610
  %v1612 = vadd.f32 %v1611, 0.4994258
  %v1613 = vmul.f32 %v1593, %v1612
  %v1614 = vadd.f32 %v1613, 1.0
  %v1615 = vrcp.pop %v1614
  %v1616 = vmul.f32 %v1614, %v1615
  %v1617 = vsub.f32 1.0, %v1616
  %v1618 = vmul.f32 %v1615, %v1617
  %v1619 = vadd.f32 %v1615, %v1618
  %vm1620 = vweird.f32 %v1614
  %vm1621 = vweird.f32 %v1615
  %vm1622 = vmor %vm1620, %vm1621
  %v1623 = vsel %vm1622, %v1615, %v1619
  %v1624 = vand.u32 2147483647, %v1614
  %vm1625 = vcmp.eq.f32.partialorder %v1624, 8.507059e+37
  %v1626 = vand.u32 %v1614, 2147483648
  %v1627 = vor.u32 1.1754944e-38, %v1626
  %v1628 = vsel %vm1625, %v1627, %v1623
  %v1629 = vmul.f32 %v1604, %v1628
  %v1630 = vmin.f32 %v1629, 1.0
  %v1631 = vmax.f32 %v1630, -1.0
  %v1632 = vmul.f32 %v1226, %v1226
  %v1633 = vmin.f32 16.0, %v1632
  %v1634 = vmul.f32 %v1633, 2.1237322e-06
  %v1635 = vadd.f32 %v1634, 0.00028619796
  %v1636 = vmul.f32 %v1633, %v1635
  %v1637 = vadd.f32 %v1636, 0.0036580483
  %v1638 = vmul.f32 %v1633, %v1637
  %v1639 = vadd.f32 %v1638, 0.05243302
  %v1640 = vmul.f32 %v1633, %v1639
  %v1641 = vadd.f32 %v1640, 0.18741608
  %v1642 = vmul.f32 %v1633, %v1641
  %v1643 = vadd.f32 %v1642, 1.1283791
  %v1644 = vmul.f32 %v1226, %v1643
  %v1645 = vmul.f32 %v1633, 3.8918573e-05
  %v1646 = vadd.f32 %v1645, 0.001143296
  %v1647 = vmul.f32 %v1633, %v1646
  %v1648 = vadd.f32 %v1647, 0.014752088
  %v1649 = vmul.f32 %v1633, %v1648
  %v1650 = vadd.f32 %v1649, 0.112945676
  %v1651 = vmul.f32 %v1633, %v1650
  %v1652 = vadd.f32 %v1651, 0.4994258
  %v1653 = vmul.f32 %v1633, %v1652
  %v1654 = vadd.f32 %v1653, 1.0
  %v1655 = vrcp.pop %v1654
  %v1656 = vmul.f32 %v1654, %v1655
  %v1657 = vsub.f32 1.0, %v1656
  %v1658 = vmul.f32 %v1655, %v1657
  %v1659 = vadd.f32 %v1655, %v1658
  %vm1660 = vweird.f32 %v1654
  %vm1661 = vweird.f32 %v1655
  %vm1662 = vmor %vm1660, %vm1661
  %v1663 = vsel %vm1662, %v1655, %v1659
  %v1664 = vand.u32 2147483647, %v1654
  %vm1665 = vcmp.eq.f32.partialorder %v1664, 8.507059e+37
  %v1666 = vand.u32 %v1654, 2147483648
  %v1667 = vor.u32 1.1754944e-38, %v1666
  %v1668 = vsel %vm1665, %v1667, %v1663
  %v1669 = vmul.f32 %v1644, %v1668
  %v1670 = vmin.f32 %v1669, 1.0
  %v1671 = vmax.f32 %v1670, -1.0
  %v1672 = vmul.f32 %v1227, %v1227
  %v1673 = vmin.f32 16.0, %v1672
  %v1674 = vmul.f32 %v1673, 2.1237322e-06
  %v1675 = vadd.f32 %v1674, 0.00028619796
  %v1676 = vmul.f32 %v1673, %v1675
  %v1677 = vadd.f32 %v1676, 0.0036580483
  %v1678 = vmul.f32 %v1673, %v1677
  %v1679 = vadd.f32 %v1678, 0.05243302
  %v1680 = vmul.f32 %v1673, %v1679
  %v1681 = vadd.f32 %v1680, 0.18741608
  %v1682 = vmul.f32 %v1673, %v1681
  %v1683 = vadd.f32 %v1682, 1.1283791
  %v1684 = vmul.f32 %v1227, %v1683
  %v1685 = vmul.f32 %v1673, 3.8918573e-05
  %v1686 = vadd.f32 %v1685, 0.001143296
  %v1687 = vmul.f32 %v1673, %v1686
  %v1688 = vadd.f32 %v1687, 0.014752088
  %v1689 = vmul.f32 %v1673, %v1688
  %v1690 = vadd.f32 %v1689, 0.112945676
  %v1691 = vmul.f32 %v1673, %v1690
  %v1692 = vadd.f32 %v1691, 0.4994258
  %v1693 = vmul.f32 %v1673, %v1692
  %v1694 = vadd.f32 %v1693, 1.0
  %v1695 = vrcp.pop %v1694
  %v1696 = vmul.f32 %v1694, %v1695
  %v1697 = vsub.f32 1.0, %v1696
  %v1698 = vmul.f32 %v1695, %v1697
  %v1699 = vadd.f32 %v1695, %v1698
  %vm1700 = vweird.f32 %v1694
  %vm1701 = vweird.f32 %v1695
  %vm1702 = vmor %vm1700, %vm1701
  %v1703 = vsel %vm1702, %v1695, %v1699
  %v1704 = vand.u32 2147483647, %v1694
  %vm1705 = vcmp.eq.f32.partialorder %v1704, 8.507059e+37
  %v1706 = vand.u32 %v1694, 2147483648
  %v1707 = vor.u32 1.1754944e-38, %v1706
  %v1708 = vsel %vm1705, %v1707, %v1703
  %v1709 = vmul.f32 %v1684, %v1708
  %v1710 = vmin.f32 %v1709, 1.0
  %v1711 = vmax.f32 %v1710, -1.0
  %v1712 = vmul.f32 %v1228, %v1228
  %v1713 = vmin.f32 16.0, %v1712
  %v1714 = vmul.f32 %v1713, 2.1237322e-06
  %v1715 = vadd.f32 %v1714, 0.00028619796
  %v1716 = vmul.f32 %v1713, %v1715
  %v1717 = vadd.f32 %v1716, 0.0036580483
  %v1718 = vmul.f32 %v1713, %v1717
  %v1719 = vadd.f32 %v1718, 0.05243302
  %v1720 = vmul.f32 %v1713, %v1719
  %v1721 = vadd.f32 %v1720, 0.18741608
  %v1722 = vmul.f32 %v1713, %v1721
  %v1723 = vadd.f32 %v1722, 1.1283791
  %v1724 = vmul.f32 %v1228, %v1723
  %v1725 = vmul.f32 %v1713, 3.8918573e-05
  %v1726 = vadd.f32 %v1725, 0.001143296
  %v1727 = vmul.f32 %v1713, %v1726
  %v1728 = vadd.f32 %v1727, 0.014752088
  %v1729 = vmul.f32 %v1713, %v1728
  %v1730 = vadd.f32 %v1729, 0.112945676
  %v1731 = vmul.f32 %v1713, %v1730
  %v1732 = vadd.f32 %v1731, 0.4994258
  %v1733 = vmul.f32 %v1713, %v1732
  %v1734 = vadd.f32 %v1733, 1.0
  %v1735 = vrcp.pop %v1734
  %v1736 = vmul.f32 %v1734, %v1735
  %v1737 = vsub.f32 1.0, %v1736
  %v1738 = vmul.f32 %v1735, %v1737
  %v1739 = vadd.f32 %v1735, %v1738
  %vm1740 = vweird.f32 %v1734
  %vm1741 = vweird.f32 %v1735
  %vm1742 = vmor %vm1740, %vm1741
  %v1743 = vsel %vm1742, %v1735, %v1739
  %v1744 = vand.u32 2147483647, %v1734
  %vm1745 = vcmp.eq.f32.partialorder %v1744, 8.507059e+37
  %v1746 = vand.u32 %v1734, 2147483648
  %v1747 = vor.u32 1.1754944e-38, %v1746
  %v1748 = vsel %vm1745, %v1747, %v1743
  %v1749 = vmul.f32 %v1724, %v1748
  %v1750 = vmin.f32 %v1749, 1.0
  %v1751 = vmax.f32 %v1750, -1.0
  %v1752 = vmul.f32 %v1229, %v1229
  %v1753 = vmin.f32 16.0, %v1752
  %v1754 = vmul.f32 %v1753, 2.1237322e-06
  %v1755 = vadd.f32 %v1754, 0.00028619796
  %v1756 = vmul.f32 %v1753, %v1755
  %v1757 = vadd.f32 %v1756, 0.0036580483
  %v1758 = vmul.f32 %v1753, %v1757
  %v1759 = vadd.f32 %v1758, 0.05243302
  %v1760 = vmul.f32 %v1753, %v1759
  %v1761 = vadd.f32 %v1760, 0.18741608
  %v1762 = vmul.f32 %v1753, %v1761
  %v1763 = vadd.f32 %v1762, 1.1283791
  %v1764 = vmul.f32 %v1229, %v1763
  %v1765 = vmul.f32 %v1753, 3.8918573e-05
  %v1766 = vadd.f32 %v1765, 0.001143296
  %v1767 = vmul.f32 %v1753, %v1766
  %v1768 = vadd.f32 %v1767, 0.014752088
  %v1769 = vmul.f32 %v1753, %v1768
  %v1770 = vadd.f32 %v1769, 0.112945676
  %v1771 = vmul.f32 %v1753, %v1770
  %v1772 = vadd.f32 %v1771, 0.4994258
  %v1773 = vmul.f32 %v1753, %v1772
  %v1774 = vadd.f32 %v1773, 1.0
  %v1775 = vrcp.pop %v1774
  %v1776 = vmul.f32 %v1774, %v1775
  %v1777 = vsub.f32 1.0, %v1776
  %v1778 = vmul.f32 %v1775, %v1777
  %v1779 = vadd.f32 %v1775, %v1778
  %vm1780 = vweird.f32 %v1774
  %vm1781 = vweird.f32 %v1775
  %vm1782 = vmor %vm1780, %vm1781
  %v1783 = vsel %vm1782, %v1775, %v1779
  %v1784 = vand.u32 2147483647, %v1774
  %vm1785 = vcmp.eq.f32.partialorder %v1784, 8.507059e+37
  %v1786 = vand.u32 %v1774, 2147483648
  %v1787 = vor.u32 1.1754944e-38, %v1786
  %v1788 = vsel %vm1785, %v1787, %v1783
  %v1789 = vmul.f32 %v1764, %v1788
  %v1790 = vmin.f32 %v1789, 1.0
  %v1791 = vmax.f32 %v1790, -1.0
  %v1792 = vmul.f32 %v1230, %v1230
  %v1793 = vmin.f32 16.0, %v1792
  %v1794 = vmul.f32 %v1793, 2.1237322e-06
  %v1795 = vadd.f32 %v1794, 0.00028619796
  %v1796 = vmul.f32 %v1793, %v1795
  %v1797 = vadd.f32 %v1796, 0.0036580483
  %v1798 = vmul.f32 %v1793, %v1797
  %v1799 = vadd.f32 %v1798, 0.05243302
  %v1800 = vmul.f32 %v1793, %v1799
  %v1801 = vadd.f32 %v1800, 0.18741608
  %v1802 = vmul.f32 %v1793, %v1801
  %v1803 = vadd.f32 %v1802, 1.1283791
  %v1804 = vmul.f32 %v1230, %v1803
  %v1805 = vmul.f32 %v1793, 3.8918573e-05
  %v1806 = vadd.f32 %v1805, 0.001143296
  %v1807 = vmul.f32 %v1793, %v1806
  %v1808 = vadd.f32 %v1807, 0.014752088
  %v1809 = vmul.f32 %v1793, %v1808
  %v1810 = vadd.f32 %v1809, 0.112945676
  %v1811 = vmul.f32 %v1793, %v1810
  %v1812 = vadd.f32 %v1811, 0.4994258
  %v1813 = vmul.f32 %v1793, %v1812
  %v1814 = vadd.f32 %v1813, 1.0
  %v1815 = vrcp.pop %v1814
  %v1816 = vmul.f32 %v1814, %v1815
  %v1817 = vsub.f32 1.0, %v1816
  %v1818 = vmul.f32 %v1815, %v1817
  %v1819 = vadd.f32 %v1815, %v1818
  %vm1820 = vweird.f32 %v1814
  %vm1821 = vweird.f32 %v1815
  %vm1822 = vmor %vm1820, %vm1821
  %v1823 = vsel %vm1822, %v1815, %v1819
  %v1824 = vand.u32 2147483647, %v1814
  %vm1825 = vcmp.eq.f32.partialorder %v1824, 8.507059e+37
  %v1826 = vand.u32 %v1814, 2147483648
  %v1827 = vor.u32 1.1754944e-38, %v1826
  %v1828 = vsel %vm1825, %v1827, %v1823
  %v1829 = vmul.f32 %v1804, %v1828
  %v1830 = vmin.f32 %v1829, 1.0
  %v1831 = vmax.f32 %v1830, -1.0
  %v1832 = vmul.f32 %v1231, %v1231
  %v1833 = vmin.f32 16.0, %v1832
  %v1834 = vmul.f32 %v1833, 2.1237322e-06
  %v1835 = vadd.f32 %v1834, 0.00028619796
  %v1836 = vmul.f32 %v1833, %v1835
  %v1837 = vadd.f32 %v1836, 0.0036580483
  %v1838 = vmul.f32 %v1833, %v1837
  %v1839 = vadd.f32 %v1838, 0.05243302
  %v1840 = vmul.f32 %v1833, %v1839
  %v1841 = vadd.f32 %v1840, 0.18741608
  %v1842 = vmul.f32 %v1833, %v1841
  %v1843 = vadd.f32 %v1842, 1.1283791
  %v1844 = vmul.f32 %v1231, %v1843
  %v1845 = vmul.f32 %v1833, 3.8918573e-05
  %v1846 = vadd.f32 %v1845, 0.001143296
  %v1847 = vmul.f32 %v1833, %v1846
  %v1848 = vadd.f32 %v1847, 0.014752088
  %v1849 = vmul.f32 %v1833, %v1848
  %v1850 = vadd.f32 %v1849, 0.112945676
  %v1851 = vmul.f32 %v1833, %v1850
  %v1852 = vadd.f32 %v1851, 0.4994258
  %v1853 = vmul.f32 %v1833, %v1852
  %v1854 = vadd.f32 %v1853, 1.0
  %v1855 = vrcp.pop %v1854
  %v1856 = vmul.f32 %v1854, %v1855
  %v1857 = vsub.f32 1.0, %v1856
  %v1858 = vmul.f32 %v1855, %v1857
  %v1859 = vadd.f32 %v1855, %v1858
  %vm1860 = vweird.f32 %v1854
  %vm1861 = vweird.f32 %v1855
  %vm1862 = vmor %vm1860, %vm1861
  %v1863 = vsel %vm1862, %v1855, %v1859
  %v1864 = vand.u32 2147483647, %v1854
  %vm1865 = vcmp.eq.f32.partialorder %v1864, 8.507059e+37
  %v1866 = vand.u32 %v1854, 2147483648
  %v1867 = vor.u32 1.1754944e-38, %v1866
  %v1868 = vsel %vm1865, %v1867, %v1863
  %v1869 = vmul.f32 %v1844, %v1868
  %v1870 = vmin.f32 %v1869, 1.0
  %v1871 = vmax.f32 %v1870, -1.0
  %v1872 = vadd.f32 %v1271, 1.0
  %v1873 = vadd.f32 %v1311, 1.0
  %v1874 = vadd.f32 %v1351, 1.0
  %v1875 = vadd.f32 %v1391, 1.0
  %v1876 = vadd.f32 %v1431, 1.0
  %v1877 = vadd.f32 %v1471, 1.0
  %v1878 = vadd.f32 %v1511, 1.0
  %v1879 = vadd.f32 %v1551, 1.0
  %v1880 = vadd.f32 %v1591, 1.0
  %v1881 = vadd.f32 %v1631, 1.0
  %v1882 = vadd.f32 %v1671, 1.0
  %v1883 = vadd.f32 %v1711, 1.0
  %v1884 = vadd.f32 %v1751, 1.0
  %v1885 = vadd.f32 %v1791, 1.0
  %v1886 = vadd.f32 %v1831, 1.0
  %v1887 = vadd.f32 %v1871, 1.0
  %v1888 = vmul.f32 %v1200, %v1872
  %v1889 = vmul.f32 %v1201, %v1873
  %v1890 = vmul.f32 %v1202, %v1874
  %v1891 = vmul.f32 %v1203, %v1875
  %v1892 = vmul.f32 %v1204, %v1876
  %v1893 = vmul.f32 %v1205, %v1877
  %v1894 = vmul.f32 %v1206, %v1878
  %v1895 = vmul.f32 %v1207, %v1879
  %v1896 = vmul.f32 %v1208, %v1880
  %v1897 = vmul.f32 %v1209, %v1881
  %v1898 = vmul.f32 %v1210, %v1882
  %v1899 = vmul.f32 %v1211, %v1883
  %v1900 = vmul.f32 %v1212, %v1884
  %v1901 = vmul.f32 %v1213, %v1885
  %v1902 = vmul.f32 %v1214, %v1886
  %v1903 = vmul.f32 %v1215, %v1887
  %v1904 = vpack.c.bf16 %v1888, %v1888
  %v1905 = vpack.c.bf16 %v1889, %v1889
  %v1906 = vpack.c.bf16 %v1890, %v1890
  %v1907 = vpack.c.bf16 %v1891, %v1891
  %v1908 = vpack.c.bf16 %v1892, %v1892
  %v1909 = vpack.c.bf16 %v1893, %v1893
  %v1910 = vpack.c.bf16 %v1894, %v1894
  %v1911 = vpack.c.bf16 %v1895, %v1895
  %v1912 = vpack.c.bf16 %v1896, %v1896
  %v1913 = vpack.c.bf16 %v1897, %v1897
  %v1914 = vpack.c.bf16 %v1898, %v1898
  %v1915 = vpack.c.bf16 %v1899, %v1899
  %v1916 = vpack.c.bf16 %v1900, %v1900
  %v1917 = vpack.c.bf16 %v1901, %v1901
  %v1918 = vpack.c.bf16 %v1902, %v1902
  %v1919 = vpack.c.bf16 %v1903, %v1903
  %1920 = vst [vmem:[%s4] sm:$0xf] %v1904
  %1921 = vst [vmem:[%s4 + $0x4] sm:$0xf] %v1905
  %1922 = vst [vmem:[%s4 + $0x8] sm:$0xf] %v1906
  %1923 = vst [vmem:[%s4 + $0xc] sm:$0xf] %v1907
  %1924 = vst [vmem:[%s4 + $0x10] sm:$0xf] %v1908
  %1925 = vst [vmem:[%s4 + $0x14] sm:$0xf] %v1909
  %1926 = vst [vmem:[%s4 + $0x18] sm:$0xf] %v1910
  %1927 = vst [vmem:[%s4 + $0x1c] sm:$0xf] %v1911
  %1928 = vst [vmem:[%s4 + $0x20] sm:$0xf] %v1912
  %1929 = vst [vmem:[%s4 + $0x24] sm:$0xf] %v1913
  %1930 = vst [vmem:[%s4 + $0x28] sm:$0xf] %v1914
  %1931 = vst [vmem:[%s4 + $0x2c] sm:$0xf] %v1915
  %1932 = vst [vmem:[%s4 + $0x30] sm:$0xf] %v1916
  %1933 = vst [vmem:[%s4 + $0x34] sm:$0xf] %v1917
  %1934 = vst [vmem:[%s4 + $0x38] sm:$0xf] %v1918
  %1935 = vst [vmem:[%s4 + $0x3c] sm:$0xf] %v1919
  // Predicated region
  $region18: #{decoder_forward.20} parent=0 // pred_check
    _
  $region19: #{decoder_forward.20} parent=0 // pred_check_branch
    %1937 = sbr.rel (0) target = $region21
  $region20: #{decoder_forward.20} parent=0 // pred_region
    _
  $region21: #{decoder_forward.20} parent=0 // pred_fallthru
    _
  // Predicated region
  $region22: #{decoder_forward.20} parent=0 // pred_check
    _
  $region23: #{decoder_forward.20} parent=0 // pred_check_branch
    %1939 = sbr.rel (0) target = $region25
  $region24: #{decoder_forward.20} parent=0 // pred_region
    _
  $region25: #{decoder_forward.20} parent=0 // pred_fallthru
    _

// kernel: decoder_forward.22
$region0: #{decoder_forward.22}
  #allocation0 [shape = 'u32[]', space=smem, size = 0x4, offset = 0x4, fixed_abs, tag = 'smem constant byte address 0x4 - core index']
  #allocation1 [shape = 'u32[72,128]{1,0:T(1,128)}', space=vmem, size = 0x9000, scoped, tag = 'internal scratch']
  %s0 = inlined_call_operand.vmem [shape: bf16[128,128], index: 0, kind: input, shape index: {}]
  %s1 = inlined_call_operand.vmem [shape: bf16[128,128], index: 1, kind: input, shape index: {}]
  %s2 = inlined_call_operand.vmem [shape: f32[1,128], index: 2, kind: input, shape index: {}]
  %s3 = inlined_call_operand.vmem [shape: f32[128,128], index: 3, kind: output, shape index: {}]
  %s4 = sld [smem:[#allocation0]]
  $region22: #{decoder_forward.22} parent=0
    _
  %s6 = ssub.s32 1, %s4
  %s7 = scalar_select 0, %s6, %s4
  // Predicated region
  $region2: #{decoder_forward.22} parent=0 // pred_check
    _
  $region3: #{decoder_forward.22} parent=0 // pred_check_branch
    %9 = sbr.rel (0) target = $region5
  $region4: #{decoder_forward.22} parent=0 // pred_region
    _
  $region5: #{decoder_forward.22} parent=0 // pred_fallthru
    _
  // Predicated region
  $region6: #{decoder_forward.22} parent=0 // pred_check
    _
  $region7: #{decoder_forward.22} parent=0 // pred_check_branch
    %11 = sbr.rel (0) target = $region9
  $region8: #{decoder_forward.22} parent=0 // pred_region
    _
  $region9: #{decoder_forward.22} parent=0 // pred_fallthru
    _
  // Predicated region
  $region10: #{decoder_forward.22} parent=0 // pred_check
    _
  $region11: #{decoder_forward.22} parent=0 // pred_check_branch
    %13 = sbr.rel (0) target = $region13
  $region12: #{decoder_forward.22} parent=0 // pred_region
    _
  $region13: #{decoder_forward.22} parent=0 // pred_fallthru
    _
  %v14 = vld [vmem:[%s0] sm:$0xf]
  %v15 = vld [vmem:[%s0 + $0x4] sm:$0xf]
  %v16 = vld [vmem:[%s0 + $0x8] sm:$0xf]
  %v17 = vld [vmem:[%s0 + $0xc] sm:$0xf]
  %v18 = vld [vmem:[%s0 + $0x10] sm:$0xf]
  %v19 = vld [vmem:[%s0 + $0x14] sm:$0xf]
  %v20 = vld [vmem:[%s0 + $0x18] sm:$0xf]
  %v21 = vld [vmem:[%s0 + $0x1c] sm:$0xf]
  %v22 = vld [vmem:[%s0 + $0x20] sm:$0xf]
  %v23 = vld [vmem:[%s0 + $0x24] sm:$0xf]
  %v24 = vld [vmem:[%s0 + $0x28] sm:$0xf]
  %v25 = vld [vmem:[%s0 + $0x2c] sm:$0xf]
  %v26 = vld [vmem:[%s0 + $0x30] sm:$0xf]
  %v27 = vld [vmem:[%s0 + $0x34] sm:$0xf]
  %v28 = vld [vmem:[%s0 + $0x38] sm:$0xf]
  %v29 = vld [vmem:[%s0 + $0x3c] sm:$0xf]
  %v30 = vld [vmem:[%s1] sm:$0xf]
  %v31 = vld [vmem:[%s1 + $0x4] sm:$0xf]
  %v32 = vld [vmem:[%s1 + $0x8] sm:$0xf]
  %v33 = vld [vmem:[%s1 + $0xc] sm:$0xf]
  %v34 = vld [vmem:[%s1 + $0x10] sm:$0xf]
  %v35 = vld [vmem:[%s1 + $0x14] sm:$0xf]
  %v36 = vld [vmem:[%s1 + $0x18] sm:$0xf]
  %v37 = vld [vmem:[%s1 + $0x1c] sm:$0xf]
  %v38 = vld [vmem:[%s1 + $0x20] sm:$0xf]
  %v39 = vld [vmem:[%s1 + $0x24] sm:$0xf]
  %v40 = vld [vmem:[%s1 + $0x28] sm:$0xf]
  %v41 = vld [vmem:[%s1 + $0x2c] sm:$0xf]
  %v42 = vld [vmem:[%s1 + $0x30] sm:$0xf]
  %v43 = vld [vmem:[%s1 + $0x34] sm:$0xf]
  %v44 = vld [vmem:[%s1 + $0x38] sm:$0xf]
  %v45 = vld [vmem:[%s1 + $0x3c] sm:$0xf]
  %v46 = vld [vmem:[%s2] sm:$0x1]
  %v48 = vperm.slane %v46, 0
  %v66 = vunpack.c.l.b16 %v14
  %v67 = vunpack.c.l.b16 %v15
  %v68 = vunpack.c.l.b16 %v16
  %v69 = vunpack.c.l.b16 %v17
  %v70 = vunpack.c.l.b16 %v18
  %v71 = vunpack.c.l.b16 %v19
  %v72 = vunpack.c.l.b16 %v20
  %v73 = vunpack.c.l.b16 %v21
  %v74 = vunpack.c.l.b16 %v22
  %v75 = vunpack.c.l.b16 %v23
  %v76 = vunpack.c.l.b16 %v24
  %v77 = vunpack.c.l.b16 %v25
  %v78 = vunpack.c.l.b16 %v26
  %v79 = vunpack.c.l.b16 %v27
  %v80 = vunpack.c.l.b16 %v28
  %v81 = vunpack.c.l.b16 %v29
  %v82 = vpack.c.b16 %v67, %v66
  %v83 = vpack.c.b16 %v69, %v68
  %v84 = vpack.c.b16 %v71, %v70
  %v85 = vpack.c.b16 %v73, %v72
  %v86 = vpack.c.b16 %v75, %v74
  %v87 = vpack.c.b16 %v77, %v76
  %v88 = vpack.c.b16 %v79, %v78
  %v89 = vpack.c.b16 %v81, %v80
  %v114 = vunpack.c.l.b16 %v30
  %v115 = vunpack.c.l.b16 %v31
  %v116 = vunpack.c.l.b16 %v32
  %v117 = vunpack.c.l.b16 %v33
  %v118 = vunpack.c.l.b16 %v34
  %v119 = vunpack.c.l.b16 %v35
  %v120 = vunpack.c.l.b16 %v36
  %v121 = vunpack.c.l.b16 %v37
  %v122 = vunpack.c.l.b16 %v38
  %v123 = vunpack.c.l.b16 %v39
  %v124 = vunpack.c.l.b16 %v40
  %v125 = vunpack.c.l.b16 %v41
  %v126 = vunpack.c.l.b16 %v42
  %v127 = vunpack.c.l.b16 %v43
  %v128 = vunpack.c.l.b16 %v44
  %v129 = vunpack.c.l.b16 %v45
  %v130 = vpack.c.b16 %v115, %v114
  %v131 = vpack.c.b16 %v117, %v116
  %v132 = vpack.c.b16 %v119, %v118
  %v133 = vpack.c.b16 %v121, %v120
  %v134 = vpack.c.b16 %v123, %v122
  %v135 = vpack.c.b16 %v125, %v124
  %v136 = vpack.c.b16 %v127, %v126
  %v137 = vpack.c.b16 %v129, %v128
  %146 = vmatpush.bf16.msra.mxu0 %v137
  %147 = vmatpush.bf16.msra.mxu0 %v136
  %148 = vmatpush.bf16.msra.mxu0 %v135
  %149 = vmatpush.bf16.msra.mxu0 %v134
  %150 = vmatpush.bf16.msra.mxu0 %v133
  %151 = vmatpush.bf16.msra.mxu0 %v132
  %152 = vmatpush.bf16.msra.mxu0 %v131
  %153 = vmatpush.bf16.msra.mxu0 %v130
  %154 = vmatmul.bf16.gmra.mxu0 %v82
  %v155 = vpop.f32.mrf.mxu0
  %v156 = vadd.f32 %v48, %v155
  %v157 = vpop.f32.mrf.mxu0
  %v158 = vadd.f32 %v48, %v157
  %159 = vmatmul.bf16.gmra.mxu0 %v83
  %v160 = vpop.f32.mrf.mxu0
  %v161 = vadd.f32 %v48, %v160
  %v162 = vpop.f32.mrf.mxu0
  %v163 = vadd.f32 %v48, %v162
  %164 = vmatmul.bf16.gmra.mxu0 %v84
  %v165 = vpop.f32.mrf.mxu0
  %v166 = vadd.f32 %v48, %v165
  %v167 = vpop.f32.mrf.mxu0
  %v168 = vadd.f32 %v48, %v167
  %169 = vmatmul.bf16.gmra.mxu0 %v85
  %v170 = vpop.f32.mrf.mxu0
  %v171 = vadd.f32 %v48, %v170
  %v172 = vpop.f32.mrf.mxu0
  %v173 = vadd.f32 %v48, %v172
  %174 = vmatmul.bf16.gmra.mxu0 %v86
  %v175 = vpop.f32.mrf.mxu0
  %v176 = vadd.f32 %v48, %v175
  %v177 = vpop.f32.mrf.mxu0
  %v178 = vadd.f32 %v48, %v177
  %179 = vmatmul.bf16.gmra.mxu0 %v87
  %v180 = vpop.f32.mrf.mxu0
  %v181 = vadd.f32 %v48, %v180
  %v182 = vpop.f32.mrf.mxu0
  %v183 = vadd.f32 %v48, %v182
  %184 = vmatmul.bf16.gmra.mxu0 %v88
  %v185 = vpop.f32.mrf.mxu0
  %v186 = vadd.f32 %v48, %v185
  %v187 = vpop.f32.mrf.mxu0
  %v188 = vadd.f32 %v48, %v187
  %189 = vmatmul.bf16.gmra.mxu0 %v89
  %v190 = vpop.f32.mrf.mxu0
  %v191 = vadd.f32 %v48, %v190
  %v192 = vpop.f32.mrf.mxu0
  %v193 = vadd.f32 %v48, %v192
  %194 = vdwg.mxu0
  %v195 = vxor.u32 %v156, 2147483648
  %v196 = vxor.u32 %v158, 2147483648
  %v197 = vxor.u32 %v161, 2147483648
  %v198 = vxor.u32 %v163, 2147483648
  %v199 = vxor.u32 %v166, 2147483648
  %v200 = vxor.u32 %v168, 2147483648
  %v201 = vxor.u32 %v171, 2147483648
  %v202 = vxor.u32 %v173, 2147483648
  %v203 = vxor.u32 %v176, 2147483648
  %v204 = vxor.u32 %v178, 2147483648
  %v205 = vxor.u32 %v181, 2147483648
  %v206 = vxor.u32 %v183, 2147483648
  %v207 = vxor.u32 %v186, 2147483648
  %v208 = vxor.u32 %v188, 2147483648
  %v209 = vxor.u32 %v191, 2147483648
  %v210 = vxor.u32 %v193, 2147483648
  %v211 = vmul.f32 %v195, 1.442695
  %v212 = vpow.pop %v211
  %v213 = vmul.f32 %v196, 1.442695
  %v214 = vpow.pop %v213
  %v215 = vmul.f32 %v197, 1.442695
  %v216 = vpow.pop %v215
  %v217 = vmul.f32 %v198, 1.442695
  %v218 = vpow.pop %v217
  %v219 = vmul.f32 %v199, 1.442695
  %v220 = vpow.pop %v219
  %v221 = vmul.f32 %v200, 1.442695
  %v222 = vpow.pop %v221
  %v223 = vmul.f32 %v201, 1.442695
  %v224 = vpow.pop %v223
  %v225 = vmul.f32 %v202, 1.442695
  %v226 = vpow.pop %v225
  %v227 = vmul.f32 %v203, 1.442695
  %v228 = vpow.pop %v227
  %v229 = vmul.f32 %v204, 1.442695
  %v230 = vpow.pop %v229
  %v231 = vmul.f32 %v205, 1.442695
  %v232 = vpow.pop %v231
  %v233 = vmul.f32 %v206, 1.442695
  %v234 = vpow.pop %v233
  %v235 = vmul.f32 %v207, 1.442695
  %v236 = vpow.pop %v235
  %v237 = vmul.f32 %v208, 1.442695
  %v238 = vpow.pop %v237
  %v239 = vmul.f32 %v209, 1.442695
  %v240 = vpow.pop %v239
  %v241 = vmul.f32 %v210, 1.442695
  %v242 = vpow.pop %v241
  %v243 = vadd.f32 %v212, 1.0
  %v244 = vadd.f32 %v214, 1.0
  %v245 = vadd.f32 %v216, 1.0
  %v246 = vadd.f32 %v218, 1.0
  %v247 = vadd.f32 %v220, 1.0
  %v248 = vadd.f32 %v222, 1.0
  %v249 = vadd.f32 %v224, 1.0
  %v250 = vadd.f32 %v226, 1.0
  %v251 = vadd.f32 %v228, 1.0
  %v252 = vadd.f32 %v230, 1.0
  %v253 = vadd.f32 %v232, 1.0
  %v254 = vadd.f32 %v234, 1.0
  %v255 = vadd.f32 %v236, 1.0
  %v256 = vadd.f32 %v238, 1.0
  %v257 = vadd.f32 %v240, 1.0
  %v258 = vadd.f32 %v242, 1.0
  %v259 = vrcp.pop %v243
  %v260 = vmul.f32 %v243, %v259
  %v261 = vsub.f32 1.0, %v260
  %v262 = vmul.f32 %v259, %v261
  %v263 = vadd.f32 %v259, %v262
  %vm264 = vweird.f32 %v243
  %vm265 = vweird.f32 %v259
  %vm266 = vmor %vm264, %vm265
  %v267 = vsel %vm266, %v259, %v263
  %v268 = vand.u32 2147483647, %v243
  %vm269 = vcmp.eq.f32.partialorder %v268, 8.507059e+37
  %v270 = vand.u32 %v243, 2147483648
  %v271 = vor.u32 1.1754944e-38, %v270
  %v272 = vsel %vm269, %v271, %v267
  %v273 = vmul.f32 1.0, %v272
  %v274 = vrcp.pop %v244
  %v275 = vmul.f32 %v244, %v274
  %v276 = vsub.f32 1.0, %v275
  %v277 = vmul.f32 %v274, %v276
  %v278 = vadd.f32 %v274, %v277
  %vm279 = vweird.f32 %v244
  %vm280 = vweird.f32 %v274
  %vm281 = vmor %vm279, %vm280
  %v282 = vsel %vm281, %v274, %v278
  %v283 = vand.u32 2147483647, %v244
  %vm284 = vcmp.eq.f32.partialorder %v283, 8.507059e+37
  %v285 = vand.u32 %v244, 2147483648
  %v286 = vor.u32 1.1754944e-38, %v285
  %v287 = vsel %vm284, %v286, %v282
  %v288 = vmul.f32 1.0, %v287
  %v289 = vrcp.pop %v245
  %v290 = vmul.f32 %v245, %v289
  %v291 = vsub.f32 1.0, %v290
  %v292 = vmul.f32 %v289, %v291
  %v293 = vadd.f32 %v289, %v292
  %vm294 = vweird.f32 %v245
  %vm295 = vweird.f32 %v289
  %vm296 = vmor %vm294, %vm295
  %v297 = vsel %vm296, %v289, %v293
  %v298 = vand.u32 2147483647, %v245
  %vm299 = vcmp.eq.f32.partialorder %v298, 8.507059e+37
  %v300 = vand.u32 %v245, 2147483648
  %v301 = vor.u32 1.1754944e-38, %v300
  %v302 = vsel %vm299, %v301, %v297
  %v303 = vmul.f32 1.0, %v302
  %v304 = vrcp.pop %v246
  %v305 = vmul.f32 %v246, %v304
  %v306 = vsub.f32 1.0, %v305
  %v307 = vmul.f32 %v304, %v306
  %v308 = vadd.f32 %v304, %v307
  %vm309 = vweird.f32 %v246
  %vm310 = vweird.f32 %v304
  %vm311 = vmor %vm309, %vm310
  %v312 = vsel %vm311, %v304, %v308
  %v313 = vand.u32 2147483647, %v246
  %vm314 = vcmp.eq.f32.partialorder %v313, 8.507059e+37
  %v315 = vand.u32 %v246, 2147483648
  %v316 = vor.u32 1.1754944e-38, %v315
  %v317 = vsel %vm314, %v316, %v312
  %v318 = vmul.f32 1.0, %v317
  %v319 = vrcp.pop %v247
  %v320 = vmul.f32 %v247, %v319
  %v321 = vsub.f32 1.0, %v320
  %v322 = vmul.f32 %v319, %v321
  %v323 = vadd.f32 %v319, %v322
  %vm324 = vweird.f32 %v247
  %vm325 = vweird.f32 %v319
  %vm326 = vmor %vm324, %vm325
  %v327 = vsel %vm326, %v319, %v323
  %v328 = vand.u32 2147483647, %v247
  %vm329 = vcmp.eq.f32.partialorder %v328, 8.507059e+37
  %v330 = vand.u32 %v247, 2147483648
  %v331 = vor.u32 1.1754944e-38, %v330
  %v332 = vsel %vm329, %v331, %v327
  %v333 = vmul.f32 1.0, %v332
  %v334 = vrcp.pop %v248
  %v335 = vmul.f32 %v248, %v334
  %v336 = vsub.f32 1.0, %v335
  %v337 = vmul.f32 %v334, %v336
  %v338 = vadd.f32 %v334, %v337
  %vm339 = vweird.f32 %v248
  %vm340 = vweird.f32 %v334
  %vm341 = vmor %vm339, %vm340
  %v342 = vsel %vm341, %v334, %v338
  %v343 = vand.u32 2147483647, %v248
  %vm344 = vcmp.eq.f32.partialorder %v343, 8.507059e+37
  %v345 = vand.u32 %v248, 2147483648
  %v346 = vor.u32 1.1754944e-38, %v345
  %v347 = vsel %vm344, %v346, %v342
  %v348 = vmul.f32 1.0, %v347
  %v349 = vrcp.pop %v249
  %v350 = vmul.f32 %v249, %v349
  %v351 = vsub.f32 1.0, %v350
  %v352 = vmul.f32 %v349, %v351
  %v353 = vadd.f32 %v349, %v352
  %vm354 = vweird.f32 %v249
  %vm355 = vweird.f32 %v349
  %vm356 = vmor %vm354, %vm355
  %v357 = vsel %vm356, %v349, %v353
  %v358 = vand.u32 2147483647, %v249
  %vm359 = vcmp.eq.f32.partialorder %v358, 8.507059e+37
  %v360 = vand.u32 %v249, 2147483648
  %v361 = vor.u32 1.1754944e-38, %v360
  %v362 = vsel %vm359, %v361, %v357
  %v363 = vmul.f32 1.0, %v362
  %v364 = vrcp.pop %v250
  %v365 = vmul.f32 %v250, %v364
  %v366 = vsub.f32 1.0, %v365
  %v367 = vmul.f32 %v364, %v366
  %v368 = vadd.f32 %v364, %v367
  %vm369 = vweird.f32 %v250
  %vm370 = vweird.f32 %v364
  %vm371 = vmor %vm369, %vm370
  %v372 = vsel %vm371, %v364, %v368
  %v373 = vand.u32 2147483647, %v250
  %vm374 = vcmp.eq.f32.partialorder %v373, 8.507059e+37
  %v375 = vand.u32 %v250, 2147483648
  %v376 = vor.u32 1.1754944e-38, %v375
  %v377 = vsel %vm374, %v376, %v372
  %v378 = vmul.f32 1.0, %v377
  %v379 = vrcp.pop %v251
  %v380 = vmul.f32 %v251, %v379
  %v381 = vsub.f32 1.0, %v380
  %v382 = vmul.f32 %v379, %v381
  %v383 = vadd.f32 %v379, %v382
  %vm384 = vweird.f32 %v251
  %vm385 = vweird.f32 %v379
  %vm386 = vmor %vm384, %vm385
  %v387 = vsel %vm386, %v379, %v383
  %v388 = vand.u32 2147483647, %v251
  %vm389 = vcmp.eq.f32.partialorder %v388, 8.507059e+37
  %v390 = vand.u32 %v251, 2147483648
  %v391 = vor.u32 1.1754944e-38, %v390
  %v392 = vsel %vm389, %v391, %v387
  %v393 = vmul.f32 1.0, %v392
  %v394 = vrcp.pop %v252
  %v395 = vmul.f32 %v252, %v394
  %v396 = vsub.f32 1.0, %v395
  %v397 = vmul.f32 %v394, %v396
  %v398 = vadd.f32 %v394, %v397
  %vm399 = vweird.f32 %v252
  %vm400 = vweird.f32 %v394
  %vm401 = vmor %vm399, %vm400
  %v402 = vsel %vm401, %v394, %v398
  %v403 = vand.u32 2147483647, %v252
  %vm404 = vcmp.eq.f32.partialorder %v403, 8.507059e+37
  %v405 = vand.u32 %v252, 2147483648
  %v406 = vor.u32 1.1754944e-38, %v405
  %v407 = vsel %vm404, %v406, %v402
  %v408 = vmul.f32 1.0, %v407
  %v409 = vrcp.pop %v253
  %v410 = vmul.f32 %v253, %v409
  %v411 = vsub.f32 1.0, %v410
  %v412 = vmul.f32 %v409, %v411
  %v413 = vadd.f32 %v409, %v412
  %vm414 = vweird.f32 %v253
  %vm415 = vweird.f32 %v409
  %vm416 = vmor %vm414, %vm415
  %v417 = vsel %vm416, %v409, %v413
  %v418 = vand.u32 2147483647, %v253
  %vm419 = vcmp.eq.f32.partialorder %v418, 8.507059e+37
  %v420 = vand.u32 %v253, 2147483648
  %v421 = vor.u32 1.1754944e-38, %v420
  %v422 = vsel %vm419, %v421, %v417
  %v423 = vmul.f32 1.0, %v422
  %v424 = vrcp.pop %v254
  %v425 = vmul.f32 %v254, %v424
  %v426 = vsub.f32 1.0, %v425
  %v427 = vmul.f32 %v424, %v426
  %v428 = vadd.f32 %v424, %v427
  %vm429 = vweird.f32 %v254
  %vm430 = vweird.f32 %v424
  %vm431 = vmor %vm429, %vm430
  %v432 = vsel %vm431, %v424, %v428
  %v433 = vand.u32 2147483647, %v254
  %vm434 = vcmp.eq.f32.partialorder %v433, 8.507059e+37
  %v435 = vand.u32 %v254, 2147483648
  %v436 = vor.u32 1.1754944e-38, %v435
  %v437 = vsel %vm434, %v436, %v432
  %v438 = vmul.f32 1.0, %v437
  %v439 = vrcp.pop %v255
  %v440 = vmul.f32 %v255, %v439
  %v441 = vsub.f32 1.0, %v440
  %v442 = vmul.f32 %v439, %v441
  %v443 = vadd.f32 %v439, %v442
  %vm444 = vweird.f32 %v255
  %vm445 = vweird.f32 %v439
  %vm446 = vmor %vm444, %vm445
  %v447 = vsel %vm446, %v439, %v443
  %v448 = vand.u32 2147483647, %v255
  %vm449 = vcmp.eq.f32.partialorder %v448, 8.507059e+37
  %v450 = vand.u32 %v255, 2147483648
  %v451 = vor.u32 1.1754944e-38, %v450
  %v452 = vsel %vm449, %v451, %v447
  %v453 = vmul.f32 1.0, %v452
  %v454 = vrcp.pop %v256
  %v455 = vmul.f32 %v256, %v454
  %v456 = vsub.f32 1.0, %v455
  %v457 = vmul.f32 %v454, %v456
  %v458 = vadd.f32 %v454, %v457
  %vm459 = vweird.f32 %v256
  %vm460 = vweird.f32 %v454
  %vm461 = vmor %vm459, %vm460
  %v462 = vsel %vm461, %v454, %v458
  %v463 = vand.u32 2147483647, %v256
  %vm464 = vcmp.eq.f32.partialorder %v463, 8.507059e+37
  %v465 = vand.u32 %v256, 2147483648
  %v466 = vor.u32 1.1754944e-38, %v465
  %v467 = vsel %vm464, %v466, %v462
  %v468 = vmul.f32 1.0, %v467
  %v469 = vrcp.pop %v257
  %v470 = vmul.f32 %v257, %v469
  %v471 = vsub.f32 1.0, %v470
  %v472 = vmul.f32 %v469, %v471
  %v473 = vadd.f32 %v469, %v472
  %vm474 = vweird.f32 %v257
  %vm475 = vweird.f32 %v469
  %vm476 = vmor %vm474, %vm475
  %v477 = vsel %vm476, %v469, %v473
  %v478 = vand.u32 2147483647, %v257
  %vm479 = vcmp.eq.f32.partialorder %v478, 8.507059e+37
  %v480 = vand.u32 %v257, 2147483648
  %v481 = vor.u32 1.1754944e-38, %v480
  %v482 = vsel %vm479, %v481, %v477
  %v483 = vmul.f32 1.0, %v482
  %v484 = vrcp.pop %v258
  %v485 = vmul.f32 %v258, %v484
  %v486 = vsub.f32 1.0, %v485
  %v487 = vmul.f32 %v484, %v486
  %v488 = vadd.f32 %v484, %v487
  %vm489 = vweird.f32 %v258
  %vm490 = vweird.f32 %v484
  %vm491 = vmor %vm489, %vm490
  %v492 = vsel %vm491, %v484, %v488
  %v493 = vand.u32 2147483647, %v258
  %vm494 = vcmp.eq.f32.partialorder %v493, 8.507059e+37
  %v495 = vand.u32 %v258, 2147483648
  %v496 = vor.u32 1.1754944e-38, %v495
  %v497 = vsel %vm494, %v496, %v492
  %v498 = vmul.f32 1.0, %v497
  %499 = vst [vmem:[%s3] sm:$0xff] %v273
  %500 = vst [vmem:[%s3 + $0x8] sm:$0xff] %v288
  %501 = vst [vmem:[%s3 + $0x10] sm:$0xff] %v303
  %502 = vst [vmem:[%s3 + $0x18] sm:$0xff] %v318
  %503 = vst [vmem:[%s3 + $0x20] sm:$0xff] %v333
  %504 = vst [vmem:[%s3 + $0x28] sm:$0xff] %v348
  %505 = vst [vmem:[%s3 + $0x30] sm:$0xff] %v363
  %506 = vst [vmem:[%s3 + $0x38] sm:$0xff] %v378
  %507 = vst [vmem:[%s3 + $0x40] sm:$0xff] %v393
  %508 = vst [vmem:[%s3 + $0x48] sm:$0xff] %v408
  %509 = vst [vmem:[%s3 + $0x50] sm:$0xff] %v423
  %510 = vst [vmem:[%s3 + $0x58] sm:$0xff] %v438
  %511 = vst [vmem:[%s3 + $0x60] sm:$0xff] %v453
  %512 = vst [vmem:[%s3 + $0x68] sm:$0xff] %v468
  %513 = vst [vmem:[%s3 + $0x70] sm:$0xff] %v483
  %514 = vst [vmem:[%s3 + $0x78] sm:$0xff] %v498
  // Predicated region
  $region14: #{decoder_forward.22} parent=0 // pred_check
    _
  $region15: #{decoder_forward.22} parent=0 // pred_check_branch
    %516 = sbr.rel (0) target = $region17
  $region16: #{decoder_forward.22} parent=0 // pred_region
    _
  $region17: #{decoder_forward.22} parent=0 // pred_fallthru
    _
  // Predicated region
  $region18: #{decoder_forward.22} parent=0 // pred_check
    _
  $region19: #{decoder_forward.22} parent=0 // pred_check_branch
    %518 = sbr.rel (0) target = $region21
  $region20: #{decoder_forward.22} parent=0 // pred_region
    _
  $region21: #{decoder_forward.22} parent=0 // pred_fallthru
    _

</llo_original>
